<compile_context>
chip_gen: v7x
topology: tpu7x:2x2x1
jax: 0.10.0
libtpu: 0.0.40
codegen_flags: <defaults>
</compile_context>

<pallas_src>
import jax
import jax.numpy as jnp
from jax.experimental import pallas as pl
from jax.experimental.pallas import tpu as pltpu


_BN_EPS = 1e-5


# ----------------------------------------------------------------------------
# Host-side helpers (traced by XLA *outside* the Pallas kernel)
# ----------------------------------------------------------------------------
def _edge_masks(H, W):
    """(1, H*W) bf16 masks zeroing taps that would read across left/right edges."""
    j = jnp.arange(H * W, dtype=jnp.int32) % W
    m_left = (j > 0).astype(jnp.bfloat16).reshape(1, H * W)
    m_right = (j < W - 1).astype(jnp.bfloat16).reshape(1, H * W)
    return m_left, m_right


def _subsample_matrix(H, W):
    """(H*W, (H//2)*(W//2)) 0/1 matrix selecting the stride-2 grid (2i, 2j)."""
    Ho, Wo = H // 2, W // 2
    o = jnp.arange(Ho * Wo, dtype=jnp.int32)
    src = 2 * (o // Wo) * W + 2 * (o % Wo)
    p = jnp.arange(H * W, dtype=jnp.int32)
    return (p[:, None] == src[None, :]).astype(jnp.bfloat16)


def _fold_conv(w, bn_scale, bn_bias):
    """Fold BN affine into conv. Returns (Cout, KH*KW*Cin) bf16, (Cout, 1) f32."""
    kh, kw, cin, cout = w.shape
    w_folded = w * bn_scale[None, None, None, :]
    w_mat = w_folded.reshape(kh * kw * cin, cout).T          # (Cout, KH*KW*Cin)
    return w_mat.astype(jnp.bfloat16), bn_bias.reshape(cout, 1).astype(jnp.float32)


# ----------------------------------------------------------------------------
# Parameters (deterministic init) for Router(BasicBlock, [1, 1, 1], num_experts)
# ----------------------------------------------------------------------------
def init_router_params(key, num_experts=2):
    ks = iter(jax.random.split(key, 32))

    def conv_w(k, kh, kw, cin, cout):
        return 0.1 * jax.random.normal(k, (kh, kw, cin, cout), jnp.float32)

    def bn(k, c):
        kg, kb = jax.random.split(k)
        gamma = 1.0 + 0.1 * jax.random.normal(kg, (c,), jnp.float32)
        beta = 0.1 * jax.random.normal(kb, (c,), jnp.float32)
        scale = gamma / jnp.sqrt(1.0 + _BN_EPS)   # fresh running stats (mean=0, var=1)
        return scale, beta

    p = {}
    p["stem_w"] = conv_w(next(ks), 3, 3, 3, 16)
    p["stem_s"], p["stem_b"] = bn(next(ks), 16)
    p["l1_w1"] = conv_w(next(ks), 3, 3, 16, 16); p["l1_s1"], p["l1_b1"] = bn(next(ks), 16)
    p["l1_w2"] = conv_w(next(ks), 3, 3, 16, 16); p["l1_s2"], p["l1_b2"] = bn(next(ks), 16)
    p["l2_w1"] = conv_w(next(ks), 3, 3, 16, 32); p["l2_s1"], p["l2_b1"] = bn(next(ks), 32)
    p["l2_w2"] = conv_w(next(ks), 3, 3, 32, 32); p["l2_s2"], p["l2_b2"] = bn(next(ks), 32)
    p["l2_ws"] = conv_w(next(ks), 1, 1, 16, 32); p["l2_ss"], p["l2_bs"] = bn(next(ks), 32)
    p["l3_w1"] = conv_w(next(ks), 3, 3, 32, 64); p["l3_s1"], p["l3_b1"] = bn(next(ks), 64)
    p["l3_w2"] = conv_w(next(ks), 3, 3, 64, 64); p["l3_s2"], p["l3_b2"] = bn(next(ks), 64)
    p["l3_ws"] = conv_w(next(ks), 1, 1, 32, 64); p["l3_ss"], p["l3_bs"] = bn(next(ks), 64)
    p["fc_w"] = 0.1 * jax.random.normal(next(ks), (64, num_experts), jnp.float32)
    p["fc_b"] = 0.1 * jax.random.normal(next(ks), (num_experts,), jnp.float32)
    return p


# ----------------------------------------------------------------------------
# Fused forward pass
# ----------------------------------------------------------------------------
@jax.jit
def router_forward(x_nchw, params):
    B, c_img, H, W = x_nchw.shape
    assert H == W and H % 4 == 0 and c_img <= 16
    HW = H * W
    W2, HW2 = W // 2, (H // 2) * (W // 2)
    W4, HW4 = W // 4, (H // 4) * (W // 4)
    E = params["fc_b"].shape[0]
    bf16, f32 = jnp.bfloat16, jnp.float32

    # -- pack input: NCHW -> (B, 16, H*W) channels-major, zero-pad channels to 16
    x = x_nchw.reshape(B, c_img, HW).astype(bf16)
    x = jnp.pad(x, ((0, 0), (0, 16 - c_img), (0, 0)))

    # -- fold BN into weights; flatten to stacked-tap matrices (done once, tiny)
    stem_w = jnp.pad(params["stem_w"], ((0, 0), (0, 0), (0, 16 - c_img), (0, 0)))
    w0, b0 = _fold_conv(stem_w, params["stem_s"], params["stem_b"])
    w11, b11 = _fold_conv(params["l1_w1"], params["l1_s1"], params["l1_b1"])
    w12, b12 = _fold_conv(params["l1_w2"], params["l1_s2"], params["l1_b2"])
    w21, b21 = _fold_conv(params["l2_w1"], params["l2_s1"], params["l2_b1"])
    w22, b22 = _fold_conv(params["l2_w2"], params["l2_s2"], params["l2_b2"])
    w2s, b2s = _fold_conv(params["l2_ws"], params["l2_ss"], params["l2_bs"])
    w31, b31 = _fold_conv(params["l3_w1"], params["l3_s1"], params["l3_b1"])
    w32, b32 = _fold_conv(params["l3_w2"], params["l3_s2"], params["l3_b2"])
    w3s, b3s = _fold_conv(params["l3_ws"], params["l3_ss"], params["l3_bs"])
    wfc = params["fc_w"].T.astype(bf16)                       # (E, 64)
    bfc = params["fc_b"].reshape(E, 1).astype(f32)

    mL1, mR1 = _edge_masks(H, W)
    mL2, mR2 = _edge_masks(H // 2, W2)
    mL3, mR3 = _edge_masks(H // 4, W4)
    s1 = _subsample_matrix(H, W)                              # (HW,  HW2)
    s2 = _subsample_matrix(H // 2, W2)                        # (HW2, HW4)

    consts = [mL1, mR1, mL2, mR2, mL3, mR3, s1, s2,
              w0, b0, w11, b11, w12, b12,
              w21, b21, w22, b22, w2s, b2s,
              w31, b31, w32, b32, w3s, b3s,
              wfc, bfc]

    # ------------------------------------------------------------------ kernel
    def kernel(x_ref,
               mL1_ref, mR1_ref, mL2_ref, mR2_ref, mL3_ref, mR3_ref,
               s1_ref, s2_ref,
               w0_ref, b0_ref, w11_ref, b11_ref, w12_ref, b12_ref,
               w21_ref, b21_ref, w22_ref, b22_ref, w2s_ref, b2s_ref,
               w31_ref, b31_ref, w32_ref, b32_ref, w3s_ref, b3s_ref,
               wfc_ref, bfc_ref,
               out_ref,
               halo16, halo32, halo64, stk):
        # zero the halo buffers (only the borders matter; full clear is tiny)
        halo16[...] = jnp.zeros_like(halo16)
        halo32[...] = jnp.zeros_like(halo32)
        halo64[...] = jnp.zeros_like(halo64)

        def conv3x3(act, halo, mL_ref, mR_ref, Wd, HWd, w_ref, b_ref, relu):
            """3x3 'same' conv + folded BN (+ ReLU); act is (Cin, HWd) in VMEM."""
            cin = act.shape[0]
            pad = Wd + 1
            halo[:, pad:pad + HWd] = act.astype(jnp.bfloat16)
            mL = mL_ref[...]
            mR = mR_ref[...]
            # stack the 9 shifted taps -> (9*cin, HWd) -> ONE MXU matmul
            for t in range(9):
                oy, ox = t // 3 - 1, t % 3 - 1
                s0 = pad + oy * Wd + ox
                tap = halo[:, s0:s0 + HWd]
                if ox == -1:
                    tap = tap * mL
                elif ox == 1:
                    tap = tap * mR
                stk[t * cin:(t + 1) * cin, 0:HWd] = tap
            y = jnp.dot(w_ref[...], stk[0:9 * cin, 0:HWd],
                        preferred_element_type=jnp.float32)
            y = y + b_ref[...]
            return jnp.maximum(y, 0.0) if relu else y

        def conv1x1(act, w_ref, b_ref):
            y = jnp.dot(w_ref[...], act.astype(jnp.bfloat16),
                        preferred_element_type=jnp.float32)
            return y + b_ref[...]

        def down(y, s_ref):      # stride-2 subsample as a tiny selection matmul
            return jnp.dot(y.astype(jnp.bfloat16), s_ref[...],
                           preferred_element_type=jnp.float32)

        x0 = x_ref[0]                                             # (16, HW) bf16

        # stem: conv3x3 + BN + ReLU
        out = conv3x3(x0, halo16, mL1_ref, mR1_ref, W, HW, w0_ref, b0_ref, True)

        # layer1: BasicBlock(16 -> 16, stride 1), identity shortcut
        h = conv3x3(out, halo16, mL1_ref, mR1_ref, W, HW, w11_ref, b11_ref, True)
        h = conv3x3(h, halo16, mL1_ref, mR1_ref, W, HW, w12_ref, b12_ref, False)
        out = jnp.maximum(h + out, 0.0)                           # (16, HW)

        # layer2: BasicBlock(16 -> 32, stride 2), 1x1-conv shortcut
        h = conv3x3(out, halo16, mL1_ref, mR1_ref, W, HW, w21_ref, b21_ref, True)
        h = down(h, s1_ref)                                       # (32, HW2)
        h = conv3x3(h, halo32, mL2_ref, mR2_ref, W2, HW2, w22_ref, b22_ref, False)
        sc = down(conv1x1(out, w2s_ref, b2s_ref), s1_ref)         # (32, HW2)
        out = jnp.maximum(h + sc, 0.0)

        # layer3: BasicBlock(32 -> 64, stride 2), 1x1-conv shortcut
        h = conv3x3(out, halo32, mL2_ref, mR2_ref, W2, HW2, w31_ref, b31_ref, True)
        h = down(h, s2_ref)                                       # (64, HW4)
        h = conv3x3(h, halo64, mL3_ref, mR3_ref, W4, HW4, w32_ref, b32_ref, False)
        sc = down(conv1x1(out, w3s_ref, b3s_ref), s2_ref)         # (64, HW4)
        out = jnp.maximum(h + sc, 0.0)                            # (64, HW4)

        # fused global average pool + fc  (fc(mean(x)) == mean(fc(x)))
        head = jnp.dot(wfc_ref[...], out.astype(jnp.bfloat16),
                       preferred_element_type=jnp.float32)        # (E, HW4)
        logits = jnp.sum(head, axis=1, keepdims=True) * (1.0 / HW4) + bfc_ref[...]
        out_ref[0] = logits                                       # (E, 1)

    def _const_spec(a):
        zeros = (0,) * a.ndim
        return pl.BlockSpec(a.shape, lambda b: zeros)

    in_specs = [pl.BlockSpec((1, 16, HW), lambda b: (b, 0, 0))]
    in_specs += [_const_spec(c) for c in consts]

    out = pl.pallas_call(
        kernel,
        out_shape=jax.ShapeDtypeStruct((B, E, 1), jnp.float32),
        grid=(B,),
        in_specs=in_specs,
        out_specs=pl.BlockSpec((1, E, 1), lambda b: (b, 0, 0)),
        scratch_shapes=[
            pltpu.VMEM((16, HW + 2 * (W + 1)), jnp.bfloat16),     # 16-ch halo buffer
            pltpu.VMEM((32, HW2 + 2 * (W2 + 1)), jnp.bfloat16),   # 32-ch halo buffer
            pltpu.VMEM((64, HW4 + 2 * (W4 + 1)), jnp.bfloat16),   # 64-ch halo buffer
            pltpu.VMEM((9 * 64, HW), jnp.bfloat16),               # stacked-tap staging
        ],
        compiler_params=pltpu.CompilerParams(
            dimension_semantics=("parallel",)),
    )(x, *consts)

    return out[:, :, 0]                                           # (B, E)


# ----------------------------------------------------------------------------
if __name__ == "__main__":
    key = jax.random.PRNGKey(0)
    k_x, k_p = jax.random.split(key)

    # batch=2, RGB input, 16x16 spatial (square, as implied by avg_pool2d(size[3]))
    x = jax.random.normal(k_x, (2, 3, 16, 16), jnp.float32)
    params = init_router_params(k_p, num_experts=2)

    logits = router_forward(x, params)
    jax.block_until_ready(logits)
    assert logits.shape == (2, 2), logits.shape
    print("KERNEL_OK")
</pallas_src>

<mosaic_0001>
module attributes {stable_mosaic.version = 11 : i64} {
  func.func @kernel(%arg0: i32, %arg1: memref<1x16x256xbf16, #tpu.memory_space<vmem>>, %arg2: memref<1x256xbf16, #tpu.memory_space<vmem>>, %arg3: memref<1x256xbf16, #tpu.memory_space<vmem>>, %arg4: memref<1x64xbf16, #tpu.memory_space<vmem>>, %arg5: memref<1x64xbf16, #tpu.memory_space<vmem>>, %arg6: memref<1x16xbf16, #tpu.memory_space<vmem>>, %arg7: memref<1x16xbf16, #tpu.memory_space<vmem>>, %arg8: memref<256x64xbf16, #tpu.memory_space<vmem>>, %arg9: memref<64x16xbf16, #tpu.memory_space<vmem>>, %arg10: memref<16x144xbf16, #tpu.memory_space<vmem>>, %arg11: memref<16x1xf32, #tpu.memory_space<vmem>>, %arg12: memref<16x144xbf16, #tpu.memory_space<vmem>>, %arg13: memref<16x1xf32, #tpu.memory_space<vmem>>, %arg14: memref<16x144xbf16, #tpu.memory_space<vmem>>, %arg15: memref<16x1xf32, #tpu.memory_space<vmem>>, %arg16: memref<32x144xbf16, #tpu.memory_space<vmem>>, %arg17: memref<32x1xf32, #tpu.memory_space<vmem>>, %arg18: memref<32x288xbf16, #tpu.memory_space<vmem>>, %arg19: memref<32x1xf32, #tpu.memory_space<vmem>>, %arg20: memref<32x16xbf16, #tpu.memory_space<vmem>>, %arg21: memref<32x1xf32, #tpu.memory_space<vmem>>, %arg22: memref<64x288xbf16, #tpu.memory_space<vmem>>, %arg23: memref<64x1xf32, #tpu.memory_space<vmem>>, %arg24: memref<64x576xbf16, #tpu.memory_space<vmem>>, %arg25: memref<64x1xf32, #tpu.memory_space<vmem>>, %arg26: memref<64x32xbf16, #tpu.memory_space<vmem>>, %arg27: memref<64x1xf32, #tpu.memory_space<vmem>>, %arg28: memref<2x64xbf16, #tpu.memory_space<vmem>>, %arg29: memref<2x1xf32, #tpu.memory_space<vmem>>, %arg30: memref<1x2x1xf32, #tpu.memory_space<vmem>>, %arg31: memref<16x290xbf16, #tpu.memory_space<vmem>>, %arg32: memref<32x82xbf16, #tpu.memory_space<vmem>>, %arg33: memref<64x26xbf16, #tpu.memory_space<vmem>>, %arg34: memref<576x256xbf16, #tpu.memory_space<vmem>>) attributes {dimension_semantics = [#tpu.dimension_semantics<parallel>], iteration_bounds = array<i64: 2>, scalar_prefetch = 0 : i64, scratch_operands = 4 : i64, tpu.core_type = #tpu.core_type<tc>, window_params = [{transform_indices = @transform_0, window_bounds = array<i64: 1, 16, 256>}, {pipeline_mode = #tpu.pipeline_mode<synchronous>, transform_indices = @transform_1, window_bounds = array<i64: 1, 256>}, {pipeline_mode = #tpu.pipeline_mode<synchronous>, transform_indices = @transform_2, window_bounds = array<i64: 1, 256>}, {pipeline_mode = #tpu.pipeline_mode<synchronous>, transform_indices = @transform_3, window_bounds = array<i64: 1, 64>}, {pipeline_mode = #tpu.pipeline_mode<synchronous>, transform_indices = @transform_4, window_bounds = array<i64: 1, 64>}, {pipeline_mode = #tpu.pipeline_mode<synchronous>, transform_indices = @transform_5, window_bounds = array<i64: 1, 16>}, {pipeline_mode = #tpu.pipeline_mode<synchronous>, transform_indices = @transform_6, window_bounds = array<i64: 1, 16>}, {pipeline_mode = #tpu.pipeline_mode<synchronous>, transform_indices = @transform_7, window_bounds = array<i64: 256, 64>}, {pipeline_mode = #tpu.pipeline_mode<synchronous>, transform_indices = @transform_8, window_bounds = array<i64: 64, 16>}, {pipeline_mode = #tpu.pipeline_mode<synchronous>, transform_indices = @transform_9, window_bounds = array<i64: 16, 144>}, {pipeline_mode = #tpu.pipeline_mode<synchronous>, transform_indices = @transform_10, window_bounds = array<i64: 16, 1>}, {pipeline_mode = #tpu.pipeline_mode<synchronous>, transform_indices = @transform_11, window_bounds = array<i64: 16, 144>}, {pipeline_mode = #tpu.pipeline_mode<synchronous>, transform_indices = @transform_12, window_bounds = array<i64: 16, 1>}, {pipeline_mode = #tpu.pipeline_mode<synchronous>, transform_indices = @transform_13, window_bounds = array<i64: 16, 144>}, {pipeline_mode = #tpu.pipeline_mode<synchronous>, transform_indices = @transform_14, window_bounds = array<i64: 16, 1>}, {pipeline_mode = #tpu.pipeline_mode<synchronous>, transform_indices = @transform_15, window_bounds = array<i64: 32, 144>}, {pipeline_mode = #tpu.pipeline_mode<synchronous>, transform_indices = @transform_16, window_bounds = array<i64: 32, 1>}, {pipeline_mode = #tpu.pipeline_mode<synchronous>, transform_indices = @transform_17, window_bounds = array<i64: 32, 288>}, {pipeline_mode = #tpu.pipeline_mode<synchronous>, transform_indices = @transform_18, window_bounds = array<i64: 32, 1>}, {pipeline_mode = #tpu.pipeline_mode<synchronous>, transform_indices = @transform_19, window_bounds = array<i64: 32, 16>}, {pipeline_mode = #tpu.pipeline_mode<synchronous>, transform_indices = @transform_20, window_bounds = array<i64: 32, 1>}, {pipeline_mode = #tpu.pipeline_mode<synchronous>, transform_indices = @transform_21, window_bounds = array<i64: 64, 288>}, {pipeline_mode = #tpu.pipeline_mode<synchronous>, transform_indices = @transform_22, window_bounds = array<i64: 64, 1>}, {pipeline_mode = #tpu.pipeline_mode<synchronous>, transform_indices = @transform_23, window_bounds = array<i64: 64, 576>}, {pipeline_mode = #tpu.pipeline_mode<synchronous>, transform_indices = @transform_24, window_bounds = array<i64: 64, 1>}, {pipeline_mode = #tpu.pipeline_mode<synchronous>, transform_indices = @transform_25, window_bounds = array<i64: 64, 32>}, {pipeline_mode = #tpu.pipeline_mode<synchronous>, transform_indices = @transform_26, window_bounds = array<i64: 64, 1>}, {pipeline_mode = #tpu.pipeline_mode<synchronous>, transform_indices = @transform_27, window_bounds = array<i64: 2, 64>}, {pipeline_mode = #tpu.pipeline_mode<synchronous>, transform_indices = @transform_28, window_bounds = array<i64: 2, 1>}, {transform_indices = @transform_29, window_bounds = array<i64: 1, 2, 1>}]} {
    %cst = arith.constant 0.000000e+00 : bf16
    %0 = vector.broadcast %cst : bf16 to vector<16x290xbf16>
    %c0 = arith.constant 0 : index
    %c0_0 = arith.constant 0 : index
    %1 = vector.load %arg31[%c0, %c0_0] : memref<16x290xbf16, #tpu.memory_space<vmem>>, vector<16x290xbf16>
    tpu.vector_store %arg31[%c0, %c0_0], %0 {strides = array<i32>} : memref<16x290xbf16, #tpu.memory_space<vmem>>, vector<16x290xbf16>,
    %cst_1 = arith.constant 0.000000e+00 : bf16
    %2 = vector.broadcast %cst_1 : bf16 to vector<32x82xbf16>
    %c0_2 = arith.constant 0 : index
    %c0_3 = arith.constant 0 : index
    %3 = vector.load %arg32[%c0_2, %c0_3] : memref<32x82xbf16, #tpu.memory_space<vmem>>, vector<32x82xbf16>
    tpu.vector_store %arg32[%c0_2, %c0_3], %2 {strides = array<i32>} : memref<32x82xbf16, #tpu.memory_space<vmem>>, vector<32x82xbf16>,
    %cst_4 = arith.constant 0.000000e+00 : bf16
    %4 = vector.broadcast %cst_4 : bf16 to vector<64x26xbf16>
    %c0_5 = arith.constant 0 : index
    %c0_6 = arith.constant 0 : index
    %5 = vector.load %arg33[%c0_5, %c0_6] : memref<64x26xbf16, #tpu.memory_space<vmem>>, vector<64x26xbf16>
    tpu.vector_store %arg33[%c0_5, %c0_6], %4 {strides = array<i32>} : memref<64x26xbf16, #tpu.memory_space<vmem>>, vector<64x26xbf16>,
    %c0_7 = arith.constant 0 : index
    %c0_8 = arith.constant 0 : index
    %c0_9 = arith.constant 0 : index
    %6 = vector.load %arg1[%c0_7, %c0_8, %c0_9] : memref<1x16x256xbf16, #tpu.memory_space<vmem>>, vector<1x16x256xbf16>
    %7 = vector.shape_cast %6 : vector<1x16x256xbf16> to vector<16x256xbf16>
    %c0_10 = arith.constant 0 : index
    %c17 = arith.constant 17 : index
    %8 = vector.load %arg31[%c0_10, %c17] : memref<16x290xbf16, #tpu.memory_space<vmem>>, vector<16x256xbf16>
    tpu.vector_store %arg31[%c0_10, %c17], %7 {strides = array<i32>} : memref<16x290xbf16, #tpu.memory_space<vmem>>, vector<16x256xbf16>,
    %c0_11 = arith.constant 0 : index
    %c0_12 = arith.constant 0 : index
    %9 = vector.load %arg2[%c0_11, %c0_12] : memref<1x256xbf16, #tpu.memory_space<vmem>>, vector<1x256xbf16>
    %c0_13 = arith.constant 0 : index
    %c0_14 = arith.constant 0 : index
    %10 = vector.load %arg3[%c0_13, %c0_14] : memref<1x256xbf16, #tpu.memory_space<vmem>>, vector<1x256xbf16>
    %c0_15 = arith.constant 0 : index
    %c0_16 = arith.constant 0 : index
    %11 = vector.load %arg31[%c0_15, %c0_16] : memref<16x290xbf16, #tpu.memory_space<vmem>>, vector<16x256xbf16>
    %12 = vector.broadcast %9 : vector<1x256xbf16> to vector<16x256xbf16>
    %13 = arith.mulf %11, %12 : vector<16x256xbf16>
    %c0_17 = arith.constant 0 : index
    %c0_18 = arith.constant 0 : index
    %14 = vector.load %arg34[%c0_17, %c0_18] : memref<576x256xbf16, #tpu.memory_space<vmem>>, vector<16x256xbf16>
    tpu.vector_store %arg34[%c0_17, %c0_18], %13 {strides = array<i32>} : memref<576x256xbf16, #tpu.memory_space<vmem>>, vector<16x256xbf16>,
    %c0_19 = arith.constant 0 : index
    %c1 = arith.constant 1 : index
    %15 = vector.load %arg31[%c0_19, %c1] : memref<16x290xbf16, #tpu.memory_space<vmem>>, vector<16x256xbf16>
    %c16 = arith.constant 16 : index
    %c0_20 = arith.constant 0 : index
    %16 = vector.load %arg34[%c16, %c0_20] : memref<576x256xbf16, #tpu.memory_space<vmem>>, vector<16x256xbf16>
    tpu.vector_store %arg34[%c16, %c0_20], %15 {strides = array<i32>} : memref<576x256xbf16, #tpu.memory_space<vmem>>, vector<16x256xbf16>,
    %c0_21 = arith.constant 0 : index
    %c2 = arith.constant 2 : index
    %17 = vector.load %arg31[%c0_21, %c2] : memref<16x290xbf16, #tpu.memory_space<vmem>>, vector<16x256xbf16>
    %18 = vector.broadcast %10 : vector<1x256xbf16> to vector<16x256xbf16>
    %19 = arith.mulf %17, %18 : vector<16x256xbf16>
    %c32 = arith.constant 32 : index
    %c0_22 = arith.constant 0 : index
    %20 = vector.load %arg34[%c32, %c0_22] : memref<576x256xbf16, #tpu.memory_space<vmem>>, vector<16x256xbf16>
    tpu.vector_store %arg34[%c32, %c0_22], %19 {strides = array<i32>} : memref<576x256xbf16, #tpu.memory_space<vmem>>, vector<16x256xbf16>,
    %c0_23 = arith.constant 0 : index
    %c16_24 = arith.constant 16 : index
    %21 = vector.load %arg31[%c0_23, %c16_24] : memref<16x290xbf16, #tpu.memory_space<vmem>>, vector<16x256xbf16>
    %22 = vector.broadcast %9 : vector<1x256xbf16> to vector<16x256xbf16>
    %23 = arith.mulf %21, %22 : vector<16x256xbf16>
    %c48 = arith.constant 48 : index
    %c0_25 = arith.constant 0 : index
    %24 = vector.load %arg34[%c48, %c0_25] : memref<576x256xbf16, #tpu.memory_space<vmem>>, vector<16x256xbf16>
    tpu.vector_store %arg34[%c48, %c0_25], %23 {strides = array<i32>} : memref<576x256xbf16, #tpu.memory_space<vmem>>, vector<16x256xbf16>,
    %c0_26 = arith.constant 0 : index
    %c17_27 = arith.constant 17 : index
    %25 = vector.load %arg31[%c0_26, %c17_27] : memref<16x290xbf16, #tpu.memory_space<vmem>>, vector<16x256xbf16>
    %c64 = arith.constant 64 : index
    %c0_28 = arith.constant 0 : index
    %26 = vector.load %arg34[%c64, %c0_28] : memref<576x256xbf16, #tpu.memory_space<vmem>>, vector<16x256xbf16>
    tpu.vector_store %arg34[%c64, %c0_28], %25 {strides = array<i32>} : memref<576x256xbf16, #tpu.memory_space<vmem>>, vector<16x256xbf16>,
    %c0_29 = arith.constant 0 : index
    %c18 = arith.constant 18 : index
    %27 = vector.load %arg31[%c0_29, %c18] : memref<16x290xbf16, #tpu.memory_space<vmem>>, vector<16x256xbf16>
    %28 = vector.broadcast %10 : vector<1x256xbf16> to vector<16x256xbf16>
    %29 = arith.mulf %27, %28 : vector<16x256xbf16>
    %c80 = arith.constant 80 : index
    %c0_30 = arith.constant 0 : index
    %30 = vector.load %arg34[%c80, %c0_30] : memref<576x256xbf16, #tpu.memory_space<vmem>>, vector<16x256xbf16>
    tpu.vector_store %arg34[%c80, %c0_30], %29 {strides = array<i32>} : memref<576x256xbf16, #tpu.memory_space<vmem>>, vector<16x256xbf16>,
    %c0_31 = arith.constant 0 : index
    %c32_32 = arith.constant 32 : index
    %31 = vector.load %arg31[%c0_31, %c32_32] : memref<16x290xbf16, #tpu.memory_space<vmem>>, vector<16x256xbf16>
    %32 = vector.broadcast %9 : vector<1x256xbf16> to vector<16x256xbf16>
    %33 = arith.mulf %31, %32 : vector<16x256xbf16>
    %c96 = arith.constant 96 : index
    %c0_33 = arith.constant 0 : index
    %34 = vector.load %arg34[%c96, %c0_33] : memref<576x256xbf16, #tpu.memory_space<vmem>>, vector<16x256xbf16>
    tpu.vector_store %arg34[%c96, %c0_33], %33 {strides = array<i32>} : memref<576x256xbf16, #tpu.memory_space<vmem>>, vector<16x256xbf16>,
    %c0_34 = arith.constant 0 : index
    %c33 = arith.constant 33 : index
    %35 = vector.load %arg31[%c0_34, %c33] : memref<16x290xbf16, #tpu.memory_space<vmem>>, vector<16x256xbf16>
    %c112 = arith.constant 112 : index
    %c0_35 = arith.constant 0 : index
    %36 = vector.load %arg34[%c112, %c0_35] : memref<576x256xbf16, #tpu.memory_space<vmem>>, vector<16x256xbf16>
    tpu.vector_store %arg34[%c112, %c0_35], %35 {strides = array<i32>} : memref<576x256xbf16, #tpu.memory_space<vmem>>, vector<16x256xbf16>,
    %c0_36 = arith.constant 0 : index
    %c34 = arith.constant 34 : index
    %37 = vector.load %arg31[%c0_36, %c34] : memref<16x290xbf16, #tpu.memory_space<vmem>>, vector<16x256xbf16>
    %38 = vector.broadcast %10 : vector<1x256xbf16> to vector<16x256xbf16>
    %39 = arith.mulf %37, %38 : vector<16x256xbf16>
    %c128 = arith.constant 128 : index
    %c0_37 = arith.constant 0 : index
    %40 = vector.load %arg34[%c128, %c0_37] : memref<576x256xbf16, #tpu.memory_space<vmem>>, vector<16x256xbf16>
    tpu.vector_store %arg34[%c128, %c0_37], %39 {strides = array<i32>} : memref<576x256xbf16, #tpu.memory_space<vmem>>, vector<16x256xbf16>,
    %c0_38 = arith.constant 0 : index
    %c0_39 = arith.constant 0 : index
    %41 = vector.load %arg10[%c0_38, %c0_39] : memref<16x144xbf16, #tpu.memory_space<vmem>>, vector<16x144xbf16>
    %c0_40 = arith.constant 0 : index
    %c0_41 = arith.constant 0 : index
    %42 = vector.load %arg34[%c0_40, %c0_41] : memref<576x256xbf16, #tpu.memory_space<vmem>>, vector<144x256xbf16>
    %cst_42 = arith.constant dense<0.000000e+00> : vector<16x256xf32>
    %43 = tpu.matmul %41, %42, %cst_42 {dimension_numbers = #tpu.dot_dimension_numbers<[1], [0], [0], [1], [0, 0, 1, 1], [], []>} : vector<16x144xbf16>, vector<144x256xbf16>, vector<16x256xf32> -> vector<16x256xf32>
    %c0_43 = arith.constant 0 : index
    %c0_44 = arith.constant 0 : index
    %44 = vector.load %arg11[%c0_43, %c0_44] : memref<16x1xf32, #tpu.memory_space<vmem>>, vector<16x1xf32>
    %45 = vector.broadcast %44 : vector<16x1xf32> to vector<16x256xf32>
    %46 = arith.addf %43, %45 : vector<16x256xf32>
    %cst_45 = arith.constant 0.000000e+00 : f32
    %47 = vector.broadcast %cst_45 : f32 to vector<16x256xf32>
    %48 = arith.maximumf %46, %47 : vector<16x256xf32>
    %49 = arith.truncf %48 : vector<16x256xf32> to vector<16x256xbf16>
    %c0_46 = arith.constant 0 : index
    %c17_47 = arith.constant 17 : index
    %50 = vector.load %arg31[%c0_46, %c17_47] : memref<16x290xbf16, #tpu.memory_space<vmem>>, vector<16x256xbf16>
    tpu.vector_store %arg31[%c0_46, %c17_47], %49 {strides = array<i32>} : memref<16x290xbf16, #tpu.memory_space<vmem>>, vector<16x256xbf16>,
    %c0_48 = arith.constant 0 : index
    %c0_49 = arith.constant 0 : index
    %51 = vector.load %arg2[%c0_48, %c0_49] : memref<1x256xbf16, #tpu.memory_space<vmem>>, vector<1x256xbf16>
    %c0_50 = arith.constant 0 : index
    %c0_51 = arith.constant 0 : index
    %52 = vector.load %arg3[%c0_50, %c0_51] : memref<1x256xbf16, #tpu.memory_space<vmem>>, vector<1x256xbf16>
    %c0_52 = arith.constant 0 : index
    %c0_53 = arith.constant 0 : index
    %53 = vector.load %arg31[%c0_52, %c0_53] : memref<16x290xbf16, #tpu.memory_space<vmem>>, vector<16x256xbf16>
    %54 = vector.broadcast %51 : vector<1x256xbf16> to vector<16x256xbf16>
    %55 = arith.mulf %53, %54 : vector<16x256xbf16>
    %c0_54 = arith.constant 0 : index
    %c0_55 = arith.constant 0 : index
    %56 = vector.load %arg34[%c0_54, %c0_55] : memref<576x256xbf16, #tpu.memory_space<vmem>>, vector<16x256xbf16>
    tpu.vector_store %arg34[%c0_54, %c0_55], %55 {strides = array<i32>} : memref<576x256xbf16, #tpu.memory_space<vmem>>, vector<16x256xbf16>,
    %c0_56 = arith.constant 0 : index
    %c1_57 = arith.constant 1 : index
    %57 = vector.load %arg31[%c0_56, %c1_57] : memref<16x290xbf16, #tpu.memory_space<vmem>>, vector<16x256xbf16>
    %c16_58 = arith.constant 16 : index
    %c0_59 = arith.constant 0 : index
    %58 = vector.load %arg34[%c16_58, %c0_59] : memref<576x256xbf16, #tpu.memory_space<vmem>>, vector<16x256xbf16>
    tpu.vector_store %arg34[%c16_58, %c0_59], %57 {strides = array<i32>} : memref<576x256xbf16, #tpu.memory_space<vmem>>, vector<16x256xbf16>,
    %c0_60 = arith.constant 0 : index
    %c2_61 = arith.constant 2 : index
    %59 = vector.load %arg31[%c0_60, %c2_61] : memref<16x290xbf16, #tpu.memory_space<vmem>>, vector<16x256xbf16>
    %60 = vector.broadcast %52 : vector<1x256xbf16> to vector<16x256xbf16>
    %61 = arith.mulf %59, %60 : vector<16x256xbf16>
    %c32_62 = arith.constant 32 : index
    %c0_63 = arith.constant 0 : index
    %62 = vector.load %arg34[%c32_62, %c0_63] : memref<576x256xbf16, #tpu.memory_space<vmem>>, vector<16x256xbf16>
    tpu.vector_store %arg34[%c32_62, %c0_63], %61 {strides = array<i32>} : memref<576x256xbf16, #tpu.memory_space<vmem>>, vector<16x256xbf16>,
    %c0_64 = arith.constant 0 : index
    %c16_65 = arith.constant 16 : index
    %63 = vector.load %arg31[%c0_64, %c16_65] : memref<16x290xbf16, #tpu.memory_space<vmem>>, vector<16x256xbf16>
    %64 = vector.broadcast %51 : vector<1x256xbf16> to vector<16x256xbf16>
    %65 = arith.mulf %63, %64 : vector<16x256xbf16>
    %c48_66 = arith.constant 48 : index
    %c0_67 = arith.constant 0 : index
    %66 = vector.load %arg34[%c48_66, %c0_67] : memref<576x256xbf16, #tpu.memory_space<vmem>>, vector<16x256xbf16>
    tpu.vector_store %arg34[%c48_66, %c0_67], %65 {strides = array<i32>} : memref<576x256xbf16, #tpu.memory_space<vmem>>, vector<16x256xbf16>,
    %c0_68 = arith.constant 0 : index
    %c17_69 = arith.constant 17 : index
    %67 = vector.load %arg31[%c0_68, %c17_69] : memref<16x290xbf16, #tpu.memory_space<vmem>>, vector<16x256xbf16>
    %c64_70 = arith.constant 64 : index
    %c0_71 = arith.constant 0 : index
    %68 = vector.load %arg34[%c64_70, %c0_71] : memref<576x256xbf16, #tpu.memory_space<vmem>>, vector<16x256xbf16>
    tpu.vector_store %arg34[%c64_70, %c0_71], %67 {strides = array<i32>} : memref<576x256xbf16, #tpu.memory_space<vmem>>, vector<16x256xbf16>,
    %c0_72 = arith.constant 0 : index
    %c18_73 = arith.constant 18 : index
    %69 = vector.load %arg31[%c0_72, %c18_73] : memref<16x290xbf16, #tpu.memory_space<vmem>>, vector<16x256xbf16>
    %70 = vector.broadcast %52 : vector<1x256xbf16> to vector<16x256xbf16>
    %71 = arith.mulf %69, %70 : vector<16x256xbf16>
    %c80_74 = arith.constant 80 : index
    %c0_75 = arith.constant 0 : index
    %72 = vector.load %arg34[%c80_74, %c0_75] : memref<576x256xbf16, #tpu.memory_space<vmem>>, vector<16x256xbf16>
    tpu.vector_store %arg34[%c80_74, %c0_75], %71 {strides = array<i32>} : memref<576x256xbf16, #tpu.memory_space<vmem>>, vector<16x256xbf16>,
    %c0_76 = arith.constant 0 : index
    %c32_77 = arith.constant 32 : index
    %73 = vector.load %arg31[%c0_76, %c32_77] : memref<16x290xbf16, #tpu.memory_space<vmem>>, vector<16x256xbf16>
    %74 = vector.broadcast %51 : vector<1x256xbf16> to vector<16x256xbf16>
    %75 = arith.mulf %73, %74 : vector<16x256xbf16>
    %c96_78 = arith.constant 96 : index
    %c0_79 = arith.constant 0 : index
    %76 = vector.load %arg34[%c96_78, %c0_79] : memref<576x256xbf16, #tpu.memory_space<vmem>>, vector<16x256xbf16>
    tpu.vector_store %arg34[%c96_78, %c0_79], %75 {strides = array<i32>} : memref<576x256xbf16, #tpu.memory_space<vmem>>, vector<16x256xbf16>,
    %c0_80 = arith.constant 0 : index
    %c33_81 = arith.constant 33 : index
    %77 = vector.load %arg31[%c0_80, %c33_81] : memref<16x290xbf16, #tpu.memory_space<vmem>>, vector<16x256xbf16>
    %c112_82 = arith.constant 112 : index
    %c0_83 = arith.constant 0 : index
    %78 = vector.load %arg34[%c112_82, %c0_83] : memref<576x256xbf16, #tpu.memory_space<vmem>>, vector<16x256xbf16>
    tpu.vector_store %arg34[%c112_82, %c0_83], %77 {strides = array<i32>} : memref<576x256xbf16, #tpu.memory_space<vmem>>, vector<16x256xbf16>,
    %c0_84 = arith.constant 0 : index
    %c34_85 = arith.constant 34 : index
    %79 = vector.load %arg31[%c0_84, %c34_85] : memref<16x290xbf16, #tpu.memory_space<vmem>>, vector<16x256xbf16>
    %80 = vector.broadcast %52 : vector<1x256xbf16> to vector<16x256xbf16>
    %81 = arith.mulf %79, %80 : vector<16x256xbf16>
    %c128_86 = arith.constant 128 : index
    %c0_87 = arith.constant 0 : index
    %82 = vector.load %arg34[%c128_86, %c0_87] : memref<576x256xbf16, #tpu.memory_space<vmem>>, vector<16x256xbf16>
    tpu.vector_store %arg34[%c128_86, %c0_87], %81 {strides = array<i32>} : memref<576x256xbf16, #tpu.memory_space<vmem>>, vector<16x256xbf16>,
    %c0_88 = arith.constant 0 : index
    %c0_89 = arith.constant 0 : index
    %83 = vector.load %arg12[%c0_88, %c0_89] : memref<16x144xbf16, #tpu.memory_space<vmem>>, vector<16x144xbf16>
    %c0_90 = arith.constant 0 : index
    %c0_91 = arith.constant 0 : index
    %84 = vector.load %arg34[%c0_90, %c0_91] : memref<576x256xbf16, #tpu.memory_space<vmem>>, vector<144x256xbf16>
    %cst_92 = arith.constant dense<0.000000e+00> : vector<16x256xf32>
    %85 = tpu.matmul %83, %84, %cst_92 {dimension_numbers = #tpu.dot_dimension_numbers<[1], [0], [0], [1], [0, 0, 1, 1], [], []>} : vector<16x144xbf16>, vector<144x256xbf16>, vector<16x256xf32> -> vector<16x256xf32>
    %c0_93 = arith.constant 0 : index
    %c0_94 = arith.constant 0 : index
    %86 = vector.load %arg13[%c0_93, %c0_94] : memref<16x1xf32, #tpu.memory_space<vmem>>, vector<16x1xf32>
    %87 = vector.broadcast %86 : vector<16x1xf32> to vector<16x256xf32>
    %88 = arith.addf %85, %87 : vector<16x256xf32>
    %cst_95 = arith.constant 0.000000e+00 : f32
    %89 = vector.broadcast %cst_95 : f32 to vector<16x256xf32>
    %90 = arith.maximumf %88, %89 : vector<16x256xf32>
    %91 = arith.truncf %90 : vector<16x256xf32> to vector<16x256xbf16>
    %c0_96 = arith.constant 0 : index
    %c17_97 = arith.constant 17 : index
    %92 = vector.load %arg31[%c0_96, %c17_97] : memref<16x290xbf16, #tpu.memory_space<vmem>>, vector<16x256xbf16>
    tpu.vector_store %arg31[%c0_96, %c17_97], %91 {strides = array<i32>} : memref<16x290xbf16, #tpu.memory_space<vmem>>, vector<16x256xbf16>,
    %c0_98 = arith.constant 0 : index
    %c0_99 = arith.constant 0 : index
    %93 = vector.load %arg2[%c0_98, %c0_99] : memref<1x256xbf16, #tpu.memory_space<vmem>>, vector<1x256xbf16>
    %c0_100 = arith.constant 0 : index
    %c0_101 = arith.constant 0 : index
    %94 = vector.load %arg3[%c0_100, %c0_101] : memref<1x256xbf16, #tpu.memory_space<vmem>>, vector<1x256xbf16>
    %c0_102 = arith.constant 0 : index
    %c0_103 = arith.constant 0 : index
    %95 = vector.load %arg31[%c0_102, %c0_103] : memref<16x290xbf16, #tpu.memory_space<vmem>>, vector<16x256xbf16>
    %96 = vector.broadcast %93 : vector<1x256xbf16> to vector<16x256xbf16>
    %97 = arith.mulf %95, %96 : vector<16x256xbf16>
    %c0_104 = arith.constant 0 : index
    %c0_105 = arith.constant 0 : index
    %98 = vector.load %arg34[%c0_104, %c0_105] : memref<576x256xbf16, #tpu.memory_space<vmem>>, vector<16x256xbf16>
    tpu.vector_store %arg34[%c0_104, %c0_105], %97 {strides = array<i32>} : memref<576x256xbf16, #tpu.memory_space<vmem>>, vector<16x256xbf16>,
    %c0_106 = arith.constant 0 : index
    %c1_107 = arith.constant 1 : index
    %99 = vector.load %arg31[%c0_106, %c1_107] : memref<16x290xbf16, #tpu.memory_space<vmem>>, vector<16x256xbf16>
    %c16_108 = arith.constant 16 : index
    %c0_109 = arith.constant 0 : index
    %100 = vector.load %arg34[%c16_108, %c0_109] : memref<576x256xbf16, #tpu.memory_space<vmem>>, vector<16x256xbf16>
    tpu.vector_store %arg34[%c16_108, %c0_109], %99 {strides = array<i32>} : memref<576x256xbf16, #tpu.memory_space<vmem>>, vector<16x256xbf16>,
    %c0_110 = arith.constant 0 : index
    %c2_111 = arith.constant 2 : index
    %101 = vector.load %arg31[%c0_110, %c2_111] : memref<16x290xbf16, #tpu.memory_space<vmem>>, vector<16x256xbf16>
    %102 = vector.broadcast %94 : vector<1x256xbf16> to vector<16x256xbf16>
    %103 = arith.mulf %101, %102 : vector<16x256xbf16>
    %c32_112 = arith.constant 32 : index
    %c0_113 = arith.constant 0 : index
    %104 = vector.load %arg34[%c32_112, %c0_113] : memref<576x256xbf16, #tpu.memory_space<vmem>>, vector<16x256xbf16>
    tpu.vector_store %arg34[%c32_112, %c0_113], %103 {strides = array<i32>} : memref<576x256xbf16, #tpu.memory_space<vmem>>, vector<16x256xbf16>,
    %c0_114 = arith.constant 0 : index
    %c16_115 = arith.constant 16 : index
    %105 = vector.load %arg31[%c0_114, %c16_115] : memref<16x290xbf16, #tpu.memory_space<vmem>>, vector<16x256xbf16>
    %106 = vector.broadcast %93 : vector<1x256xbf16> to vector<16x256xbf16>
    %107 = arith.mulf %105, %106 : vector<16x256xbf16>
    %c48_116 = arith.constant 48 : index
    %c0_117 = arith.constant 0 : index
    %108 = vector.load %arg34[%c48_116, %c0_117] : memref<576x256xbf16, #tpu.memory_space<vmem>>, vector<16x256xbf16>
    tpu.vector_store %arg34[%c48_116, %c0_117], %107 {strides = array<i32>} : memref<576x256xbf16, #tpu.memory_space<vmem>>, vector<16x256xbf16>,
    %c0_118 = arith.constant 0 : index
    %c17_119 = arith.constant 17 : index
    %109 = vector.load %arg31[%c0_118, %c17_119] : memref<16x290xbf16, #tpu.memory_space<vmem>>, vector<16x256xbf16>
    %c64_120 = arith.constant 64 : index
    %c0_121 = arith.constant 0 : index
    %110 = vector.load %arg34[%c64_120, %c0_121] : memref<576x256xbf16, #tpu.memory_space<vmem>>, vector<16x256xbf16>
    tpu.vector_store %arg34[%c64_120, %c0_121], %109 {strides = array<i32>} : memref<576x256xbf16, #tpu.memory_space<vmem>>, vector<16x256xbf16>,
    %c0_122 = arith.constant 0 : index
    %c18_123 = arith.constant 18 : index
    %111 = vector.load %arg31[%c0_122, %c18_123] : memref<16x290xbf16, #tpu.memory_space<vmem>>, vector<16x256xbf16>
    %112 = vector.broadcast %94 : vector<1x256xbf16> to vector<16x256xbf16>
    %113 = arith.mulf %111, %112 : vector<16x256xbf16>
    %c80_124 = arith.constant 80 : index
    %c0_125 = arith.constant 0 : index
    %114 = vector.load %arg34[%c80_124, %c0_125] : memref<576x256xbf16, #tpu.memory_space<vmem>>, vector<16x256xbf16>
    tpu.vector_store %arg34[%c80_124, %c0_125], %113 {strides = array<i32>} : memref<576x256xbf16, #tpu.memory_space<vmem>>, vector<16x256xbf16>,
    %c0_126 = arith.constant 0 : index
    %c32_127 = arith.constant 32 : index
    %115 = vector.load %arg31[%c0_126, %c32_127] : memref<16x290xbf16, #tpu.memory_space<vmem>>, vector<16x256xbf16>
    %116 = vector.broadcast %93 : vector<1x256xbf16> to vector<16x256xbf16>
    %117 = arith.mulf %115, %116 : vector<16x256xbf16>
    %c96_128 = arith.constant 96 : index
    %c0_129 = arith.constant 0 : index
    %118 = vector.load %arg34[%c96_128, %c0_129] : memref<576x256xbf16, #tpu.memory_space<vmem>>, vector<16x256xbf16>
    tpu.vector_store %arg34[%c96_128, %c0_129], %117 {strides = array<i32>} : memref<576x256xbf16, #tpu.memory_space<vmem>>, vector<16x256xbf16>,
    %c0_130 = arith.constant 0 : index
    %c33_131 = arith.constant 33 : index
    %119 = vector.load %arg31[%c0_130, %c33_131] : memref<16x290xbf16, #tpu.memory_space<vmem>>, vector<16x256xbf16>
    %c112_132 = arith.constant 112 : index
    %c0_133 = arith.constant 0 : index
    %120 = vector.load %arg34[%c112_132, %c0_133] : memref<576x256xbf16, #tpu.memory_space<vmem>>, vector<16x256xbf16>
    tpu.vector_store %arg34[%c112_132, %c0_133], %119 {strides = array<i32>} : memref<576x256xbf16, #tpu.memory_space<vmem>>, vector<16x256xbf16>,
    %c0_134 = arith.constant 0 : index
    %c34_135 = arith.constant 34 : index
    %121 = vector.load %arg31[%c0_134, %c34_135] : memref<16x290xbf16, #tpu.memory_space<vmem>>, vector<16x256xbf16>
    %122 = vector.broadcast %94 : vector<1x256xbf16> to vector<16x256xbf16>
    %123 = arith.mulf %121, %122 : vector<16x256xbf16>
    %c128_136 = arith.constant 128 : index
    %c0_137 = arith.constant 0 : index
    %124 = vector.load %arg34[%c128_136, %c0_137] : memref<576x256xbf16, #tpu.memory_space<vmem>>, vector<16x256xbf16>
    tpu.vector_store %arg34[%c128_136, %c0_137], %123 {strides = array<i32>} : memref<576x256xbf16, #tpu.memory_space<vmem>>, vector<16x256xbf16>,
    %c0_138 = arith.constant 0 : index
    %c0_139 = arith.constant 0 : index
    %125 = vector.load %arg14[%c0_138, %c0_139] : memref<16x144xbf16, #tpu.memory_space<vmem>>, vector<16x144xbf16>
    %c0_140 = arith.constant 0 : index
    %c0_141 = arith.constant 0 : index
    %126 = vector.load %arg34[%c0_140, %c0_141] : memref<576x256xbf16, #tpu.memory_space<vmem>>, vector<144x256xbf16>
    %cst_142 = arith.constant dense<0.000000e+00> : vector<16x256xf32>
    %127 = tpu.matmul %125, %126, %cst_142 {dimension_numbers = #tpu.dot_dimension_numbers<[1], [0], [0], [1], [0, 0, 1, 1], [], []>} : vector<16x144xbf16>, vector<144x256xbf16>, vector<16x256xf32> -> vector<16x256xf32>
    %c0_143 = arith.constant 0 : index
    %c0_144 = arith.constant 0 : index
    %128 = vector.load %arg15[%c0_143, %c0_144] : memref<16x1xf32, #tpu.memory_space<vmem>>, vector<16x1xf32>
    %129 = vector.broadcast %128 : vector<16x1xf32> to vector<16x256xf32>
    %130 = arith.addf %127, %129 : vector<16x256xf32>
    %131 = arith.addf %130, %48 : vector<16x256xf32>
    %cst_145 = arith.constant 0.000000e+00 : f32
    %132 = vector.broadcast %cst_145 : f32 to vector<16x256xf32>
    %133 = arith.maximumf %131, %132 : vector<16x256xf32>
    %134 = arith.truncf %133 : vector<16x256xf32> to vector<16x256xbf16>
    %c0_146 = arith.constant 0 : index
    %c17_147 = arith.constant 17 : index
    %135 = vector.load %arg31[%c0_146, %c17_147] : memref<16x290xbf16, #tpu.memory_space<vmem>>, vector<16x256xbf16>
    tpu.vector_store %arg31[%c0_146, %c17_147], %134 {strides = array<i32>} : memref<16x290xbf16, #tpu.memory_space<vmem>>, vector<16x256xbf16>,
    %c0_148 = arith.constant 0 : index
    %c0_149 = arith.constant 0 : index
    %136 = vector.load %arg2[%c0_148, %c0_149] : memref<1x256xbf16, #tpu.memory_space<vmem>>, vector<1x256xbf16>
    %c0_150 = arith.constant 0 : index
    %c0_151 = arith.constant 0 : index
    %137 = vector.load %arg3[%c0_150, %c0_151] : memref<1x256xbf16, #tpu.memory_space<vmem>>, vector<1x256xbf16>
    %c0_152 = arith.constant 0 : index
    %c0_153 = arith.constant 0 : index
    %138 = vector.load %arg31[%c0_152, %c0_153] : memref<16x290xbf16, #tpu.memory_space<vmem>>, vector<16x256xbf16>
    %139 = vector.broadcast %136 : vector<1x256xbf16> to vector<16x256xbf16>
    %140 = arith.mulf %138, %139 : vector<16x256xbf16>
    %c0_154 = arith.constant 0 : index
    %c0_155 = arith.constant 0 : index
    %141 = vector.load %arg34[%c0_154, %c0_155] : memref<576x256xbf16, #tpu.memory_space<vmem>>, vector<16x256xbf16>
    tpu.vector_store %arg34[%c0_154, %c0_155], %140 {strides = array<i32>} : memref<576x256xbf16, #tpu.memory_space<vmem>>, vector<16x256xbf16>,
    %c0_156 = arith.constant 0 : index
    %c1_157 = arith.constant 1 : index
    %142 = vector.load %arg31[%c0_156, %c1_157] : memref<16x290xbf16, #tpu.memory_space<vmem>>, vector<16x256xbf16>
    %c16_158 = arith.constant 16 : index
    %c0_159 = arith.constant 0 : index
    %143 = vector.load %arg34[%c16_158, %c0_159] : memref<576x256xbf16, #tpu.memory_space<vmem>>, vector<16x256xbf16>
    tpu.vector_store %arg34[%c16_158, %c0_159], %142 {strides = array<i32>} : memref<576x256xbf16, #tpu.memory_space<vmem>>, vector<16x256xbf16>,
    %c0_160 = arith.constant 0 : index
    %c2_161 = arith.constant 2 : index
    %144 = vector.load %arg31[%c0_160, %c2_161] : memref<16x290xbf16, #tpu.memory_space<vmem>>, vector<16x256xbf16>
    %145 = vector.broadcast %137 : vector<1x256xbf16> to vector<16x256xbf16>
    %146 = arith.mulf %144, %145 : vector<16x256xbf16>
    %c32_162 = arith.constant 32 : index
    %c0_163 = arith.constant 0 : index
    %147 = vector.load %arg34[%c32_162, %c0_163] : memref<576x256xbf16, #tpu.memory_space<vmem>>, vector<16x256xbf16>
    tpu.vector_store %arg34[%c32_162, %c0_163], %146 {strides = array<i32>} : memref<576x256xbf16, #tpu.memory_space<vmem>>, vector<16x256xbf16>,
    %c0_164 = arith.constant 0 : index
    %c16_165 = arith.constant 16 : index
    %148 = vector.load %arg31[%c0_164, %c16_165] : memref<16x290xbf16, #tpu.memory_space<vmem>>, vector<16x256xbf16>
    %149 = vector.broadcast %136 : vector<1x256xbf16> to vector<16x256xbf16>
    %150 = arith.mulf %148, %149 : vector<16x256xbf16>
    %c48_166 = arith.constant 48 : index
    %c0_167 = arith.constant 0 : index
    %151 = vector.load %arg34[%c48_166, %c0_167] : memref<576x256xbf16, #tpu.memory_space<vmem>>, vector<16x256xbf16>
    tpu.vector_store %arg34[%c48_166, %c0_167], %150 {strides = array<i32>} : memref<576x256xbf16, #tpu.memory_space<vmem>>, vector<16x256xbf16>,
    %c0_168 = arith.constant 0 : index
    %c17_169 = arith.constant 17 : index
    %152 = vector.load %arg31[%c0_168, %c17_169] : memref<16x290xbf16, #tpu.memory_space<vmem>>, vector<16x256xbf16>
    %c64_170 = arith.constant 64 : index
    %c0_171 = arith.constant 0 : index
    %153 = vector.load %arg34[%c64_170, %c0_171] : memref<576x256xbf16, #tpu.memory_space<vmem>>, vector<16x256xbf16>
    tpu.vector_store %arg34[%c64_170, %c0_171], %152 {strides = array<i32>} : memref<576x256xbf16, #tpu.memory_space<vmem>>, vector<16x256xbf16>,
    %c0_172 = arith.constant 0 : index
    %c18_173 = arith.constant 18 : index
    %154 = vector.load %arg31[%c0_172, %c18_173] : memref<16x290xbf16, #tpu.memory_space<vmem>>, vector<16x256xbf16>
    %155 = vector.broadcast %137 : vector<1x256xbf16> to vector<16x256xbf16>
    %156 = arith.mulf %154, %155 : vector<16x256xbf16>
    %c80_174 = arith.constant 80 : index
    %c0_175 = arith.constant 0 : index
    %157 = vector.load %arg34[%c80_174, %c0_175] : memref<576x256xbf16, #tpu.memory_space<vmem>>, vector<16x256xbf16>
    tpu.vector_store %arg34[%c80_174, %c0_175], %156 {strides = array<i32>} : memref<576x256xbf16, #tpu.memory_space<vmem>>, vector<16x256xbf16>,
    %c0_176 = arith.constant 0 : index
    %c32_177 = arith.constant 32 : index
    %158 = vector.load %arg31[%c0_176, %c32_177] : memref<16x290xbf16, #tpu.memory_space<vmem>>, vector<16x256xbf16>
    %159 = vector.broadcast %136 : vector<1x256xbf16> to vector<16x256xbf16>
    %160 = arith.mulf %158, %159 : vector<16x256xbf16>
    %c96_178 = arith.constant 96 : index
    %c0_179 = arith.constant 0 : index
    %161 = vector.load %arg34[%c96_178, %c0_179] : memref<576x256xbf16, #tpu.memory_space<vmem>>, vector<16x256xbf16>
    tpu.vector_store %arg34[%c96_178, %c0_179], %160 {strides = array<i32>} : memref<576x256xbf16, #tpu.memory_space<vmem>>, vector<16x256xbf16>,
    %c0_180 = arith.constant 0 : index
    %c33_181 = arith.constant 33 : index
    %162 = vector.load %arg31[%c0_180, %c33_181] : memref<16x290xbf16, #tpu.memory_space<vmem>>, vector<16x256xbf16>
    %c112_182 = arith.constant 112 : index
    %c0_183 = arith.constant 0 : index
    %163 = vector.load %arg34[%c112_182, %c0_183] : memref<576x256xbf16, #tpu.memory_space<vmem>>, vector<16x256xbf16>
    tpu.vector_store %arg34[%c112_182, %c0_183], %162 {strides = array<i32>} : memref<576x256xbf16, #tpu.memory_space<vmem>>, vector<16x256xbf16>,
    %c0_184 = arith.constant 0 : index
    %c34_185 = arith.constant 34 : index
    %164 = vector.load %arg31[%c0_184, %c34_185] : memref<16x290xbf16, #tpu.memory_space<vmem>>, vector<16x256xbf16>
    %165 = vector.broadcast %137 : vector<1x256xbf16> to vector<16x256xbf16>
    %166 = arith.mulf %164, %165 : vector<16x256xbf16>
    %c128_186 = arith.constant 128 : index
    %c0_187 = arith.constant 0 : index
    %167 = vector.load %arg34[%c128_186, %c0_187] : memref<576x256xbf16, #tpu.memory_space<vmem>>, vector<16x256xbf16>
    tpu.vector_store %arg34[%c128_186, %c0_187], %166 {strides = array<i32>} : memref<576x256xbf16, #tpu.memory_space<vmem>>, vector<16x256xbf16>,
    %c0_188 = arith.constant 0 : index
    %c0_189 = arith.constant 0 : index
    %168 = vector.load %arg16[%c0_188, %c0_189] : memref<32x144xbf16, #tpu.memory_space<vmem>>, vector<32x144xbf16>
    %c0_190 = arith.constant 0 : index
    %c0_191 = arith.constant 0 : index
    %169 = vector.load %arg34[%c0_190, %c0_191] : memref<576x256xbf16, #tpu.memory_space<vmem>>, vector<144x256xbf16>
    %cst_192 = arith.constant dense<0.000000e+00> : vector<32x256xf32>
    %170 = tpu.matmul %168, %169, %cst_192 {dimension_numbers = #tpu.dot_dimension_numbers<[1], [0], [0], [1], [0, 0, 1, 1], [], []>} : vector<32x144xbf16>, vector<144x256xbf16>, vector<32x256xf32> -> vector<32x256xf32>
    %c0_193 = arith.constant 0 : index
    %c0_194 = arith.constant 0 : index
    %171 = vector.load %arg17[%c0_193, %c0_194] : memref<32x1xf32, #tpu.memory_space<vmem>>, vector<32x1xf32>
    %172 = vector.broadcast %171 : vector<32x1xf32> to vector<32x256xf32>
    %173 = arith.addf %170, %172 : vector<32x256xf32>
    %cst_195 = arith.constant 0.000000e+00 : f32
    %174 = vector.broadcast %cst_195 : f32 to vector<32x256xf32>
    %175 = arith.maximumf %173, %174 : vector<32x256xf32>
    %176 = arith.truncf %175 : vector<32x256xf32> to vector<32x256xbf16>
    %c0_196 = arith.constant 0 : index
    %c0_197 = arith.constant 0 : index
    %177 = vector.load %arg8[%c0_196, %c0_197] : memref<256x64xbf16, #tpu.memory_space<vmem>>, vector<256x64xbf16>
    %cst_198 = arith.constant dense<0.000000e+00> : vector<32x64xf32>
    %178 = tpu.matmul %176, %177, %cst_198 {dimension_numbers = #tpu.dot_dimension_numbers<[1], [0], [0], [1], [0, 0, 1, 1], [], []>} : vector<32x256xbf16>, vector<256x64xbf16>, vector<32x64xf32> -> vector<32x64xf32>
    %179 = arith.truncf %178 : vector<32x64xf32> to vector<32x64xbf16>
    %c0_199 = arith.constant 0 : index
    %c9 = arith.constant 9 : index
    %180 = vector.load %arg32[%c0_199, %c9] : memref<32x82xbf16, #tpu.memory_space<vmem>>, vector<32x64xbf16>
    tpu.vector_store %arg32[%c0_199, %c9], %179 {strides = array<i32>} : memref<32x82xbf16, #tpu.memory_space<vmem>>, vector<32x64xbf16>,
    %c0_200 = arith.constant 0 : index
    %c0_201 = arith.constant 0 : index
    %181 = vector.load %arg4[%c0_200, %c0_201] : memref<1x64xbf16, #tpu.memory_space<vmem>>, vector<1x64xbf16>
    %c0_202 = arith.constant 0 : index
    %c0_203 = arith.constant 0 : index
    %182 = vector.load %arg5[%c0_202, %c0_203] : memref<1x64xbf16, #tpu.memory_space<vmem>>, vector<1x64xbf16>
    %c0_204 = arith.constant 0 : index
    %c0_205 = arith.constant 0 : index
    %183 = vector.load %arg32[%c0_204, %c0_205] : memref<32x82xbf16, #tpu.memory_space<vmem>>, vector<32x64xbf16>
    %184 = vector.broadcast %181 : vector<1x64xbf16> to vector<32x64xbf16>
    %185 = arith.mulf %183, %184 : vector<32x64xbf16>
    %c0_206 = arith.constant 0 : index
    %c0_207 = arith.constant 0 : index
    %186 = vector.load %arg34[%c0_206, %c0_207] : memref<576x256xbf16, #tpu.memory_space<vmem>>, vector<32x64xbf16>
    tpu.vector_store %arg34[%c0_206, %c0_207], %185 {strides = array<i32>} : memref<576x256xbf16, #tpu.memory_space<vmem>>, vector<32x64xbf16>,
    %c0_208 = arith.constant 0 : index
    %c1_209 = arith.constant 1 : index
    %187 = vector.load %arg32[%c0_208, %c1_209] : memref<32x82xbf16, #tpu.memory_space<vmem>>, vector<32x64xbf16>
    %c32_210 = arith.constant 32 : index
    %c0_211 = arith.constant 0 : index
    %188 = vector.load %arg34[%c32_210, %c0_211] : memref<576x256xbf16, #tpu.memory_space<vmem>>, vector<32x64xbf16>
    tpu.vector_store %arg34[%c32_210, %c0_211], %187 {strides = array<i32>} : memref<576x256xbf16, #tpu.memory_space<vmem>>, vector<32x64xbf16>,
    %c0_212 = arith.constant 0 : index
    %c2_213 = arith.constant 2 : index
    %189 = vector.load %arg32[%c0_212, %c2_213] : memref<32x82xbf16, #tpu.memory_space<vmem>>, vector<32x64xbf16>
    %190 = vector.broadcast %182 : vector<1x64xbf16> to vector<32x64xbf16>
    %191 = arith.mulf %189, %190 : vector<32x64xbf16>
    %c64_214 = arith.constant 64 : index
    %c0_215 = arith.constant 0 : index
    %192 = vector.load %arg34[%c64_214, %c0_215] : memref<576x256xbf16, #tpu.memory_space<vmem>>, vector<32x64xbf16>
    tpu.vector_store %arg34[%c64_214, %c0_215], %191 {strides = array<i32>} : memref<576x256xbf16, #tpu.memory_space<vmem>>, vector<32x64xbf16>,
    %c0_216 = arith.constant 0 : index
    %c8 = arith.constant 8 : index
    %193 = vector.load %arg32[%c0_216, %c8] : memref<32x82xbf16, #tpu.memory_space<vmem>>, vector<32x64xbf16>
    %194 = vector.broadcast %181 : vector<1x64xbf16> to vector<32x64xbf16>
    %195 = arith.mulf %193, %194 : vector<32x64xbf16>
    %c96_217 = arith.constant 96 : index
    %c0_218 = arith.constant 0 : index
    %196 = vector.load %arg34[%c96_217, %c0_218] : memref<576x256xbf16, #tpu.memory_space<vmem>>, vector<32x64xbf16>
    tpu.vector_store %arg34[%c96_217, %c0_218], %195 {strides = array<i32>} : memref<576x256xbf16, #tpu.memory_space<vmem>>, vector<32x64xbf16>,
    %c0_219 = arith.constant 0 : index
    %c9_220 = arith.constant 9 : index
    %197 = vector.load %arg32[%c0_219, %c9_220] : memref<32x82xbf16, #tpu.memory_space<vmem>>, vector<32x64xbf16>
    %c128_221 = arith.constant 128 : index
    %c0_222 = arith.constant 0 : index
    %198 = vector.load %arg34[%c128_221, %c0_222] : memref<576x256xbf16, #tpu.memory_space<vmem>>, vector<32x64xbf16>
    tpu.vector_store %arg34[%c128_221, %c0_222], %197 {strides = array<i32>} : memref<576x256xbf16, #tpu.memory_space<vmem>>, vector<32x64xbf16>,
    %c0_223 = arith.constant 0 : index
    %c10 = arith.constant 10 : index
    %199 = vector.load %arg32[%c0_223, %c10] : memref<32x82xbf16, #tpu.memory_space<vmem>>, vector<32x64xbf16>
    %200 = vector.broadcast %182 : vector<1x64xbf16> to vector<32x64xbf16>
    %201 = arith.mulf %199, %200 : vector<32x64xbf16>
    %c160 = arith.constant 160 : index
    %c0_224 = arith.constant 0 : index
    %202 = vector.load %arg34[%c160, %c0_224] : memref<576x256xbf16, #tpu.memory_space<vmem>>, vector<32x64xbf16>
    tpu.vector_store %arg34[%c160, %c0_224], %201 {strides = array<i32>} : memref<576x256xbf16, #tpu.memory_space<vmem>>, vector<32x64xbf16>,
    %c0_225 = arith.constant 0 : index
    %c16_226 = arith.constant 16 : index
    %203 = vector.load %arg32[%c0_225, %c16_226] : memref<32x82xbf16, #tpu.memory_space<vmem>>, vector<32x64xbf16>
    %204 = vector.broadcast %181 : vector<1x64xbf16> to vector<32x64xbf16>
    %205 = arith.mulf %203, %204 : vector<32x64xbf16>
    %c192 = arith.constant 192 : index
    %c0_227 = arith.constant 0 : index
    %206 = vector.load %arg34[%c192, %c0_227] : memref<576x256xbf16, #tpu.memory_space<vmem>>, vector<32x64xbf16>
    tpu.vector_store %arg34[%c192, %c0_227], %205 {strides = array<i32>} : memref<576x256xbf16, #tpu.memory_space<vmem>>, vector<32x64xbf16>,
    %c0_228 = arith.constant 0 : index
    %c17_229 = arith.constant 17 : index
    %207 = vector.load %arg32[%c0_228, %c17_229] : memref<32x82xbf16, #tpu.memory_space<vmem>>, vector<32x64xbf16>
    %c224 = arith.constant 224 : index
    %c0_230 = arith.constant 0 : index
    %208 = vector.load %arg34[%c224, %c0_230] : memref<576x256xbf16, #tpu.memory_space<vmem>>, vector<32x64xbf16>
    tpu.vector_store %arg34[%c224, %c0_230], %207 {strides = array<i32>} : memref<576x256xbf16, #tpu.memory_space<vmem>>, vector<32x64xbf16>,
    %c0_231 = arith.constant 0 : index
    %c18_232 = arith.constant 18 : index
    %209 = vector.load %arg32[%c0_231, %c18_232] : memref<32x82xbf16, #tpu.memory_space<vmem>>, vector<32x64xbf16>
    %210 = vector.broadcast %182 : vector<1x64xbf16> to vector<32x64xbf16>
    %211 = arith.mulf %209, %210 : vector<32x64xbf16>
    %c256 = arith.constant 256 : index
    %c0_233 = arith.constant 0 : index
    %212 = vector.load %arg34[%c256, %c0_233] : memref<576x256xbf16, #tpu.memory_space<vmem>>, vector<32x64xbf16>
    tpu.vector_store %arg34[%c256, %c0_233], %211 {strides = array<i32>} : memref<576x256xbf16, #tpu.memory_space<vmem>>, vector<32x64xbf16>,
    %c0_234 = arith.constant 0 : index
    %c0_235 = arith.constant 0 : index
    %213 = vector.load %arg18[%c0_234, %c0_235] : memref<32x288xbf16, #tpu.memory_space<vmem>>, vector<32x288xbf16>
    %c0_236 = arith.constant 0 : index
    %c0_237 = arith.constant 0 : index
    %214 = vector.load %arg34[%c0_236, %c0_237] : memref<576x256xbf16, #tpu.memory_space<vmem>>, vector<288x64xbf16>
    %cst_238 = arith.constant dense<0.000000e+00> : vector<32x64xf32>
    %215 = tpu.matmul %213, %214, %cst_238 {dimension_numbers = #tpu.dot_dimension_numbers<[1], [0], [0], [1], [0, 0, 1, 1], [], []>} : vector<32x288xbf16>, vector<288x64xbf16>, vector<32x64xf32> -> vector<32x64xf32>
    %c0_239 = arith.constant 0 : index
    %c0_240 = arith.constant 0 : index
    %216 = vector.load %arg19[%c0_239, %c0_240] : memref<32x1xf32, #tpu.memory_space<vmem>>, vector<32x1xf32>
    %217 = vector.broadcast %216 : vector<32x1xf32> to vector<32x64xf32>
    %218 = arith.addf %215, %217 : vector<32x64xf32>
    %c0_241 = arith.constant 0 : index
    %c0_242 = arith.constant 0 : index
    %219 = vector.load %arg20[%c0_241, %c0_242] : memref<32x16xbf16, #tpu.memory_space<vmem>>, vector<32x16xbf16>
    %220 = arith.truncf %133 : vector<16x256xf32> to vector<16x256xbf16>
    %cst_243 = arith.constant dense<0.000000e+00> : vector<32x256xf32>
    %221 = tpu.matmul %219, %220, %cst_243 {dimension_numbers = #tpu.dot_dimension_numbers<[1], [0], [0], [1], [0, 0, 1, 1], [], []>} : vector<32x16xbf16>, vector<16x256xbf16>, vector<32x256xf32> -> vector<32x256xf32>
    %c0_244 = arith.constant 0 : index
    %c0_245 = arith.constant 0 : index
    %222 = vector.load %arg21[%c0_244, %c0_245] : memref<32x1xf32, #tpu.memory_space<vmem>>, vector<32x1xf32>
    %223 = vector.broadcast %222 : vector<32x1xf32> to vector<32x256xf32>
    %224 = arith.addf %221, %223 : vector<32x256xf32>
    %225 = arith.truncf %224 : vector<32x256xf32> to vector<32x256xbf16>
    %c0_246 = arith.constant 0 : index
    %c0_247 = arith.constant 0 : index
    %226 = vector.load %arg8[%c0_246, %c0_247] : memref<256x64xbf16, #tpu.memory_space<vmem>>, vector<256x64xbf16>
    %cst_248 = arith.constant dense<0.000000e+00> : vector<32x64xf32>
    %227 = tpu.matmul %225, %226, %cst_248 {dimension_numbers = #tpu.dot_dimension_numbers<[1], [0], [0], [1], [0, 0, 1, 1], [], []>} : vector<32x256xbf16>, vector<256x64xbf16>, vector<32x64xf32> -> vector<32x64xf32>
    %228 = arith.addf %218, %227 : vector<32x64xf32>
    %cst_249 = arith.constant 0.000000e+00 : f32
    %229 = vector.broadcast %cst_249 : f32 to vector<32x64xf32>
    %230 = arith.maximumf %228, %229 : vector<32x64xf32>
    %231 = arith.truncf %230 : vector<32x64xf32> to vector<32x64xbf16>
    %c0_250 = arith.constant 0 : index
    %c9_251 = arith.constant 9 : index
    %232 = vector.load %arg32[%c0_250, %c9_251] : memref<32x82xbf16, #tpu.memory_space<vmem>>, vector<32x64xbf16>
    tpu.vector_store %arg32[%c0_250, %c9_251], %231 {strides = array<i32>} : memref<32x82xbf16, #tpu.memory_space<vmem>>, vector<32x64xbf16>,
    %c0_252 = arith.constant 0 : index
    %c0_253 = arith.constant 0 : index
    %233 = vector.load %arg4[%c0_252, %c0_253] : memref<1x64xbf16, #tpu.memory_space<vmem>>, vector<1x64xbf16>
    %c0_254 = arith.constant 0 : index
    %c0_255 = arith.constant 0 : index
    %234 = vector.load %arg5[%c0_254, %c0_255] : memref<1x64xbf16, #tpu.memory_space<vmem>>, vector<1x64xbf16>
    %c0_256 = arith.constant 0 : index
    %c0_257 = arith.constant 0 : index
    %235 = vector.load %arg32[%c0_256, %c0_257] : memref<32x82xbf16, #tpu.memory_space<vmem>>, vector<32x64xbf16>
    %236 = vector.broadcast %233 : vector<1x64xbf16> to vector<32x64xbf16>
    %237 = arith.mulf %235, %236 : vector<32x64xbf16>
    %c0_258 = arith.constant 0 : index
    %c0_259 = arith.constant 0 : index
    %238 = vector.load %arg34[%c0_258, %c0_259] : memref<576x256xbf16, #tpu.memory_space<vmem>>, vector<32x64xbf16>
    tpu.vector_store %arg34[%c0_258, %c0_259], %237 {strides = array<i32>} : memref<576x256xbf16, #tpu.memory_space<vmem>>, vector<32x64xbf16>,
    %c0_260 = arith.constant 0 : index
    %c1_261 = arith.constant 1 : index
    %239 = vector.load %arg32[%c0_260, %c1_261] : memref<32x82xbf16, #tpu.memory_space<vmem>>, vector<32x64xbf16>
    %c32_262 = arith.constant 32 : index
    %c0_263 = arith.constant 0 : index
    %240 = vector.load %arg34[%c32_262, %c0_263] : memref<576x256xbf16, #tpu.memory_space<vmem>>, vector<32x64xbf16>
    tpu.vector_store %arg34[%c32_262, %c0_263], %239 {strides = array<i32>} : memref<576x256xbf16, #tpu.memory_space<vmem>>, vector<32x64xbf16>,
    %c0_264 = arith.constant 0 : index
    %c2_265 = arith.constant 2 : index
    %241 = vector.load %arg32[%c0_264, %c2_265] : memref<32x82xbf16, #tpu.memory_space<vmem>>, vector<32x64xbf16>
    %242 = vector.broadcast %234 : vector<1x64xbf16> to vector<32x64xbf16>
    %243 = arith.mulf %241, %242 : vector<32x64xbf16>
    %c64_266 = arith.constant 64 : index
    %c0_267 = arith.constant 0 : index
    %244 = vector.load %arg34[%c64_266, %c0_267] : memref<576x256xbf16, #tpu.memory_space<vmem>>, vector<32x64xbf16>
    tpu.vector_store %arg34[%c64_266, %c0_267], %243 {strides = array<i32>} : memref<576x256xbf16, #tpu.memory_space<vmem>>, vector<32x64xbf16>,
    %c0_268 = arith.constant 0 : index
    %c8_269 = arith.constant 8 : index
    %245 = vector.load %arg32[%c0_268, %c8_269] : memref<32x82xbf16, #tpu.memory_space<vmem>>, vector<32x64xbf16>
    %246 = vector.broadcast %233 : vector<1x64xbf16> to vector<32x64xbf16>
    %247 = arith.mulf %245, %246 : vector<32x64xbf16>
    %c96_270 = arith.constant 96 : index
    %c0_271 = arith.constant 0 : index
    %248 = vector.load %arg34[%c96_270, %c0_271] : memref<576x256xbf16, #tpu.memory_space<vmem>>, vector<32x64xbf16>
    tpu.vector_store %arg34[%c96_270, %c0_271], %247 {strides = array<i32>} : memref<576x256xbf16, #tpu.memory_space<vmem>>, vector<32x64xbf16>,
    %c0_272 = arith.constant 0 : index
    %c9_273 = arith.constant 9 : index
    %249 = vector.load %arg32[%c0_272, %c9_273] : memref<32x82xbf16, #tpu.memory_space<vmem>>, vector<32x64xbf16>
    %c128_274 = arith.constant 128 : index
    %c0_275 = arith.constant 0 : index
    %250 = vector.load %arg34[%c128_274, %c0_275] : memref<576x256xbf16, #tpu.memory_space<vmem>>, vector<32x64xbf16>
    tpu.vector_store %arg34[%c128_274, %c0_275], %249 {strides = array<i32>} : memref<576x256xbf16, #tpu.memory_space<vmem>>, vector<32x64xbf16>,
    %c0_276 = arith.constant 0 : index
    %c10_277 = arith.constant 10 : index
    %251 = vector.load %arg32[%c0_276, %c10_277] : memref<32x82xbf16, #tpu.memory_space<vmem>>, vector<32x64xbf16>
    %252 = vector.broadcast %234 : vector<1x64xbf16> to vector<32x64xbf16>
    %253 = arith.mulf %251, %252 : vector<32x64xbf16>
    %c160_278 = arith.constant 160 : index
    %c0_279 = arith.constant 0 : index
    %254 = vector.load %arg34[%c160_278, %c0_279] : memref<576x256xbf16, #tpu.memory_space<vmem>>, vector<32x64xbf16>
    tpu.vector_store %arg34[%c160_278, %c0_279], %253 {strides = array<i32>} : memref<576x256xbf16, #tpu.memory_space<vmem>>, vector<32x64xbf16>,
    %c0_280 = arith.constant 0 : index
    %c16_281 = arith.constant 16 : index
    %255 = vector.load %arg32[%c0_280, %c16_281] : memref<32x82xbf16, #tpu.memory_space<vmem>>, vector<32x64xbf16>
    %256 = vector.broadcast %233 : vector<1x64xbf16> to vector<32x64xbf16>
    %257 = arith.mulf %255, %256 : vector<32x64xbf16>
    %c192_282 = arith.constant 192 : index
    %c0_283 = arith.constant 0 : index
    %258 = vector.load %arg34[%c192_282, %c0_283] : memref<576x256xbf16, #tpu.memory_space<vmem>>, vector<32x64xbf16>
    tpu.vector_store %arg34[%c192_282, %c0_283], %257 {strides = array<i32>} : memref<576x256xbf16, #tpu.memory_space<vmem>>, vector<32x64xbf16>,
    %c0_284 = arith.constant 0 : index
    %c17_285 = arith.constant 17 : index
    %259 = vector.load %arg32[%c0_284, %c17_285] : memref<32x82xbf16, #tpu.memory_space<vmem>>, vector<32x64xbf16>
    %c224_286 = arith.constant 224 : index
    %c0_287 = arith.constant 0 : index
    %260 = vector.load %arg34[%c224_286, %c0_287] : memref<576x256xbf16, #tpu.memory_space<vmem>>, vector<32x64xbf16>
    tpu.vector_store %arg34[%c224_286, %c0_287], %259 {strides = array<i32>} : memref<576x256xbf16, #tpu.memory_space<vmem>>, vector<32x64xbf16>,
    %c0_288 = arith.constant 0 : index
    %c18_289 = arith.constant 18 : index
    %261 = vector.load %arg32[%c0_288, %c18_289] : memref<32x82xbf16, #tpu.memory_space<vmem>>, vector<32x64xbf16>
    %262 = vector.broadcast %234 : vector<1x64xbf16> to vector<32x64xbf16>
    %263 = arith.mulf %261, %262 : vector<32x64xbf16>
    %c256_290 = arith.constant 256 : index
    %c0_291 = arith.constant 0 : index
    %264 = vector.load %arg34[%c256_290, %c0_291] : memref<576x256xbf16, #tpu.memory_space<vmem>>, vector<32x64xbf16>
    tpu.vector_store %arg34[%c256_290, %c0_291], %263 {strides = array<i32>} : memref<576x256xbf16, #tpu.memory_space<vmem>>, vector<32x64xbf16>,
    %c0_292 = arith.constant 0 : index
    %c0_293 = arith.constant 0 : index
    %265 = vector.load %arg22[%c0_292, %c0_293] : memref<64x288xbf16, #tpu.memory_space<vmem>>, vector<64x288xbf16>
    %c0_294 = arith.constant 0 : index
    %c0_295 = arith.constant 0 : index
    %266 = vector.load %arg34[%c0_294, %c0_295] : memref<576x256xbf16, #tpu.memory_space<vmem>>, vector<288x64xbf16>
    %cst_296 = arith.constant dense<0.000000e+00> : vector<64x64xf32>
    %267 = tpu.matmul %265, %266, %cst_296 {dimension_numbers = #tpu.dot_dimension_numbers<[1], [0], [0], [1], [0, 0, 1, 1], [], []>} : vector<64x288xbf16>, vector<288x64xbf16>, vector<64x64xf32> -> vector<64x64xf32>
    %c0_297 = arith.constant 0 : index
    %c0_298 = arith.constant 0 : index
    %268 = vector.load %arg23[%c0_297, %c0_298] : memref<64x1xf32, #tpu.memory_space<vmem>>, vector<64x1xf32>
    %269 = vector.broadcast %268 : vector<64x1xf32> to vector<64x64xf32>
    %270 = arith.addf %267, %269 : vector<64x64xf32>
    %cst_299 = arith.constant 0.000000e+00 : f32
    %271 = vector.broadcast %cst_299 : f32 to vector<64x64xf32>
    %272 = arith.maximumf %270, %271 : vector<64x64xf32>
    %273 = arith.truncf %272 : vector<64x64xf32> to vector<64x64xbf16>
    %c0_300 = arith.constant 0 : index
    %c0_301 = arith.constant 0 : index
    %274 = vector.load %arg9[%c0_300, %c0_301] : memref<64x16xbf16, #tpu.memory_space<vmem>>, vector<64x16xbf16>
    %cst_302 = arith.constant dense<0.000000e+00> : vector<64x16xf32>
    %275 = tpu.matmul %273, %274, %cst_302 {dimension_numbers = #tpu.dot_dimension_numbers<[1], [0], [0], [1], [0, 0, 1, 1], [], []>} : vector<64x64xbf16>, vector<64x16xbf16>, vector<64x16xf32> -> vector<64x16xf32>
    %276 = arith.truncf %275 : vector<64x16xf32> to vector<64x16xbf16>
    %c0_303 = arith.constant 0 : index
    %c5 = arith.constant 5 : index
    %277 = vector.load %arg33[%c0_303, %c5] : memref<64x26xbf16, #tpu.memory_space<vmem>>, vector<64x16xbf16>
    tpu.vector_store %arg33[%c0_303, %c5], %276 {strides = array<i32>} : memref<64x26xbf16, #tpu.memory_space<vmem>>, vector<64x16xbf16>,
    %c0_304 = arith.constant 0 : index
    %c0_305 = arith.constant 0 : index
    %278 = vector.load %arg6[%c0_304, %c0_305] : memref<1x16xbf16, #tpu.memory_space<vmem>>, vector<1x16xbf16>
    %c0_306 = arith.constant 0 : index
    %c0_307 = arith.constant 0 : index
    %279 = vector.load %arg7[%c0_306, %c0_307] : memref<1x16xbf16, #tpu.memory_space<vmem>>, vector<1x16xbf16>
    %c0_308 = arith.constant 0 : index
    %c0_309 = arith.constant 0 : index
    %280 = vector.load %arg33[%c0_308, %c0_309] : memref<64x26xbf16, #tpu.memory_space<vmem>>, vector<64x16xbf16>
    %281 = vector.broadcast %278 : vector<1x16xbf16> to vector<64x16xbf16>
    %282 = arith.mulf %280, %281 : vector<64x16xbf16>
    %c0_310 = arith.constant 0 : index
    %c0_311 = arith.constant 0 : index
    %283 = vector.load %arg34[%c0_310, %c0_311] : memref<576x256xbf16, #tpu.memory_space<vmem>>, vector<64x16xbf16>
    tpu.vector_store %arg34[%c0_310, %c0_311], %282 {strides = array<i32>} : memref<576x256xbf16, #tpu.memory_space<vmem>>, vector<64x16xbf16>,
    %c0_312 = arith.constant 0 : index
    %c1_313 = arith.constant 1 : index
    %284 = vector.load %arg33[%c0_312, %c1_313] : memref<64x26xbf16, #tpu.memory_space<vmem>>, vector<64x16xbf16>
    %c64_314 = arith.constant 64 : index
    %c0_315 = arith.constant 0 : index
    %285 = vector.load %arg34[%c64_314, %c0_315] : memref<576x256xbf16, #tpu.memory_space<vmem>>, vector<64x16xbf16>
    tpu.vector_store %arg34[%c64_314, %c0_315], %284 {strides = array<i32>} : memref<576x256xbf16, #tpu.memory_space<vmem>>, vector<64x16xbf16>,
    %c0_316 = arith.constant 0 : index
    %c2_317 = arith.constant 2 : index
    %286 = vector.load %arg33[%c0_316, %c2_317] : memref<64x26xbf16, #tpu.memory_space<vmem>>, vector<64x16xbf16>
    %287 = vector.broadcast %279 : vector<1x16xbf16> to vector<64x16xbf16>
    %288 = arith.mulf %286, %287 : vector<64x16xbf16>
    %c128_318 = arith.constant 128 : index
    %c0_319 = arith.constant 0 : index
    %289 = vector.load %arg34[%c128_318, %c0_319] : memref<576x256xbf16, #tpu.memory_space<vmem>>, vector<64x16xbf16>
    tpu.vector_store %arg34[%c128_318, %c0_319], %288 {strides = array<i32>} : memref<576x256xbf16, #tpu.memory_space<vmem>>, vector<64x16xbf16>,
    %c0_320 = arith.constant 0 : index
    %c4 = arith.constant 4 : index
    %290 = vector.load %arg33[%c0_320, %c4] : memref<64x26xbf16, #tpu.memory_space<vmem>>, vector<64x16xbf16>
    %291 = vector.broadcast %278 : vector<1x16xbf16> to vector<64x16xbf16>
    %292 = arith.mulf %290, %291 : vector<64x16xbf16>
    %c192_321 = arith.constant 192 : index
    %c0_322 = arith.constant 0 : index
    %293 = vector.load %arg34[%c192_321, %c0_322] : memref<576x256xbf16, #tpu.memory_space<vmem>>, vector<64x16xbf16>
    tpu.vector_store %arg34[%c192_321, %c0_322], %292 {strides = array<i32>} : memref<576x256xbf16, #tpu.memory_space<vmem>>, vector<64x16xbf16>,
    %c0_323 = arith.constant 0 : index
    %c5_324 = arith.constant 5 : index
    %294 = vector.load %arg33[%c0_323, %c5_324] : memref<64x26xbf16, #tpu.memory_space<vmem>>, vector<64x16xbf16>
    %c256_325 = arith.constant 256 : index
    %c0_326 = arith.constant 0 : index
    %295 = vector.load %arg34[%c256_325, %c0_326] : memref<576x256xbf16, #tpu.memory_space<vmem>>, vector<64x16xbf16>
    tpu.vector_store %arg34[%c256_325, %c0_326], %294 {strides = array<i32>} : memref<576x256xbf16, #tpu.memory_space<vmem>>, vector<64x16xbf16>,
    %c0_327 = arith.constant 0 : index
    %c6 = arith.constant 6 : index
    %296 = vector.load %arg33[%c0_327, %c6] : memref<64x26xbf16, #tpu.memory_space<vmem>>, vector<64x16xbf16>
    %297 = vector.broadcast %279 : vector<1x16xbf16> to vector<64x16xbf16>
    %298 = arith.mulf %296, %297 : vector<64x16xbf16>
    %c320 = arith.constant 320 : index
    %c0_328 = arith.constant 0 : index
    %299 = vector.load %arg34[%c320, %c0_328] : memref<576x256xbf16, #tpu.memory_space<vmem>>, vector<64x16xbf16>
    tpu.vector_store %arg34[%c320, %c0_328], %298 {strides = array<i32>} : memref<576x256xbf16, #tpu.memory_space<vmem>>, vector<64x16xbf16>,
    %c0_329 = arith.constant 0 : index
    %c8_330 = arith.constant 8 : index
    %300 = vector.load %arg33[%c0_329, %c8_330] : memref<64x26xbf16, #tpu.memory_space<vmem>>, vector<64x16xbf16>
    %301 = vector.broadcast %278 : vector<1x16xbf16> to vector<64x16xbf16>
    %302 = arith.mulf %300, %301 : vector<64x16xbf16>
    %c384 = arith.constant 384 : index
    %c0_331 = arith.constant 0 : index
    %303 = vector.load %arg34[%c384, %c0_331] : memref<576x256xbf16, #tpu.memory_space<vmem>>, vector<64x16xbf16>
    tpu.vector_store %arg34[%c384, %c0_331], %302 {strides = array<i32>} : memref<576x256xbf16, #tpu.memory_space<vmem>>, vector<64x16xbf16>,
    %c0_332 = arith.constant 0 : index
    %c9_333 = arith.constant 9 : index
    %304 = vector.load %arg33[%c0_332, %c9_333] : memref<64x26xbf16, #tpu.memory_space<vmem>>, vector<64x16xbf16>
    %c448 = arith.constant 448 : index
    %c0_334 = arith.constant 0 : index
    %305 = vector.load %arg34[%c448, %c0_334] : memref<576x256xbf16, #tpu.memory_space<vmem>>, vector<64x16xbf16>
    tpu.vector_store %arg34[%c448, %c0_334], %304 {strides = array<i32>} : memref<576x256xbf16, #tpu.memory_space<vmem>>, vector<64x16xbf16>,
    %c0_335 = arith.constant 0 : index
    %c10_336 = arith.constant 10 : index
    %306 = vector.load %arg33[%c0_335, %c10_336] : memref<64x26xbf16, #tpu.memory_space<vmem>>, vector<64x16xbf16>
    %307 = vector.broadcast %279 : vector<1x16xbf16> to vector<64x16xbf16>
    %308 = arith.mulf %306, %307 : vector<64x16xbf16>
    %c512 = arith.constant 512 : index
    %c0_337 = arith.constant 0 : index
    %309 = vector.load %arg34[%c512, %c0_337] : memref<576x256xbf16, #tpu.memory_space<vmem>>, vector<64x16xbf16>
    tpu.vector_store %arg34[%c512, %c0_337], %308 {strides = array<i32>} : memref<576x256xbf16, #tpu.memory_space<vmem>>, vector<64x16xbf16>,
    %c0_338 = arith.constant 0 : index
    %c0_339 = arith.constant 0 : index
    %310 = vector.load %arg24[%c0_338, %c0_339] : memref<64x576xbf16, #tpu.memory_space<vmem>>, vector<64x576xbf16>
    %c0_340 = arith.constant 0 : index
    %c0_341 = arith.constant 0 : index
    %311 = vector.load %arg34[%c0_340, %c0_341] : memref<576x256xbf16, #tpu.memory_space<vmem>>, vector<576x16xbf16>
    %cst_342 = arith.constant dense<0.000000e+00> : vector<64x16xf32>
    %312 = tpu.matmul %310, %311, %cst_342 {dimension_numbers = #tpu.dot_dimension_numbers<[1], [0], [0], [1], [0, 0, 1, 1], [], []>} : vector<64x576xbf16>, vector<576x16xbf16>, vector<64x16xf32> -> vector<64x16xf32>
    %c0_343 = arith.constant 0 : index
    %c0_344 = arith.constant 0 : index
    %313 = vector.load %arg25[%c0_343, %c0_344] : memref<64x1xf32, #tpu.memory_space<vmem>>, vector<64x1xf32>
    %314 = vector.broadcast %313 : vector<64x1xf32> to vector<64x16xf32>
    %315 = arith.addf %312, %314 : vector<64x16xf32>
    %c0_345 = arith.constant 0 : index
    %c0_346 = arith.constant 0 : index
    %316 = vector.load %arg26[%c0_345, %c0_346] : memref<64x32xbf16, #tpu.memory_space<vmem>>, vector<64x32xbf16>
    %317 = arith.truncf %230 : vector<32x64xf32> to vector<32x64xbf16>
    %cst_347 = arith.constant dense<0.000000e+00> : vector<64x64xf32>
    %318 = tpu.matmul %316, %317, %cst_347 {dimension_numbers = #tpu.dot_dimension_numbers<[1], [0], [0], [1], [0, 0, 1, 1], [], []>} : vector<64x32xbf16>, vector<32x64xbf16>, vector<64x64xf32> -> vector<64x64xf32>
    %c0_348 = arith.constant 0 : index
    %c0_349 = arith.constant 0 : index
    %319 = vector.load %arg27[%c0_348, %c0_349] : memref<64x1xf32, #tpu.memory_space<vmem>>, vector<64x1xf32>
    %320 = vector.broadcast %319 : vector<64x1xf32> to vector<64x64xf32>
    %321 = arith.addf %318, %320 : vector<64x64xf32>
    %322 = arith.truncf %321 : vector<64x64xf32> to vector<64x64xbf16>
    %c0_350 = arith.constant 0 : index
    %c0_351 = arith.constant 0 : index
    %323 = vector.load %arg9[%c0_350, %c0_351] : memref<64x16xbf16, #tpu.memory_space<vmem>>, vector<64x16xbf16>
    %cst_352 = arith.constant dense<0.000000e+00> : vector<64x16xf32>
    %324 = tpu.matmul %322, %323, %cst_352 {dimension_numbers = #tpu.dot_dimension_numbers<[1], [0], [0], [1], [0, 0, 1, 1], [], []>} : vector<64x64xbf16>, vector<64x16xbf16>, vector<64x16xf32> -> vector<64x16xf32>
    %325 = arith.addf %315, %324 : vector<64x16xf32>
    %cst_353 = arith.constant 0.000000e+00 : f32
    %326 = vector.broadcast %cst_353 : f32 to vector<64x16xf32>
    %327 = arith.maximumf %325, %326 : vector<64x16xf32>
    %c0_354 = arith.constant 0 : index
    %c0_355 = arith.constant 0 : index
    %328 = vector.load %arg28[%c0_354, %c0_355] : memref<2x64xbf16, #tpu.memory_space<vmem>>, vector<2x64xbf16>
    %329 = arith.truncf %327 : vector<64x16xf32> to vector<64x16xbf16>
    %cst_356 = arith.constant dense<0.000000e+00> : vector<2x16xf32>
    %330 = tpu.matmul %328, %329, %cst_356 {dimension_numbers = #tpu.dot_dimension_numbers<[1], [0], [0], [1], [0, 0, 1, 1], [], []>} : vector<2x64xbf16>, vector<64x16xbf16>, vector<2x16xf32> -> vector<2x16xf32>
    %cst_357 = arith.constant dense<0.000000e+00> : vector<2xf32>
    %331 = vector.multi_reduction <add>, %330, %cst_357 [1] : vector<2x16xf32> to vector<2xf32>
    %332 = vector.shape_cast %331 : vector<2xf32> to vector<2x1xf32>
    %cst_358 = arith.constant 6.250000e-02 : f32
    %333 = vector.broadcast %cst_358 : f32 to vector<2x1xf32>
    %334 = arith.mulf %332, %333 : vector<2x1xf32>
    %c0_359 = arith.constant 0 : index
    %c0_360 = arith.constant 0 : index
    %335 = vector.load %arg29[%c0_359, %c0_360] : memref<2x1xf32, #tpu.memory_space<vmem>>, vector<2x1xf32>
    %336 = arith.addf %334, %335 : vector<2x1xf32>
    %c0_361 = arith.constant 0 : index
    %c0_362 = arith.constant 0 : index
    %c0_363 = arith.constant 0 : index
    %337 = vector.load %arg30[%c0_361, %c0_362, %c0_363] : memref<1x2x1xf32, #tpu.memory_space<vmem>>, vector<1x2x1xf32>
    %338 = vector.shape_cast %337 : vector<1x2x1xf32> to vector<2x1xf32>
    %339 = vector.shape_cast %336 : vector<2x1xf32> to vector<1x2x1xf32>
    tpu.vector_store %arg30[%c0_361, %c0_362, %c0_363], %339 {strides = array<i32>} : memref<1x2x1xf32, #tpu.memory_space<vmem>>, vector<1x2x1xf32>,
    return
  }
  func.func @transform_0(%arg0: i32) -> (i32, i32, i32) {
    %c0_i32 = arith.constant 0 : i32
    %c0_i32_0 = arith.constant 0 : i32
    %c0_i32_1 = arith.constant 0 : i32
    return %arg0, %c0_i32, %c0_i32_0 : i32, i32, i32
  }
  func.func @transform_1(%arg0: i32) -> (i32, i32) {
    %c0_i32 = arith.constant 0 : i32
    %c0_i32_0 = arith.constant 0 : i32
    %c0_i32_1 = arith.constant 0 : i32
    return %c0_i32, %c0_i32_0 : i32, i32
  }
  func.func @transform_2(%arg0: i32) -> (i32, i32) {
    %c0_i32 = arith.constant 0 : i32
    %c0_i32_0 = arith.constant 0 : i32
    %c0_i32_1 = arith.constant 0 : i32
    return %c0_i32, %c0_i32_0 : i32, i32
  }
  func.func @transform_3(%arg0: i32) -> (i32, i32) {
    %c0_i32 = arith.constant 0 : i32
    %c0_i32_0 = arith.constant 0 : i32
    %c0_i32_1 = arith.constant 0 : i32
    return %c0_i32, %c0_i32_0 : i32, i32
  }
  func.func @transform_4(%arg0: i32) -> (i32, i32) {
    %c0_i32 = arith.constant 0 : i32
    %c0_i32_0 = arith.constant 0 : i32
    %c0_i32_1 = arith.constant 0 : i32
    return %c0_i32, %c0_i32_0 : i32, i32
  }
  func.func @transform_5(%arg0: i32) -> (i32, i32) {
    %c0_i32 = arith.constant 0 : i32
    %c0_i32_0 = arith.constant 0 : i32
    %c0_i32_1 = arith.constant 0 : i32
    return %c0_i32, %c0_i32_0 : i32, i32
  }
  func.func @transform_6(%arg0: i32) -> (i32, i32) {
    %c0_i32 = arith.constant 0 : i32
    %c0_i32_0 = arith.constant 0 : i32
    %c0_i32_1 = arith.constant 0 : i32
    return %c0_i32, %c0_i32_0 : i32, i32
  }
  func.func @transform_7(%arg0: i32) -> (i32, i32) {
    %c0_i32 = arith.constant 0 : i32
    %c0_i32_0 = arith.constant 0 : i32
    %c0_i32_1 = arith.constant 0 : i32
    return %c0_i32, %c0_i32_0 : i32, i32
  }
  func.func @transform_8(%arg0: i32) -> (i32, i32) {
    %c0_i32 = arith.constant 0 : i32
    %c0_i32_0 = arith.constant 0 : i32
    %c0_i32_1 = arith.constant 0 : i32
    return %c0_i32, %c0_i32_0 : i32, i32
  }
  func.func @transform_9(%arg0: i32) -> (i32, i32) {
    %c0_i32 = arith.constant 0 : i32
    %c0_i32_0 = arith.constant 0 : i32
    %c0_i32_1 = arith.constant 0 : i32
    return %c0_i32, %c0_i32_0 : i32, i32
  }
  func.func @transform_10(%arg0: i32) -> (i32, i32) {
    %c0_i32 = arith.constant 0 : i32
    %c0_i32_0 = arith.constant 0 : i32
    %c0_i32_1 = arith.constant 0 : i32
    return %c0_i32, %c0_i32_0 : i32, i32
  }
  func.func @transform_11(%arg0: i32) -> (i32, i32) {
    %c0_i32 = arith.constant 0 : i32
    %c0_i32_0 = arith.constant 0 : i32
    %c0_i32_1 = arith.constant 0 : i32
    return %c0_i32, %c0_i32_0 : i32, i32
  }
  func.func @transform_12(%arg0: i32) -> (i32, i32) {
    %c0_i32 = arith.constant 0 : i32
    %c0_i32_0 = arith.constant 0 : i32
    %c0_i32_1 = arith.constant 0 : i32
    return %c0_i32, %c0_i32_0 : i32, i32
  }
  func.func @transform_13(%arg0: i32) -> (i32, i32) {
    %c0_i32 = arith.constant 0 : i32
    %c0_i32_0 = arith.constant 0 : i32
    %c0_i32_1 = arith.constant 0 : i32
    return %c0_i32, %c0_i32_0 : i32, i32
  }
  func.func @transform_14(%arg0: i32) -> (i32, i32) {
    %c0_i32 = arith.constant 0 : i32
    %c0_i32_0 = arith.constant 0 : i32
    %c0_i32_1 = arith.constant 0 : i32
    return %c0_i32, %c0_i32_0 : i32, i32
  }
  func.func @transform_15(%arg0: i32) -> (i32, i32) {
    %c0_i32 = arith.constant 0 : i32
    %c0_i32_0 = arith.constant 0 : i32
    %c0_i32_1 = arith.constant 0 : i32
    return %c0_i32, %c0_i32_0 : i32, i32
  }
  func.func @transform_16(%arg0: i32) -> (i32, i32) {
    %c0_i32 = arith.constant 0 : i32
    %c0_i32_0 = arith.constant 0 : i32
    %c0_i32_1 = arith.constant 0 : i32
    return %c0_i32, %c0_i32_0 : i32, i32
  }
  func.func @transform_17(%arg0: i32) -> (i32, i32) {
    %c0_i32 = arith.constant 0 : i32
    %c0_i32_0 = arith.constant 0 : i32
    %c0_i32_1 = arith.constant 0 : i32
    return %c0_i32, %c0_i32_0 : i32, i32
  }
  func.func @transform_18(%arg0: i32) -> (i32, i32) {
    %c0_i32 = arith.constant 0 : i32
    %c0_i32_0 = arith.constant 0 : i32
    %c0_i32_1 = arith.constant 0 : i32
    return %c0_i32, %c0_i32_0 : i32, i32
  }
  func.func @transform_19(%arg0: i32) -> (i32, i32) {
    %c0_i32 = arith.constant 0 : i32
    %c0_i32_0 = arith.constant 0 : i32
    %c0_i32_1 = arith.constant 0 : i32
    return %c0_i32, %c0_i32_0 : i32, i32
  }
  func.func @transform_20(%arg0: i32) -> (i32, i32) {
    %c0_i32 = arith.constant 0 : i32
    %c0_i32_0 = arith.constant 0 : i32
    %c0_i32_1 = arith.constant 0 : i32
    return %c0_i32, %c0_i32_0 : i32, i32
  }
  func.func @transform_21(%arg0: i32) -> (i32, i32) {
    %c0_i32 = arith.constant 0 : i32
    %c0_i32_0 = arith.constant 0 : i32
    %c0_i32_1 = arith.constant 0 : i32
    return %c0_i32, %c0_i32_0 : i32, i32
  }
  func.func @transform_22(%arg0: i32) -> (i32, i32) {
    %c0_i32 = arith.constant 0 : i32
    %c0_i32_0 = arith.constant 0 : i32
    %c0_i32_1 = arith.constant 0 : i32
    return %c0_i32, %c0_i32_0 : i32, i32
  }
  func.func @transform_23(%arg0: i32) -> (i32, i32) {
    %c0_i32 = arith.constant 0 : i32
    %c0_i32_0 = arith.constant 0 : i32
    %c0_i32_1 = arith.constant 0 : i32
    return %c0_i32, %c0_i32_0 : i32, i32
  }
  func.func @transform_24(%arg0: i32) -> (i32, i32) {
    %c0_i32 = arith.constant 0 : i32
    %c0_i32_0 = arith.constant 0 : i32
    %c0_i32_1 = arith.constant 0 : i32
    return %c0_i32, %c0_i32_0 : i32, i32
  }
  func.func @transform_25(%arg0: i32) -> (i32, i32) {
    %c0_i32 = arith.constant 0 : i32
    %c0_i32_0 = arith.constant 0 : i32
    %c0_i32_1 = arith.constant 0 : i32
    return %c0_i32, %c0_i32_0 : i32, i32
  }
  func.func @transform_26(%arg0: i32) -> (i32, i32) {
    %c0_i32 = arith.constant 0 : i32
    %c0_i32_0 = arith.constant 0 : i32
    %c0_i32_1 = arith.constant 0 : i32
    return %c0_i32, %c0_i32_0 : i32, i32
  }
  func.func @transform_27(%arg0: i32) -> (i32, i32) {
    %c0_i32 = arith.constant 0 : i32
    %c0_i32_0 = arith.constant 0 : i32
    %c0_i32_1 = arith.constant 0 : i32
    return %c0_i32, %c0_i32_0 : i32, i32
  }
  func.func @transform_28(%arg0: i32) -> (i32, i32) {
    %c0_i32 = arith.constant 0 : i32
    %c0_i32_0 = arith.constant 0 : i32
    %c0_i32_1 = arith.constant 0 : i32
    return %c0_i32, %c0_i32_0 : i32, i32
  }
  func.func @transform_29(%arg0: i32) -> (i32, i32, i32) {
    %c0_i32 = arith.constant 0 : i32
    %c0_i32_0 = arith.constant 0 : i32
    %c0_i32_1 = arith.constant 0 : i32
    return %arg0, %c0_i32, %c0_i32_0 : i32, i32, i32
  }
}

</mosaic_0001>

<llo_original>
// kernel: router_forward.1
$region0: #{router_forward.1}
  #allocation0 [shape = 'u32[]', space=smem, size = 0x4, offset = 0x4, fixed_abs, tag = 'smem constant byte address 0x4 - core index']
  #allocation1 [shape = 'u32[144,128]{1,0:T(1,128)}', space=vmem, size = 0x12000, scoped, tag = 'internal scratch']
  #allocation2 [shape = 'bf16[16,290]{1,0:T(16,128)(2,1)}', space=vmem, size = 0x3000, scoped, tag = 'scratch operand']
  #allocation3 [shape = 'bf16[32,82]{1,0:T(16,128)(2,1)}', space=vmem, size = 0x2000, scoped, tag = 'scratch operand']
  #allocation4 [shape = 'bf16[64,26]{1,0:T(16,128)(2,1)}', space=vmem, size = 0x4000, scoped, tag = 'scratch operand']
  #allocation5 [shape = 'bf16[576,256]{1,0:T(16,128)(2,1)}', space=vmem, size = 0x48000, scoped, tag = 'scratch operand']
  %s0 = inlined_call_operand.smem [shape: u32[30], index: -1, kind: input, shape index: {}]
  %s1 = sld [smem:[%s0]]
  %s2 = scalar_lea.smem %s0, 1
  %s3 = sld [smem:[%s2]]
  %s4 = scalar_lea.smem %s0, 2
  %s5 = sld [smem:[%s4]]
  %s6 = scalar_lea.smem %s0, 3
  %s7 = sld [smem:[%s6]]
  %s8 = scalar_lea.smem %s0, 4
  %s9 = sld [smem:[%s8]]
  %s10 = scalar_lea.smem %s0, 5
  %s11 = sld [smem:[%s10]]
  %s12 = scalar_lea.smem %s0, 6
  %s13 = sld [smem:[%s12]]
  %s14 = scalar_lea.smem %s0, 7
  %s15 = sld [smem:[%s14]]
  %s16 = scalar_lea.smem %s0, 8
  %s17 = sld [smem:[%s16]]
  %s18 = scalar_lea.smem %s0, 9
  %s19 = sld [smem:[%s18]]
  %s20 = scalar_lea.smem %s0, 10
  %s21 = sld [smem:[%s20]]
  %s22 = scalar_lea.smem %s0, 11
  %s23 = sld [smem:[%s22]]
  %s24 = scalar_lea.smem %s0, 12
  %s25 = sld [smem:[%s24]]
  %s26 = scalar_lea.smem %s0, 13
  %s27 = sld [smem:[%s26]]
  %s28 = scalar_lea.smem %s0, 14
  %s29 = sld [smem:[%s28]]
  %s30 = scalar_lea.smem %s0, 15
  %s31 = sld [smem:[%s30]]
  %s32 = scalar_lea.smem %s0, 16
  %s33 = sld [smem:[%s32]]
  %s34 = scalar_lea.smem %s0, 17
  %s35 = sld [smem:[%s34]]
  %s36 = scalar_lea.smem %s0, 18
  %s37 = sld [smem:[%s36]]
  %s38 = scalar_lea.smem %s0, 19
  %s39 = sld [smem:[%s38]]
  %s40 = scalar_lea.smem %s0, 20
  %s41 = sld [smem:[%s40]]
  %s42 = scalar_lea.smem %s0, 21
  %s43 = sld [smem:[%s42]]
  %s44 = scalar_lea.smem %s0, 22
  %s45 = sld [smem:[%s44]]
  %s46 = scalar_lea.smem %s0, 23
  %s47 = sld [smem:[%s46]]
  %s48 = scalar_lea.smem %s0, 24
  %s49 = sld [smem:[%s48]]
  %s50 = scalar_lea.smem %s0, 25
  %s51 = sld [smem:[%s50]]
  %s52 = scalar_lea.smem %s0, 26
  %s53 = sld [smem:[%s52]]
  %s54 = scalar_lea.smem %s0, 27
  %s55 = sld [smem:[%s54]]
  %s56 = scalar_lea.smem %s0, 28
  %s57 = sld [smem:[%s56]]
  %s58 = scalar_lea.smem %s0, 29
  %s59 = sld [smem:[%s58]]
  %s60 = sld [smem:[#allocation0]]
  $region149: #{router_forward.1} parent=0
    _
  %s62 = ssub.s32 1, %s60
  %s63 = scalar_select 0, %s62, %s60
  loop: start=0, step=1, limit=4
  $region2: #{router_forward.1} parent=0 // loop_pre_header
    _
  $region3: #{router_forward.1} parent=0 // loop_header
    %s65 = sphi 0, %s69
    %p66 = scmp.ge.s32.totalorder %s65, 4
    %s75 = sphi 0, %s77
    %s78 = sphi 0, %s75
    %s79 = sphi 0, %s78
    %s95 = sphi 0, %s79
    %s99 = sphi 0, %s99
    %s101 = sphi 0, %s99
    %s102 = sphi 0, %s101
    %s116 = sphi 0, %s102
    %s120 = sphi 0, %s120
    %s122 = sphi 0, %s120
    %s123 = sphi 0, %s122
    %s137 = sphi 0, %s123
    %s141 = sphi 0, %s141
    %s143 = sphi 0, %s141
    %s144 = sphi 0, %s143
    %s158 = sphi 0, %s144
    %s162 = sphi 0, %s162
    %s164 = sphi 0, %s162
    %s165 = sphi 0, %s164
    %s179 = sphi 0, %s165
    %s183 = sphi 0, %s183
    %s185 = sphi 0, %s183
    %s186 = sphi 0, %s185
    %s200 = sphi 0, %s186
    %s204 = sphi 0, %s204
    %s206 = sphi 0, %s204
    %s207 = sphi 0, %s206
    %s221 = sphi 0, %s207
    %s225 = sphi 0, %s225
    %s227 = sphi 0, %s225
    %s228 = sphi 0, %s227
    %s242 = sphi 0, %s228
    %s246 = sphi 0, %s246
    %s248 = sphi 0, %s246
    %s249 = sphi 0, %s248
    %s263 = sphi 0, %s249
    %s267 = sphi 0, %s267
    %s269 = sphi 0, %s267
    %s270 = sphi 0, %s269
    %s284 = sphi 0, %s270
    %s288 = sphi 0, %s288
    %s290 = sphi 0, %s288
    %s291 = sphi 0, %s290
    %s305 = sphi 0, %s291
    %s309 = sphi 0, %s309
    %s311 = sphi 0, %s309
    %s312 = sphi 0, %s311
    %s326 = sphi 0, %s312
    %s330 = sphi 0, %s330
    %s332 = sphi 0, %s330
    %s333 = sphi 0, %s332
    %s347 = sphi 0, %s333
    %s351 = sphi 0, %s351
    %s353 = sphi 0, %s351
    %s354 = sphi 0, %s353
    %s368 = sphi 0, %s354
    %s372 = sphi 0, %s372
    %s374 = sphi 0, %s372
    %s375 = sphi 0, %s374
    %s389 = sphi 0, %s375
    %s393 = sphi 0, %s393
    %s395 = sphi 0, %s393
    %s396 = sphi 0, %s395
    %s410 = sphi 0, %s396
    %s414 = sphi 0, %s414
    %s416 = sphi 0, %s414
    %s417 = sphi 0, %s416
    %s431 = sphi 0, %s417
    %s435 = sphi 0, %s435
    %s437 = sphi 0, %s435
    %s438 = sphi 0, %s437
    %s452 = sphi 0, %s438
    %s456 = sphi 0, %s456
    %s458 = sphi 0, %s456
    %s459 = sphi 0, %s458
    %s473 = sphi 0, %s459
    %s477 = sphi 0, %s477
    %s479 = sphi 0, %s477
    %s480 = sphi 0, %s479
    %s494 = sphi 0, %s480
    %s498 = sphi 0, %s498
    %s500 = sphi 0, %s498
    %s501 = sphi 0, %s500
    %s515 = sphi 0, %s501
    %s519 = sphi 0, %s519
    %s521 = sphi 0, %s519
    %s522 = sphi 0, %s521
    %s536 = sphi 0, %s522
    %s540 = sphi 0, %s540
    %s542 = sphi 0, %s540
    %s543 = sphi 0, %s542
    %s557 = sphi 0, %s543
    %s561 = sphi 0, %s561
    %s563 = sphi 0, %s561
    %s564 = sphi 0, %s563
    %s578 = sphi 0, %s564
    %s582 = sphi 0, %s582
    %s584 = sphi 0, %s582
    %s585 = sphi 0, %s584
    %s599 = sphi 0, %s585
    %s603 = sphi 0, %s603
    %s605 = sphi 0, %s603
    %s606 = sphi 0, %s605
    %s620 = sphi 0, %s606
    %s624 = sphi 0, %s624
    %s626 = sphi 0, %s624
    %s627 = sphi 0, %s626
    %s641 = sphi 0, %s627
    %s645 = sphi 0, %s645
    %s647 = sphi 0, %s645
    %s648 = sphi 0, %s647
    %s662 = sphi 0, %s648
    %s666 = sphi 0, %s666
    %s668 = sphi 0, %s666
    %s669 = sphi 0, %s668
    %s683 = sphi 0, %s669
    %s689 = sphi 0, %s691
    %s692 = sphi 0, %s689
    %s693 = sphi 0, %s692
    %s709 = sphi 0, %s693
  $region4: #{router_forward.1} parent=0 // loop_header_branch
    %68 = sbr.rel (%p66) target = $region8
  $region5: #{router_forward.1} parent=0 // loop_body
    %s70 = ssub.s32 %s65, 1
    %s71 = ssub.s32 %s65, 2
    %s72 = sadd.s32 %s65, 1
    %s73 = ssub.s32 %s65, %s72
    %p74 = scmp.eq.s32.totalorder %s73, 0
    %s76 = sadd.s32 %s75, 1
    %s77 = scalar_select %p74, %s75, %s76
    %p80 = pneg %p74
    %p81 = scmp.eq.s32.totalorder %s65, 1
    %p82 = por %p80, %p81
    %p83 = scmp.ne.s32.totalorder %s75, %s78
    %p84 = scmp.eq.s32.totalorder %s65, 0
    %p85 = por %p83, %p84
    %p86 = scmp.ne.s32.totalorder %s75, %s78
    %p87 = scmp.eq.s32.totalorder %s70, 1
    %p88 = por %p86, %p87
    %p89 = scmp.ne.s32.totalorder %s78, %s79
    %p90 = scmp.eq.s32.totalorder %s70, 0
    %p91 = por %p89, %p90
    %p92 = scmp.ne.s32.totalorder %s78, %s79
    %p93 = scmp.eq.s32.totalorder %s71, 1
    %p94 = por %p92, %p93
    %p96 = scmp.ne.s32.totalorder %s79, %s95
    %p97 = scmp.eq.s32.totalorder %s71, 0
    %p98 = por %p96, %p97
    %s100 = sadd.s32 %s99, 1
    %p103 = scmp.eq.s32.totalorder %s65, 1
    %p104 = scmp.ne.s32.totalorder %s99, %s101
    %p105 = scmp.eq.s32.totalorder %s65, 0
    %p106 = por %p104, %p105
    %p107 = scmp.ne.s32.totalorder %s99, %s101
    %p108 = scmp.eq.s32.totalorder %s70, 1
    %p109 = por %p107, %p108
    %p110 = scmp.ne.s32.totalorder %s101, %s102
    %p111 = scmp.eq.s32.totalorder %s70, 0
    %p112 = por %p110, %p111
    %p113 = scmp.ne.s32.totalorder %s101, %s102
    %p114 = scmp.eq.s32.totalorder %s71, 1
    %p115 = por %p113, %p114
    %p117 = scmp.ne.s32.totalorder %s102, %s116
    %p118 = scmp.eq.s32.totalorder %s71, 0
    %p119 = por %p117, %p118
    %s121 = sadd.s32 %s120, 1
    %p124 = scmp.eq.s32.totalorder %s65, 1
    %p125 = scmp.ne.s32.totalorder %s120, %s122
    %p126 = scmp.eq.s32.totalorder %s65, 0
    %p127 = por %p125, %p126
    %p128 = scmp.ne.s32.totalorder %s120, %s122
    %p129 = scmp.eq.s32.totalorder %s70, 1
    %p130 = por %p128, %p129
    %p131 = scmp.ne.s32.totalorder %s122, %s123
    %p132 = scmp.eq.s32.totalorder %s70, 0
    %p133 = por %p131, %p132
    %p134 = scmp.ne.s32.totalorder %s122, %s123
    %p135 = scmp.eq.s32.totalorder %s71, 1
    %p136 = por %p134, %p135
    %p138 = scmp.ne.s32.totalorder %s123, %s137
    %p139 = scmp.eq.s32.totalorder %s71, 0
    %p140 = por %p138, %p139
    %s142 = sadd.s32 %s141, 1
    %p145 = scmp.eq.s32.totalorder %s65, 1
    %p146 = scmp.ne.s32.totalorder %s141, %s143
    %p147 = scmp.eq.s32.totalorder %s65, 0
    %p148 = por %p146, %p147
    %p149 = scmp.ne.s32.totalorder %s141, %s143
    %p150 = scmp.eq.s32.totalorder %s70, 1
    %p151 = por %p149, %p150
    %p152 = scmp.ne.s32.totalorder %s143, %s144
    %p153 = scmp.eq.s32.totalorder %s70, 0
    %p154 = por %p152, %p153
    %p155 = scmp.ne.s32.totalorder %s143, %s144
    %p156 = scmp.eq.s32.totalorder %s71, 1
    %p157 = por %p155, %p156
    %p159 = scmp.ne.s32.totalorder %s144, %s158
    %p160 = scmp.eq.s32.totalorder %s71, 0
    %p161 = por %p159, %p160
    %s163 = sadd.s32 %s162, 1
    %p166 = scmp.eq.s32.totalorder %s65, 1
    %p167 = scmp.ne.s32.totalorder %s162, %s164
    %p168 = scmp.eq.s32.totalorder %s65, 0
    %p169 = por %p167, %p168
    %p170 = scmp.ne.s32.totalorder %s162, %s164
    %p171 = scmp.eq.s32.totalorder %s70, 1
    %p172 = por %p170, %p171
    %p173 = scmp.ne.s32.totalorder %s164, %s165
    %p174 = scmp.eq.s32.totalorder %s70, 0
    %p175 = por %p173, %p174
    %p176 = scmp.ne.s32.totalorder %s164, %s165
    %p177 = scmp.eq.s32.totalorder %s71, 1
    %p178 = por %p176, %p177
    %p180 = scmp.ne.s32.totalorder %s165, %s179
    %p181 = scmp.eq.s32.totalorder %s71, 0
    %p182 = por %p180, %p181
    %s184 = sadd.s32 %s183, 1
    %p187 = scmp.eq.s32.totalorder %s65, 1
    %p188 = scmp.ne.s32.totalorder %s183, %s185
    %p189 = scmp.eq.s32.totalorder %s65, 0
    %p190 = por %p188, %p189
    %p191 = scmp.ne.s32.totalorder %s183, %s185
    %p192 = scmp.eq.s32.totalorder %s70, 1
    %p193 = por %p191, %p192
    %p194 = scmp.ne.s32.totalorder %s185, %s186
    %p195 = scmp.eq.s32.totalorder %s70, 0
    %p196 = por %p194, %p195
    %p197 = scmp.ne.s32.totalorder %s185, %s186
    %p198 = scmp.eq.s32.totalorder %s71, 1
    %p199 = por %p197, %p198
    %p201 = scmp.ne.s32.totalorder %s186, %s200
    %p202 = scmp.eq.s32.totalorder %s71, 0
    %p203 = por %p201, %p202
    %s205 = sadd.s32 %s204, 1
    %p208 = scmp.eq.s32.totalorder %s65, 1
    %p209 = scmp.ne.s32.totalorder %s204, %s206
    %p210 = scmp.eq.s32.totalorder %s65, 0
    %p211 = por %p209, %p210
    %p212 = scmp.ne.s32.totalorder %s204, %s206
    %p213 = scmp.eq.s32.totalorder %s70, 1
    %p214 = por %p212, %p213
    %p215 = scmp.ne.s32.totalorder %s206, %s207
    %p216 = scmp.eq.s32.totalorder %s70, 0
    %p217 = por %p215, %p216
    %p218 = scmp.ne.s32.totalorder %s206, %s207
    %p219 = scmp.eq.s32.totalorder %s71, 1
    %p220 = por %p218, %p219
    %p222 = scmp.ne.s32.totalorder %s207, %s221
    %p223 = scmp.eq.s32.totalorder %s71, 0
    %p224 = por %p222, %p223
    %s226 = sadd.s32 %s225, 1
    %p229 = scmp.eq.s32.totalorder %s65, 1
    %p230 = scmp.ne.s32.totalorder %s225, %s227
    %p231 = scmp.eq.s32.totalorder %s65, 0
    %p232 = por %p230, %p231
    %p233 = scmp.ne.s32.totalorder %s225, %s227
    %p234 = scmp.eq.s32.totalorder %s70, 1
    %p235 = por %p233, %p234
    %p236 = scmp.ne.s32.totalorder %s227, %s228
    %p237 = scmp.eq.s32.totalorder %s70, 0
    %p238 = por %p236, %p237
    %p239 = scmp.ne.s32.totalorder %s227, %s228
    %p240 = scmp.eq.s32.totalorder %s71, 1
    %p241 = por %p239, %p240
    %p243 = scmp.ne.s32.totalorder %s228, %s242
    %p244 = scmp.eq.s32.totalorder %s71, 0
    %p245 = por %p243, %p244
    %s247 = sadd.s32 %s246, 1
    %p250 = scmp.eq.s32.totalorder %s65, 1
    %p251 = scmp.ne.s32.totalorder %s246, %s248
    %p252 = scmp.eq.s32.totalorder %s65, 0
    %p253 = por %p251, %p252
    %p254 = scmp.ne.s32.totalorder %s246, %s248
    %p255 = scmp.eq.s32.totalorder %s70, 1
    %p256 = por %p254, %p255
    %p257 = scmp.ne.s32.totalorder %s248, %s249
    %p258 = scmp.eq.s32.totalorder %s70, 0
    %p259 = por %p257, %p258
    %p260 = scmp.ne.s32.totalorder %s248, %s249
    %p261 = scmp.eq.s32.totalorder %s71, 1
    %p262 = por %p260, %p261
    %p264 = scmp.ne.s32.totalorder %s249, %s263
    %p265 = scmp.eq.s32.totalorder %s71, 0
    %p266 = por %p264, %p265
    %s268 = sadd.s32 %s267, 1
    %p271 = scmp.eq.s32.totalorder %s65, 1
    %p272 = scmp.ne.s32.totalorder %s267, %s269
    %p273 = scmp.eq.s32.totalorder %s65, 0
    %p274 = por %p272, %p273
    %p275 = scmp.ne.s32.totalorder %s267, %s269
    %p276 = scmp.eq.s32.totalorder %s70, 1
    %p277 = por %p275, %p276
    %p278 = scmp.ne.s32.totalorder %s269, %s270
    %p279 = scmp.eq.s32.totalorder %s70, 0
    %p280 = por %p278, %p279
    %p281 = scmp.ne.s32.totalorder %s269, %s270
    %p282 = scmp.eq.s32.totalorder %s71, 1
    %p283 = por %p281, %p282
    %p285 = scmp.ne.s32.totalorder %s270, %s284
    %p286 = scmp.eq.s32.totalorder %s71, 0
    %p287 = por %p285, %p286
    %s289 = sadd.s32 %s288, 1
    %p292 = scmp.eq.s32.totalorder %s65, 1
    %p293 = scmp.ne.s32.totalorder %s288, %s290
    %p294 = scmp.eq.s32.totalorder %s65, 0
    %p295 = por %p293, %p294
    %p296 = scmp.ne.s32.totalorder %s288, %s290
    %p297 = scmp.eq.s32.totalorder %s70, 1
    %p298 = por %p296, %p297
    %p299 = scmp.ne.s32.totalorder %s290, %s291
    %p300 = scmp.eq.s32.totalorder %s70, 0
    %p301 = por %p299, %p300
    %p302 = scmp.ne.s32.totalorder %s290, %s291
    %p303 = scmp.eq.s32.totalorder %s71, 1
    %p304 = por %p302, %p303
    %p306 = scmp.ne.s32.totalorder %s291, %s305
    %p307 = scmp.eq.s32.totalorder %s71, 0
    %p308 = por %p306, %p307
    %s310 = sadd.s32 %s309, 1
    %p313 = scmp.eq.s32.totalorder %s65, 1
    %p314 = scmp.ne.s32.totalorder %s309, %s311
    %p315 = scmp.eq.s32.totalorder %s65, 0
    %p316 = por %p314, %p315
    %p317 = scmp.ne.s32.totalorder %s309, %s311
    %p318 = scmp.eq.s32.totalorder %s70, 1
    %p319 = por %p317, %p318
    %p320 = scmp.ne.s32.totalorder %s311, %s312
    %p321 = scmp.eq.s32.totalorder %s70, 0
    %p322 = por %p320, %p321
    %p323 = scmp.ne.s32.totalorder %s311, %s312
    %p324 = scmp.eq.s32.totalorder %s71, 1
    %p325 = por %p323, %p324
    %p327 = scmp.ne.s32.totalorder %s312, %s326
    %p328 = scmp.eq.s32.totalorder %s71, 0
    %p329 = por %p327, %p328
    %s331 = sadd.s32 %s330, 1
    %p334 = scmp.eq.s32.totalorder %s65, 1
    %p335 = scmp.ne.s32.totalorder %s330, %s332
    %p336 = scmp.eq.s32.totalorder %s65, 0
    %p337 = por %p335, %p336
    %p338 = scmp.ne.s32.totalorder %s330, %s332
    %p339 = scmp.eq.s32.totalorder %s70, 1
    %p340 = por %p338, %p339
    %p341 = scmp.ne.s32.totalorder %s332, %s333
    %p342 = scmp.eq.s32.totalorder %s70, 0
    %p343 = por %p341, %p342
    %p344 = scmp.ne.s32.totalorder %s332, %s333
    %p345 = scmp.eq.s32.totalorder %s71, 1
    %p346 = por %p344, %p345
    %p348 = scmp.ne.s32.totalorder %s333, %s347
    %p349 = scmp.eq.s32.totalorder %s71, 0
    %p350 = por %p348, %p349
    %s352 = sadd.s32 %s351, 1
    %p355 = scmp.eq.s32.totalorder %s65, 1
    %p356 = scmp.ne.s32.totalorder %s351, %s353
    %p357 = scmp.eq.s32.totalorder %s65, 0
    %p358 = por %p356, %p357
    %p359 = scmp.ne.s32.totalorder %s351, %s353
    %p360 = scmp.eq.s32.totalorder %s70, 1
    %p361 = por %p359, %p360
    %p362 = scmp.ne.s32.totalorder %s353, %s354
    %p363 = scmp.eq.s32.totalorder %s70, 0
    %p364 = por %p362, %p363
    %p365 = scmp.ne.s32.totalorder %s353, %s354
    %p366 = scmp.eq.s32.totalorder %s71, 1
    %p367 = por %p365, %p366
    %p369 = scmp.ne.s32.totalorder %s354, %s368
    %p370 = scmp.eq.s32.totalorder %s71, 0
    %p371 = por %p369, %p370
    %s373 = sadd.s32 %s372, 1
    %p376 = scmp.eq.s32.totalorder %s65, 1
    %p377 = scmp.ne.s32.totalorder %s372, %s374
    %p378 = scmp.eq.s32.totalorder %s65, 0
    %p379 = por %p377, %p378
    %p380 = scmp.ne.s32.totalorder %s372, %s374
    %p381 = scmp.eq.s32.totalorder %s70, 1
    %p382 = por %p380, %p381
    %p383 = scmp.ne.s32.totalorder %s374, %s375
    %p384 = scmp.eq.s32.totalorder %s70, 0
    %p385 = por %p383, %p384
    %p386 = scmp.ne.s32.totalorder %s374, %s375
    %p387 = scmp.eq.s32.totalorder %s71, 1
    %p388 = por %p386, %p387
    %p390 = scmp.ne.s32.totalorder %s375, %s389
    %p391 = scmp.eq.s32.totalorder %s71, 0
    %p392 = por %p390, %p391
    %s394 = sadd.s32 %s393, 1
    %p397 = scmp.eq.s32.totalorder %s65, 1
    %p398 = scmp.ne.s32.totalorder %s393, %s395
    %p399 = scmp.eq.s32.totalorder %s65, 0
    %p400 = por %p398, %p399
    %p401 = scmp.ne.s32.totalorder %s393, %s395
    %p402 = scmp.eq.s32.totalorder %s70, 1
    %p403 = por %p401, %p402
    %p404 = scmp.ne.s32.totalorder %s395, %s396
    %p405 = scmp.eq.s32.totalorder %s70, 0
    %p406 = por %p404, %p405
    %p407 = scmp.ne.s32.totalorder %s395, %s396
    %p408 = scmp.eq.s32.totalorder %s71, 1
    %p409 = por %p407, %p408
    %p411 = scmp.ne.s32.totalorder %s396, %s410
    %p412 = scmp.eq.s32.totalorder %s71, 0
    %p413 = por %p411, %p412
    %s415 = sadd.s32 %s414, 1
    %p418 = scmp.eq.s32.totalorder %s65, 1
    %p419 = scmp.ne.s32.totalorder %s414, %s416
    %p420 = scmp.eq.s32.totalorder %s65, 0
    %p421 = por %p419, %p420
    %p422 = scmp.ne.s32.totalorder %s414, %s416
    %p423 = scmp.eq.s32.totalorder %s70, 1
    %p424 = por %p422, %p423
    %p425 = scmp.ne.s32.totalorder %s416, %s417
    %p426 = scmp.eq.s32.totalorder %s70, 0
    %p427 = por %p425, %p426
    %p428 = scmp.ne.s32.totalorder %s416, %s417
    %p429 = scmp.eq.s32.totalorder %s71, 1
    %p430 = por %p428, %p429
    %p432 = scmp.ne.s32.totalorder %s417, %s431
    %p433 = scmp.eq.s32.totalorder %s71, 0
    %p434 = por %p432, %p433
    %s436 = sadd.s32 %s435, 1
    %p439 = scmp.eq.s32.totalorder %s65, 1
    %p440 = scmp.ne.s32.totalorder %s435, %s437
    %p441 = scmp.eq.s32.totalorder %s65, 0
    %p442 = por %p440, %p441
    %p443 = scmp.ne.s32.totalorder %s435, %s437
    %p444 = scmp.eq.s32.totalorder %s70, 1
    %p445 = por %p443, %p444
    %p446 = scmp.ne.s32.totalorder %s437, %s438
    %p447 = scmp.eq.s32.totalorder %s70, 0
    %p448 = por %p446, %p447
    %p449 = scmp.ne.s32.totalorder %s437, %s438
    %p450 = scmp.eq.s32.totalorder %s71, 1
    %p451 = por %p449, %p450
    %p453 = scmp.ne.s32.totalorder %s438, %s452
    %p454 = scmp.eq.s32.totalorder %s71, 0
    %p455 = por %p453, %p454
    %s457 = sadd.s32 %s456, 1
    %p460 = scmp.eq.s32.totalorder %s65, 1
    %p461 = scmp.ne.s32.totalorder %s456, %s458
    %p462 = scmp.eq.s32.totalorder %s65, 0
    %p463 = por %p461, %p462
    %p464 = scmp.ne.s32.totalorder %s456, %s458
    %p465 = scmp.eq.s32.totalorder %s70, 1
    %p466 = por %p464, %p465
    %p467 = scmp.ne.s32.totalorder %s458, %s459
    %p468 = scmp.eq.s32.totalorder %s70, 0
    %p469 = por %p467, %p468
    %p470 = scmp.ne.s32.totalorder %s458, %s459
    %p471 = scmp.eq.s32.totalorder %s71, 1
    %p472 = por %p470, %p471
    %p474 = scmp.ne.s32.totalorder %s459, %s473
    %p475 = scmp.eq.s32.totalorder %s71, 0
    %p476 = por %p474, %p475
    %s478 = sadd.s32 %s477, 1
    %p481 = scmp.eq.s32.totalorder %s65, 1
    %p482 = scmp.ne.s32.totalorder %s477, %s479
    %p483 = scmp.eq.s32.totalorder %s65, 0
    %p484 = por %p482, %p483
    %p485 = scmp.ne.s32.totalorder %s477, %s479
    %p486 = scmp.eq.s32.totalorder %s70, 1
    %p487 = por %p485, %p486
    %p488 = scmp.ne.s32.totalorder %s479, %s480
    %p489 = scmp.eq.s32.totalorder %s70, 0
    %p490 = por %p488, %p489
    %p491 = scmp.ne.s32.totalorder %s479, %s480
    %p492 = scmp.eq.s32.totalorder %s71, 1
    %p493 = por %p491, %p492
    %p495 = scmp.ne.s32.totalorder %s480, %s494
    %p496 = scmp.eq.s32.totalorder %s71, 0
    %p497 = por %p495, %p496
    %s499 = sadd.s32 %s498, 1
    %p502 = scmp.eq.s32.totalorder %s65, 1
    %p503 = scmp.ne.s32.totalorder %s498, %s500
    %p504 = scmp.eq.s32.totalorder %s65, 0
    %p505 = por %p503, %p504
    %p506 = scmp.ne.s32.totalorder %s498, %s500
    %p507 = scmp.eq.s32.totalorder %s70, 1
    %p508 = por %p506, %p507
    %p509 = scmp.ne.s32.totalorder %s500, %s501
    %p510 = scmp.eq.s32.totalorder %s70, 0
    %p511 = por %p509, %p510
    %p512 = scmp.ne.s32.totalorder %s500, %s501
    %p513 = scmp.eq.s32.totalorder %s71, 1
    %p514 = por %p512, %p513
    %p516 = scmp.ne.s32.totalorder %s501, %s515
    %p517 = scmp.eq.s32.totalorder %s71, 0
    %p518 = por %p516, %p517
    %s520 = sadd.s32 %s519, 1
    %p523 = scmp.eq.s32.totalorder %s65, 1
    %p524 = scmp.ne.s32.totalorder %s519, %s521
    %p525 = scmp.eq.s32.totalorder %s65, 0
    %p526 = por %p524, %p525
    %p527 = scmp.ne.s32.totalorder %s519, %s521
    %p528 = scmp.eq.s32.totalorder %s70, 1
    %p529 = por %p527, %p528
    %p530 = scmp.ne.s32.totalorder %s521, %s522
    %p531 = scmp.eq.s32.totalorder %s70, 0
    %p532 = por %p530, %p531
    %p533 = scmp.ne.s32.totalorder %s521, %s522
    %p534 = scmp.eq.s32.totalorder %s71, 1
    %p535 = por %p533, %p534
    %p537 = scmp.ne.s32.totalorder %s522, %s536
    %p538 = scmp.eq.s32.totalorder %s71, 0
    %p539 = por %p537, %p538
    %s541 = sadd.s32 %s540, 1
    %p544 = scmp.eq.s32.totalorder %s65, 1
    %p545 = scmp.ne.s32.totalorder %s540, %s542
    %p546 = scmp.eq.s32.totalorder %s65, 0
    %p547 = por %p545, %p546
    %p548 = scmp.ne.s32.totalorder %s540, %s542
    %p549 = scmp.eq.s32.totalorder %s70, 1
    %p550 = por %p548, %p549
    %p551 = scmp.ne.s32.totalorder %s542, %s543
    %p552 = scmp.eq.s32.totalorder %s70, 0
    %p553 = por %p551, %p552
    %p554 = scmp.ne.s32.totalorder %s542, %s543
    %p555 = scmp.eq.s32.totalorder %s71, 1
    %p556 = por %p554, %p555
    %p558 = scmp.ne.s32.totalorder %s543, %s557
    %p559 = scmp.eq.s32.totalorder %s71, 0
    %p560 = por %p558, %p559
    %s562 = sadd.s32 %s561, 1
    %p565 = scmp.eq.s32.totalorder %s65, 1
    %p566 = scmp.ne.s32.totalorder %s561, %s563
    %p567 = scmp.eq.s32.totalorder %s65, 0
    %p568 = por %p566, %p567
    %p569 = scmp.ne.s32.totalorder %s561, %s563
    %p570 = scmp.eq.s32.totalorder %s70, 1
    %p571 = por %p569, %p570
    %p572 = scmp.ne.s32.totalorder %s563, %s564
    %p573 = scmp.eq.s32.totalorder %s70, 0
    %p574 = por %p572, %p573
    %p575 = scmp.ne.s32.totalorder %s563, %s564
    %p576 = scmp.eq.s32.totalorder %s71, 1
    %p577 = por %p575, %p576
    %p579 = scmp.ne.s32.totalorder %s564, %s578
    %p580 = scmp.eq.s32.totalorder %s71, 0
    %p581 = por %p579, %p580
    %s583 = sadd.s32 %s582, 1
    %p586 = scmp.eq.s32.totalorder %s65, 1
    %p587 = scmp.ne.s32.totalorder %s582, %s584
    %p588 = scmp.eq.s32.totalorder %s65, 0
    %p589 = por %p587, %p588
    %p590 = scmp.ne.s32.totalorder %s582, %s584
    %p591 = scmp.eq.s32.totalorder %s70, 1
    %p592 = por %p590, %p591
    %p593 = scmp.ne.s32.totalorder %s584, %s585
    %p594 = scmp.eq.s32.totalorder %s70, 0
    %p595 = por %p593, %p594
    %p596 = scmp.ne.s32.totalorder %s584, %s585
    %p597 = scmp.eq.s32.totalorder %s71, 1
    %p598 = por %p596, %p597
    %p600 = scmp.ne.s32.totalorder %s585, %s599
    %p601 = scmp.eq.s32.totalorder %s71, 0
    %p602 = por %p600, %p601
    %s604 = sadd.s32 %s603, 1
    %p607 = scmp.eq.s32.totalorder %s65, 1
    %p608 = scmp.ne.s32.totalorder %s603, %s605
    %p609 = scmp.eq.s32.totalorder %s65, 0
    %p610 = por %p608, %p609
    %p611 = scmp.ne.s32.totalorder %s603, %s605
    %p612 = scmp.eq.s32.totalorder %s70, 1
    %p613 = por %p611, %p612
    %p614 = scmp.ne.s32.totalorder %s605, %s606
    %p615 = scmp.eq.s32.totalorder %s70, 0
    %p616 = por %p614, %p615
    %p617 = scmp.ne.s32.totalorder %s605, %s606
    %p618 = scmp.eq.s32.totalorder %s71, 1
    %p619 = por %p617, %p618
    %p621 = scmp.ne.s32.totalorder %s606, %s620
    %p622 = scmp.eq.s32.totalorder %s71, 0
    %p623 = por %p621, %p622
    %s625 = sadd.s32 %s624, 1
    %p628 = scmp.eq.s32.totalorder %s65, 1
    %p629 = scmp.ne.s32.totalorder %s624, %s626
    %p630 = scmp.eq.s32.totalorder %s65, 0
    %p631 = por %p629, %p630
    %p632 = scmp.ne.s32.totalorder %s624, %s626
    %p633 = scmp.eq.s32.totalorder %s70, 1
    %p634 = por %p632, %p633
    %p635 = scmp.ne.s32.totalorder %s626, %s627
    %p636 = scmp.eq.s32.totalorder %s70, 0
    %p637 = por %p635, %p636
    %p638 = scmp.ne.s32.totalorder %s626, %s627
    %p639 = scmp.eq.s32.totalorder %s71, 1
    %p640 = por %p638, %p639
    %p642 = scmp.ne.s32.totalorder %s627, %s641
    %p643 = scmp.eq.s32.totalorder %s71, 0
    %p644 = por %p642, %p643
    %s646 = sadd.s32 %s645, 1
    %p649 = scmp.eq.s32.totalorder %s65, 1
    %p650 = scmp.ne.s32.totalorder %s645, %s647
    %p651 = scmp.eq.s32.totalorder %s65, 0
    %p652 = por %p650, %p651
    %p653 = scmp.ne.s32.totalorder %s645, %s647
    %p654 = scmp.eq.s32.totalorder %s70, 1
    %p655 = por %p653, %p654
    %p656 = scmp.ne.s32.totalorder %s647, %s648
    %p657 = scmp.eq.s32.totalorder %s70, 0
    %p658 = por %p656, %p657
    %p659 = scmp.ne.s32.totalorder %s647, %s648
    %p660 = scmp.eq.s32.totalorder %s71, 1
    %p661 = por %p659, %p660
    %p663 = scmp.ne.s32.totalorder %s648, %s662
    %p664 = scmp.eq.s32.totalorder %s71, 0
    %p665 = por %p663, %p664
    %s667 = sadd.s32 %s666, 1
    %p670 = scmp.eq.s32.totalorder %s65, 1
    %p671 = scmp.ne.s32.totalorder %s666, %s668
    %p672 = scmp.eq.s32.totalorder %s65, 0
    %p673 = por %p671, %p672
    %p674 = scmp.ne.s32.totalorder %s666, %s668
    %p675 = scmp.eq.s32.totalorder %s70, 1
    %p676 = por %p674, %p675
    %p677 = scmp.ne.s32.totalorder %s668, %s669
    %p678 = scmp.eq.s32.totalorder %s70, 0
    %p679 = por %p677, %p678
    %p680 = scmp.ne.s32.totalorder %s668, %s669
    %p681 = scmp.eq.s32.totalorder %s71, 1
    %p682 = por %p680, %p681
    %p684 = scmp.ne.s32.totalorder %s669, %s683
    %p685 = scmp.eq.s32.totalorder %s71, 0
    %p686 = por %p684, %p685
    %s687 = ssub.s32 %s65, %s72
    %p688 = scmp.eq.s32.totalorder %s687, 0
    %s690 = sadd.s32 %s689, 1
    %s691 = scalar_select %p688, %s689, %s690
    %p694 = pneg %p688
    %p695 = scmp.eq.s32.totalorder %s65, 1
    %p696 = por %p694, %p695
    %p697 = scmp.ne.s32.totalorder %s689, %s692
    %p698 = scmp.eq.s32.totalorder %s65, 0
    %p699 = por %p697, %p698
    %p700 = scmp.ne.s32.totalorder %s689, %s692
    %p701 = scmp.eq.s32.totalorder %s70, 1
    %p702 = por %p700, %p701
    %p703 = scmp.ne.s32.totalorder %s692, %s693
    %p704 = scmp.eq.s32.totalorder %s70, 0
    %p705 = por %p703, %p704
    %p706 = scmp.ne.s32.totalorder %s692, %s693
    %p707 = scmp.eq.s32.totalorder %s71, 1
    %p708 = por %p706, %p707
    %p710 = scmp.ne.s32.totalorder %s693, %s709
    %p711 = scmp.eq.s32.totalorder %s71, 0
    %p712 = por %p710, %p711
    %p713 = scmp.le.s32.totalorder 1, %s65
    %p714 = scmp.lt.s32.totalorder %s65, 3
    %p715 = pnand %p713, %p714
    %p716 = pneg %p715
    // Predicated region
    $region9: #{router_forward.1} parent=5 // pred_check
      _
    $region10: #{router_forward.1} parent=5 // pred_check_branch
      %718 = sbr.rel (%p715) target = $region12
    $region11: #{router_forward.1} parent=5 // pred_region
      %s719 = ssub.s32 %s65, 1
      // Predicated region
      $region13: #{router_forward.1} parent=11 // pred_check
        %p720 = pneg %p112
      $region14: #{router_forward.1} parent=11 // pred_check_branch
        %722 = sbr.rel (%p720) target = $region16
      $region15: #{router_forward.1} parent=11 // pred_region
        _
      $region16: #{router_forward.1} parent=11 // pred_fallthru
        _
      // Predicated region
      $region17: #{router_forward.1} parent=11 // pred_check
        %p723 = pneg %p133
      $region18: #{router_forward.1} parent=11 // pred_check_branch
        %725 = sbr.rel (%p723) target = $region20
      $region19: #{router_forward.1} parent=11 // pred_region
        _
      $region20: #{router_forward.1} parent=11 // pred_fallthru
        _
      // Predicated region
      $region21: #{router_forward.1} parent=11 // pred_check
        %p726 = pneg %p154
      $region22: #{router_forward.1} parent=11 // pred_check_branch
        %728 = sbr.rel (%p726) target = $region24
      $region23: #{router_forward.1} parent=11 // pred_region
        _
      $region24: #{router_forward.1} parent=11 // pred_fallthru
        _
      // Predicated region
      $region25: #{router_forward.1} parent=11 // pred_check
        %p729 = pneg %p175
      $region26: #{router_forward.1} parent=11 // pred_check_branch
        %731 = sbr.rel (%p729) target = $region28
      $region27: #{router_forward.1} parent=11 // pred_region
        _
      $region28: #{router_forward.1} parent=11 // pred_fallthru
        _
      // Predicated region
      $region29: #{router_forward.1} parent=11 // pred_check
        %p732 = pneg %p196
      $region30: #{router_forward.1} parent=11 // pred_check_branch
        %734 = sbr.rel (%p732) target = $region32
      $region31: #{router_forward.1} parent=11 // pred_region
        _
      $region32: #{router_forward.1} parent=11 // pred_fallthru
        _
      // Predicated region
      $region33: #{router_forward.1} parent=11 // pred_check
        %p735 = pneg %p217
      $region34: #{router_forward.1} parent=11 // pred_check_branch
        %737 = sbr.rel (%p735) target = $region36
      $region35: #{router_forward.1} parent=11 // pred_region
        _
      $region36: #{router_forward.1} parent=11 // pred_fallthru
        _
      // Predicated region
      $region37: #{router_forward.1} parent=11 // pred_check
        %p738 = pneg %p238
      $region38: #{router_forward.1} parent=11 // pred_check_branch
        %740 = sbr.rel (%p738) target = $region40
      $region39: #{router_forward.1} parent=11 // pred_region
        _
      $region40: #{router_forward.1} parent=11 // pred_fallthru
        _
      // Predicated region
      $region41: #{router_forward.1} parent=11 // pred_check
        %p741 = pneg %p259
      $region42: #{router_forward.1} parent=11 // pred_check_branch
        %743 = sbr.rel (%p741) target = $region44
      $region43: #{router_forward.1} parent=11 // pred_region
        _
      $region44: #{router_forward.1} parent=11 // pred_fallthru
        _
      // Predicated region
      $region45: #{router_forward.1} parent=11 // pred_check
        %p744 = pneg %p280
      $region46: #{router_forward.1} parent=11 // pred_check_branch
        %746 = sbr.rel (%p744) target = $region48
      $region47: #{router_forward.1} parent=11 // pred_region
        _
      $region48: #{router_forward.1} parent=11 // pred_fallthru
        _
      // Predicated region
      $region49: #{router_forward.1} parent=11 // pred_check
        %p747 = pneg %p301
      $region50: #{router_forward.1} parent=11 // pred_check_branch
        %749 = sbr.rel (%p747) target = $region52
      $region51: #{router_forward.1} parent=11 // pred_region
        _
      $region52: #{router_forward.1} parent=11 // pred_fallthru
        _
      // Predicated region
      $region53: #{router_forward.1} parent=11 // pred_check
        %p750 = pneg %p322
      $region54: #{router_forward.1} parent=11 // pred_check_branch
        %752 = sbr.rel (%p750) target = $region56
      $region55: #{router_forward.1} parent=11 // pred_region
        _
      $region56: #{router_forward.1} parent=11 // pred_fallthru
        _
      // Predicated region
      $region57: #{router_forward.1} parent=11 // pred_check
        %p753 = pneg %p343
      $region58: #{router_forward.1} parent=11 // pred_check_branch
        %755 = sbr.rel (%p753) target = $region60
      $region59: #{router_forward.1} parent=11 // pred_region
        _
      $region60: #{router_forward.1} parent=11 // pred_fallthru
        _
      // Predicated region
      $region61: #{router_forward.1} parent=11 // pred_check
        %p756 = pneg %p364
      $region62: #{router_forward.1} parent=11 // pred_check_branch
        %758 = sbr.rel (%p756) target = $region64
      $region63: #{router_forward.1} parent=11 // pred_region
        _
      $region64: #{router_forward.1} parent=11 // pred_fallthru
        _
      // Predicated region
      $region65: #{router_forward.1} parent=11 // pred_check
        %p759 = pneg %p385
      $region66: #{router_forward.1} parent=11 // pred_check_branch
        %761 = sbr.rel (%p759) target = $region68
      $region67: #{router_forward.1} parent=11 // pred_region
        _
      $region68: #{router_forward.1} parent=11 // pred_fallthru
        _
      // Predicated region
      $region69: #{router_forward.1} parent=11 // pred_check
        %p762 = pneg %p406
      $region70: #{router_forward.1} parent=11 // pred_check_branch
        %764 = sbr.rel (%p762) target = $region72
      $region71: #{router_forward.1} parent=11 // pred_region
        _
      $region72: #{router_forward.1} parent=11 // pred_fallthru
        _
      // Predicated region
      $region73: #{router_forward.1} parent=11 // pred_check
        %p765 = pneg %p427
      $region74: #{router_forward.1} parent=11 // pred_check_branch
        %767 = sbr.rel (%p765) target = $region76
      $region75: #{router_forward.1} parent=11 // pred_region
        _
      $region76: #{router_forward.1} parent=11 // pred_fallthru
        _
      // Predicated region
      $region77: #{router_forward.1} parent=11 // pred_check
        %p768 = pneg %p448
      $region78: #{router_forward.1} parent=11 // pred_check_branch
        %770 = sbr.rel (%p768) target = $region80
      $region79: #{router_forward.1} parent=11 // pred_region
        _
      $region80: #{router_forward.1} parent=11 // pred_fallthru
        _
      // Predicated region
      $region81: #{router_forward.1} parent=11 // pred_check
        %p771 = pneg %p469
      $region82: #{router_forward.1} parent=11 // pred_check_branch
        %773 = sbr.rel (%p771) target = $region84
      $region83: #{router_forward.1} parent=11 // pred_region
        _
      $region84: #{router_forward.1} parent=11 // pred_fallthru
        _
      // Predicated region
      $region85: #{router_forward.1} parent=11 // pred_check
        %p774 = pneg %p490
      $region86: #{router_forward.1} parent=11 // pred_check_branch
        %776 = sbr.rel (%p774) target = $region88
      $region87: #{router_forward.1} parent=11 // pred_region
        _
      $region88: #{router_forward.1} parent=11 // pred_fallthru
        _
      // Predicated region
      $region89: #{router_forward.1} parent=11 // pred_check
        %p777 = pneg %p511
      $region90: #{router_forward.1} parent=11 // pred_check_branch
        %779 = sbr.rel (%p777) target = $region92
      $region91: #{router_forward.1} parent=11 // pred_region
        _
      $region92: #{router_forward.1} parent=11 // pred_fallthru
        _
      // Predicated region
      $region93: #{router_forward.1} parent=11 // pred_check
        %p780 = pneg %p532
      $region94: #{router_forward.1} parent=11 // pred_check_branch
        %782 = sbr.rel (%p780) target = $region96
      $region95: #{router_forward.1} parent=11 // pred_region
        _
      $region96: #{router_forward.1} parent=11 // pred_fallthru
        _
      // Predicated region
      $region97: #{router_forward.1} parent=11 // pred_check
        %p783 = pneg %p553
      $region98: #{router_forward.1} parent=11 // pred_check_branch
        %785 = sbr.rel (%p783) target = $region100
      $region99: #{router_forward.1} parent=11 // pred_region
        _
      $region100: #{router_forward.1} parent=11 // pred_fallthru
        _
      // Predicated region
      $region101: #{router_forward.1} parent=11 // pred_check
        %p786 = pneg %p574
      $region102: #{router_forward.1} parent=11 // pred_check_branch
        %788 = sbr.rel (%p786) target = $region104
      $region103: #{router_forward.1} parent=11 // pred_region
        _
      $region104: #{router_forward.1} parent=11 // pred_fallthru
        _
      // Predicated region
      $region105: #{router_forward.1} parent=11 // pred_check
        %p789 = pneg %p595
      $region106: #{router_forward.1} parent=11 // pred_check_branch
        %791 = sbr.rel (%p789) target = $region108
      $region107: #{router_forward.1} parent=11 // pred_region
        _
      $region108: #{router_forward.1} parent=11 // pred_fallthru
        _
      // Predicated region
      $region109: #{router_forward.1} parent=11 // pred_check
        %p792 = pneg %p616
      $region110: #{router_forward.1} parent=11 // pred_check_branch
        %794 = sbr.rel (%p792) target = $region112
      $region111: #{router_forward.1} parent=11 // pred_region
        _
      $region112: #{router_forward.1} parent=11 // pred_fallthru
        _
      // Predicated region
      $region113: #{router_forward.1} parent=11 // pred_check
        %p795 = pneg %p637
      $region114: #{router_forward.1} parent=11 // pred_check_branch
        %797 = sbr.rel (%p795) target = $region116
      $region115: #{router_forward.1} parent=11 // pred_region
        _
      $region116: #{router_forward.1} parent=11 // pred_fallthru
        _
      // Predicated region
      $region117: #{router_forward.1} parent=11 // pred_check
        %p798 = pneg %p658
      $region118: #{router_forward.1} parent=11 // pred_check_branch
        %800 = sbr.rel (%p798) target = $region120
      $region119: #{router_forward.1} parent=11 // pred_region
        _
      $region120: #{router_forward.1} parent=11 // pred_fallthru
        _
      // Predicated region
      $region121: #{router_forward.1} parent=11 // pred_check
        %p801 = pneg %p679
      $region122: #{router_forward.1} parent=11 // pred_check_branch
        %803 = sbr.rel (%p801) target = $region124
      $region123: #{router_forward.1} parent=11 // pred_region
        _
      $region124: #{router_forward.1} parent=11 // pred_fallthru
        _
    $region12: #{router_forward.1} parent=5 // pred_fallthru
      _
    %p804 = scmp.lt.s32.totalorder %s65, 2
    // Predicated region
    $region125: #{router_forward.1} parent=5 // pred_check
      %p805 = pneg %p804
    $region126: #{router_forward.1} parent=5 // pred_check_branch
      %807 = sbr.rel (%p805) target = $region128
    $region127: #{router_forward.1} parent=5 // pred_region
      // Predicated region
      $region129: #{router_forward.1} parent=127 // pred_check
        %p808 = pneg %p85
      $region130: #{router_forward.1} parent=127 // pred_check_branch
        %810 = sbr.rel (%p808) target = $region132
      $region131: #{router_forward.1} parent=127 // pred_region
        %p811 = scmp.lt.s32.totalorder %s65, 1
        %s812 = scalar_select %p811, %s65, 1
        %s813 = smul.addr %s812, 4
        %s814 = smul.addr %s813, 4
        %s815 = scalar_lea.vmem %s1, %s814
      $region132: #{router_forward.1} parent=127 // pred_fallthru
        _
    $region128: #{router_forward.1} parent=5 // pred_fallthru
      _
    %p816 = scmp.le.s32.totalorder 1, %s65
    %p817 = scmp.lt.s32.totalorder %s65, 3
    %p818 = pnand %p816, %p817
    %p819 = pneg %p818
    // Predicated region
    $region133: #{router_forward.1} parent=5 // pred_check
      _
    $region134: #{router_forward.1} parent=5 // pred_check_branch
      %821 = sbr.rel (%p818) target = $region136
    $region135: #{router_forward.1} parent=5 // pred_region
      %s822 = ssub.s32 %s65, 1
      %p823 = scmp.lt.s32.totalorder %s70, 1
      %s824 = scalar_select %p823, %s70, 1
      %s825 = smul.addr %s824, 4
      %s826 = smul.addr %s825, 4
      %s827 = scalar_lea.vmem %s1, %s826
      %p828 = pneg %p91
      %p829 = pneg %p88
      %p830 = pneg %p112
      %p831 = pneg %p109
      %p832 = pneg %p133
      %p833 = pneg %p130
      %p834 = pneg %p154
      %p835 = pneg %p151
      %p836 = pneg %p175
      %p837 = pneg %p172
      %p838 = pneg %p196
      %p839 = pneg %p193
      %p840 = pneg %p217
      %p841 = pneg %p214
      %p842 = pneg %p238
      %p843 = pneg %p235
      %p844 = pneg %p259
      %p845 = pneg %p256
      %p846 = pneg %p280
      %p847 = pneg %p277
      %p848 = pneg %p301
      %p849 = pneg %p298
      %p850 = pneg %p322
      %p851 = pneg %p319
      %p852 = pneg %p343
      %p853 = pneg %p340
      %p854 = pneg %p364
      %p855 = pneg %p361
      %p856 = pneg %p385
      %p857 = pneg %p382
      %p858 = pneg %p406
      %p859 = pneg %p403
      %p860 = pneg %p427
      %p861 = pneg %p424
      %p862 = pneg %p448
      %p863 = pneg %p445
      %p864 = pneg %p469
      %p865 = pneg %p466
      %p866 = pneg %p490
      %p867 = pneg %p487
      %p868 = pneg %p511
      %p869 = pneg %p508
      %p870 = pneg %p532
      %p871 = pneg %p529
      %p872 = pneg %p553
      %p873 = pneg %p550
      %p874 = pneg %p574
      %p875 = pneg %p571
      %p876 = pneg %p595
      %p877 = pneg %p592
      %p878 = pneg %p616
      %p879 = pneg %p613
      %p880 = pneg %p637
      %p881 = pneg %p634
      %p882 = pneg %p658
      %p883 = pneg %p655
      %p884 = pneg %p679
      %p885 = pneg %p676
      %p886 = pneg %p705
      %p887 = pneg %p702
      %p888 = scmp.lt.s32.totalorder %s70, 1
      %s889 = scalar_select %p888, %s70, 1
      %s890 = smul.addr %s889, 2
      %s891 = scalar_lea.vmem %s59, %s890
      %p892 = scmp.lt.s32.totalorder %s70, 1
      %s893 = scalar_select %p892, %s70, 1
      %s894 = smul.addr %s893, 4
      %s895 = smul.addr %s894, 4
      %s896 = scalar_lea.vmem %s1, %s895
      %p897 = scmp.lt.s32.totalorder %s70, 1
      %s898 = scalar_select %p897, %s70, 1
      %s899 = smul.addr %s898, 2
      %s900 = scalar_lea.vmem %s59, %s899
      %902 = vst [vmem:[#allocation2] sm:$0xff] 0
      %903 = vst [vmem:[#allocation2 + $0x8] sm:$0xff] 0
      %vm904 = vcmask 277504
      %905 = vst.msk [vmem:[#allocation2 + $0x10] sm:$0xff] %vm904, 0
      %vm906 = vcmask 670720
      %907 = vst.msk [vmem:[#allocation3] sm:$0xff] %vm906, 0
      %908 = vst.msk [vmem:[#allocation3 + $0x8] sm:$0xff] %vm906, 0
      %vm909 = vcmask 211968
      %910 = vst.msk [vmem:[#allocation4] sm:$0xff] %vm909, 0
      %911 = vst.msk [vmem:[#allocation4 + $0x8] sm:$0xff] %vm909, 0
      %912 = vst.msk [vmem:[#allocation4 + $0x10] sm:$0xff] %vm909, 0
      %913 = vst.msk [vmem:[#allocation4 + $0x18] sm:$0xff] %vm909, 0
      %v914 = vld [vmem:[%s896] sm:$0xff]
      %v915 = vld [vmem:[%s896 + $0x8] sm:$0xff]
      %v918 = vunpack.c.l.b16 %v914
      %v919 = vunpack.c.h.b16 %v914
      %v920 = vunpack.c.l.b16 %v915
      %v921 = vunpack.c.h.b16 %v915
      %v922 = vpack.c.b16 %v920, %v918
      %v923 = vpack.c.b16 %v921, %v919
      %924 = vrot.lane.b32.xlu0 %v922, 17
      %v925 = vpop.permute.xlu0 %924
      %926 = vrot.lane.b32.xlu0 %v923, 17
      %v927 = vpop.permute.xlu0 %926
      %vm928 = vcmask 138240
      %v929 = vsel %vm928, %v925, %v927
      %vm933 = vcmask 1047688
      %934 = vst.msk [vmem:[#allocation2] sm:$0xff] %vm933, %v925
      %935 = vst [vmem:[#allocation2 + $0x8] sm:$0xff] %v929
      %vm936 = vcmask 138240
      %937 = vst.msk [vmem:[#allocation2 + $0x10] sm:$0xff] %vm936, %v927
      %v938 = vld [vmem:[%s3] sm:$0x3]
      %v939 = vld [vmem:[%s5] sm:$0x3]
      %v940 = vld [vmem:[#allocation2] sm:$0xff]
      %v941 = vld [vmem:[#allocation2 + $0x8] sm:$0xff]
      %v944 = vunpack.c.l.s4 1966171168
      %v945 = vunpack.c.0.s8 %v944
      %v946 = vlaneseq
      %v947 = vshrl.u32 %v946, 7
      %v948 = vsub.s32 %v945, %v947
      %v949 = vrot.slane %v938, %v948
      %v950 = vcombine.high %v949, %v949
      %v952 = vunpack.c.l.s4 1966171168
      %v953 = vunpack.c.0.s8 %v952
      %v954 = vlaneseq
      %v955 = vshrl.u32 %v954, 7
      %v956 = vsub.s32 %v953, %v955
      %v957 = vrot.slane %v949, %v956
      %v959 = vunpack.c.l.s4 1966171168
      %v960 = vunpack.c.0.s8 %v959
      %v961 = vlaneseq
      %v962 = vshrl.u32 %v961, 7
      %v963 = vsub.s32 %v960, %v962
      %v964 = vrot.slane %v950, %v963
      %v966 = vpack.i.b16 %v957, %v957
      %v968 = vlaneseq
      %v969 = vshrl.u32 %v968, 7
      %v970 = vsub.s32 0, %v969
      %v971 = vrot.slane %v966, %v970
      %v973 = vpack.i.b16 %v964, %v964
      %v975 = vlaneseq
      %v976 = vshrl.u32 %v975, 7
      %v977 = vsub.s32 0, %v976
      %v978 = vrot.slane %v973, %v977
      %v979 = vmul.bf16 %v940, %v971
      %v980 = vmul.bf16 %v941, %v978
      %981 = vst [vmem:[#allocation5] sm:$0xff] %v979
      %982 = vst [vmem:[#allocation5 + $0x8] sm:$0xff] %v980
      %v983 = vld [vmem:[#allocation2] sm:$0xff]
      %v984 = vld [vmem:[#allocation2 + $0x8] sm:$0xff]
      %v985 = vld [vmem:[#allocation2 + $0x10] sm:$0xff]
      %989 = vrot.lane.b32.xlu0 %v983, 127
      %v990 = vpop.permute.xlu0 %989
      %991 = vrot.lane.b32.xlu0 %v984, 127
      %v992 = vpop.permute.xlu0 %991
      %993 = vrot.lane.b32.xlu0 %v985, 127
      %v994 = vpop.permute.xlu0 %993
      %vm995 = vcmask 1039360
      %v996 = vsel %vm995, %v990, %v992
      %v997 = vsel %vm995, %v992, %v994
      %1000 = vst [vmem:[#allocation5 + $0x10] sm:$0xff] %v996
      %1001 = vst [vmem:[#allocation5 + $0x18] sm:$0xff] %v997
      %v1002 = vld [vmem:[#allocation2] sm:$0xff]
      %v1003 = vld [vmem:[#allocation2 + $0x8] sm:$0xff]
      %v1004 = vld [vmem:[#allocation2 + $0x10] sm:$0xff]
      %v1007 = vunpack.c.l.s4 1966171168
      %v1008 = vunpack.c.0.s8 %v1007
      %v1009 = vlaneseq
      %v1010 = vshrl.u32 %v1009, 7
      %v1011 = vsub.s32 %v1008, %v1010
      %v1012 = vrot.slane %v939, %v1011
      %v1013 = vcombine.high %v1012, %v1012
      %v1015 = vunpack.c.l.s4 1966171168
      %v1016 = vunpack.c.0.s8 %v1015
      %v1017 = vlaneseq
      %v1018 = vshrl.u32 %v1017, 7
      %v1019 = vsub.s32 %v1016, %v1018
      %v1020 = vrot.slane %v1012, %v1019
      %v1022 = vunpack.c.l.s4 1966171168
      %v1023 = vunpack.c.0.s8 %v1022
      %v1024 = vlaneseq
      %v1025 = vshrl.u32 %v1024, 7
      %v1026 = vsub.s32 %v1023, %v1025
      %v1027 = vrot.slane %v1013, %v1026
      %v1029 = vpack.i.b16 %v1020, %v1020
      %v1031 = vlaneseq
      %v1032 = vshrl.u32 %v1031, 7
      %v1033 = vsub.s32 0, %v1032
      %v1034 = vrot.slane %v1029, %v1033
      %v1036 = vpack.i.b16 %v1027, %v1027
      %v1038 = vlaneseq
      %v1039 = vshrl.u32 %v1038, 7
      %v1040 = vsub.s32 0, %v1039
      %v1041 = vrot.slane %v1036, %v1040
      %1044 = vrot.lane.b32.xlu0 %v1034, 2
      %v1045 = vpop.permute.xlu0 %1044
      %1046 = vrot.lane.b32.xlu0 %v1041, 2
      %v1047 = vpop.permute.xlu0 %1046
      %vm1048 = vcmask 15360
      %v1049 = vsel %vm1048, %v1045, %v1047
      %v1053 = vmul.bf16 %v1002, %v1045
      %v1054 = vmul.bf16 %v1003, %v1049
      %v1055 = vmul.bf16 %v1004, %v1047
      %1059 = vrot.lane.b32.xlu0 %v1053, 126
      %v1060 = vpop.permute.xlu0 %1059
      %1061 = vrot.lane.b32.xlu0 %v1054, 126
      %v1062 = vpop.permute.xlu0 %1061
      %1063 = vrot.lane.b32.xlu0 %v1055, 126
      %v1064 = vpop.permute.xlu0 %1063
      %vm1065 = vcmask 1031168
      %v1066 = vsel %vm1065, %v1060, %v1062
      %v1067 = vsel %vm1065, %v1062, %v1064
      %1070 = vst [vmem:[#allocation5 + $0x20] sm:$0xff] %v1066
      %1071 = vst [vmem:[#allocation5 + $0x28] sm:$0xff] %v1067
      %v1072 = vld [vmem:[#allocation2] sm:$0xff]
      %v1073 = vld [vmem:[#allocation2 + $0x8] sm:$0xff]
      %v1074 = vld [vmem:[#allocation2 + $0x10] sm:$0xff]
      %1077 = vrot.lane.b32.xlu0 %v971, 16
      %v1078 = vpop.permute.xlu0 %1077
      %1079 = vrot.lane.b32.xlu0 %v978, 16
      %v1080 = vpop.permute.xlu0 %1079
      %vm1081 = vcmask 130048
      %v1082 = vsel %vm1081, %v1078, %v1080
      %v1086 = vmul.bf16 %v1072, %v1078
      %v1087 = vmul.bf16 %v1073, %v1082
      %v1088 = vmul.bf16 %v1074, %v1080
      %1092 = vrot.lane.b32.xlu0 %v1086, 112
      %v1093 = vpop.permute.xlu0 %1092
      %1094 = vrot.lane.b32.xlu0 %v1087, 112
      %v1095 = vpop.permute.xlu0 %1094
      %1096 = vrot.lane.b32.xlu0 %v1088, 112
      %v1097 = vpop.permute.xlu0 %1096
      %vm1098 = vcmask 916480
      %v1099 = vsel %vm1098, %v1093, %v1095
      %v1100 = vsel %vm1098, %v1095, %v1097
      %1103 = vst [vmem:[#allocation5 + $0x30] sm:$0xff] %v1099
      %1104 = vst [vmem:[#allocation5 + $0x38] sm:$0xff] %v1100
      %v1105 = vld [vmem:[#allocation2] sm:$0xff]
      %v1106 = vld [vmem:[#allocation2 + $0x8] sm:$0xff]
      %v1107 = vld [vmem:[#allocation2 + $0x10] sm:$0xff]
      %1111 = vrot.lane.b32.xlu0 %v1105, 111
      %v1112 = vpop.permute.xlu0 %1111
      %1113 = vrot.lane.b32.xlu0 %v1106, 111
      %v1114 = vpop.permute.xlu0 %1113
      %1115 = vrot.lane.b32.xlu0 %v1107, 111
      %v1116 = vpop.permute.xlu0 %1115
      %vm1117 = vcmask 908288
      %v1118 = vsel %vm1117, %v1112, %v1114
      %v1119 = vsel %vm1117, %v1114, %v1116
      %1122 = vst [vmem:[#allocation5 + $0x40] sm:$0xff] %v1118
      %1123 = vst [vmem:[#allocation5 + $0x48] sm:$0xff] %v1119
      %v1124 = vld [vmem:[#allocation2] sm:$0xff]
      %v1125 = vld [vmem:[#allocation2 + $0x8] sm:$0xff]
      %v1126 = vld [vmem:[#allocation2 + $0x10] sm:$0xff]
      %1127 = vrot.lane.b32.xlu0 %v1034, 18
      %v1128 = vpop.permute.xlu0 %1127
      %1129 = vrot.lane.b32.xlu0 %v1041, 18
      %v1130 = vpop.permute.xlu0 %1129
      %vm1131 = vcmask 146432
      %v1132 = vsel %vm1131, %v1128, %v1130
      %v1136 = vmul.bf16 %v1124, %v1128
      %v1137 = vmul.bf16 %v1125, %v1132
      %v1138 = vmul.bf16 %v1126, %v1130
      %1142 = vrot.lane.b32.xlu0 %v1136, 110
      %v1143 = vpop.permute.xlu0 %1142
      %1144 = vrot.lane.b32.xlu0 %v1137, 110
      %v1145 = vpop.permute.xlu0 %1144
      %1146 = vrot.lane.b32.xlu0 %v1138, 110
      %v1147 = vpop.permute.xlu0 %1146
      %vm1148 = vcmask 900096
      %v1149 = vsel %vm1148, %v1143, %v1145
      %v1150 = vsel %vm1148, %v1145, %v1147
      %1153 = vst [vmem:[#allocation5 + $0x50] sm:$0xff] %v1149
      %1154 = vst [vmem:[#allocation5 + $0x58] sm:$0xff] %v1150
      %v1155 = vld [vmem:[#allocation2] sm:$0xff]
      %v1156 = vld [vmem:[#allocation2 + $0x8] sm:$0xff]
      %v1157 = vld [vmem:[#allocation2 + $0x10] sm:$0xff]
      %1158 = vrot.lane.b32.xlu0 %v971, 32
      %v1159 = vpop.permute.xlu0 %1158
      %1160 = vrot.lane.b32.xlu0 %v978, 32
      %v1161 = vpop.permute.xlu0 %1160
      %vm1162 = vcmask 261120
      %v1163 = vsel %vm1162, %v1159, %v1161
      %v1167 = vmul.bf16 %v1155, %v1159
      %v1168 = vmul.bf16 %v1156, %v1163
      %v1169 = vmul.bf16 %v1157, %v1161
      %1173 = vrot.lane.b32.xlu0 %v1167, 96
      %v1174 = vpop.permute.xlu0 %1173
      %1175 = vrot.lane.b32.xlu0 %v1168, 96
      %v1176 = vpop.permute.xlu0 %1175
      %1177 = vrot.lane.b32.xlu0 %v1169, 96
      %v1178 = vpop.permute.xlu0 %1177
      %vm1179 = vcmask 785408
      %v1180 = vsel %vm1179, %v1174, %v1176
      %v1181 = vsel %vm1179, %v1176, %v1178
      %1184 = vst [vmem:[#allocation5 + $0x60] sm:$0xff] %v1180
      %1185 = vst [vmem:[#allocation5 + $0x68] sm:$0xff] %v1181
      %v1186 = vld [vmem:[#allocation2] sm:$0xff]
      %v1187 = vld [vmem:[#allocation2 + $0x8] sm:$0xff]
      %v1188 = vld [vmem:[#allocation2 + $0x10] sm:$0xff]
      %1192 = vrot.lane.b32.xlu0 %v1186, 95
      %v1193 = vpop.permute.xlu0 %1192
      %1194 = vrot.lane.b32.xlu0 %v1187, 95
      %v1195 = vpop.permute.xlu0 %1194
      %1196 = vrot.lane.b32.xlu0 %v1188, 95
      %v1197 = vpop.permute.xlu0 %1196
      %vm1198 = vcmask 777216
      %v1199 = vsel %vm1198, %v1193, %v1195
      %v1200 = vsel %vm1198, %v1195, %v1197
      %1203 = vst [vmem:[#allocation5 + $0x70] sm:$0xff] %v1199
      %1204 = vst [vmem:[#allocation5 + $0x78] sm:$0xff] %v1200
      %v1205 = vld [vmem:[#allocation2] sm:$0xff]
      %v1206 = vld [vmem:[#allocation2 + $0x8] sm:$0xff]
      %v1207 = vld [vmem:[#allocation2 + $0x10] sm:$0xff]
      %1208 = vrot.lane.b32.xlu0 %v1034, 34
      %v1209 = vpop.permute.xlu0 %1208
      %1210 = vrot.lane.b32.xlu0 %v1041, 34
      %v1211 = vpop.permute.xlu0 %1210
      %vm1212 = vcmask 277504
      %v1213 = vsel %vm1212, %v1209, %v1211
      %v1217 = vmul.bf16 %v1205, %v1209
      %v1218 = vmul.bf16 %v1206, %v1213
      %v1219 = vmul.bf16 %v1207, %v1211
      %1223 = vrot.lane.b32.xlu0 %v1217, 94
      %v1224 = vpop.permute.xlu0 %1223
      %1225 = vrot.lane.b32.xlu0 %v1218, 94
      %v1226 = vpop.permute.xlu0 %1225
      %1227 = vrot.lane.b32.xlu0 %v1219, 94
      %v1228 = vpop.permute.xlu0 %1227
      %vm1229 = vcmask 769024
      %v1230 = vsel %vm1229, %v1224, %v1226
      %v1231 = vsel %vm1229, %v1226, %v1228
      %1234 = vst [vmem:[#allocation5 + $0x80] sm:$0xff] %v1230
      %1235 = vst [vmem:[#allocation5 + $0x88] sm:$0xff] %v1231
      %v1236 = vld [vmem:[%s19] sm:$0xff]
      %v1237 = vld [vmem:[%s19 + $0x8] sm:$0xff]
      %v1238 = vld [vmem:[#allocation5] sm:$0xff]
      %v1239 = vld [vmem:[#allocation5 + $0x8] sm:$0xff]
      %v1240 = vld [vmem:[#allocation5 + $0x10] sm:$0xff]
      %v1241 = vld [vmem:[#allocation5 + $0x18] sm:$0xff]
      %v1242 = vld [vmem:[#allocation5 + $0x20] sm:$0xff]
      %v1243 = vld [vmem:[#allocation5 + $0x28] sm:$0xff]
      %v1244 = vld [vmem:[#allocation5 + $0x30] sm:$0xff]
      %v1245 = vld [vmem:[#allocation5 + $0x38] sm:$0xff]
      %v1246 = vld [vmem:[#allocation5 + $0x40] sm:$0xff]
      %v1247 = vld [vmem:[#allocation5 + $0x48] sm:$0xff]
      %v1248 = vld [vmem:[#allocation5 + $0x50] sm:$0xff]
      %v1249 = vld [vmem:[#allocation5 + $0x58] sm:$0xff]
      %v1250 = vld [vmem:[#allocation5 + $0x60] sm:$0xff]
      %v1251 = vld [vmem:[#allocation5 + $0x68] sm:$0xff]
      %v1252 = vld [vmem:[#allocation5 + $0x70] sm:$0xff]
      %v1253 = vld [vmem:[#allocation5 + $0x78] sm:$0xff]
      %v1254 = vld [vmem:[#allocation5 + $0x80] sm:$0xff]
      %v1255 = vld [vmem:[#allocation5 + $0x88] sm:$0xff]
      %v1256 = vld [vmem:[%s21] sm:$0xff]
      %v1257 = vld [vmem:[%s21 + $0x8] sm:$0xff]
      %1259 = vset.pattern.permute.xlu0 0
      %1260 = vperm.xlu0 %1259, %v1256
      %v1261 = vpop.permute.xlu0 %1260
      %1264 = vset.pattern.permute.xlu0 0
      %1265 = vperm.xlu0 %1264, %v1257
      %v1266 = vpop.permute.xlu0 %1265
      %v1270 = vunpack.c.l.b16 %v1236
      %v1271 = vunpack.c.h.b16 %v1236
      %v1272 = vunpack.c.l.b16 %v1237
      %v1273 = vunpack.c.h.b16 %v1237
      %v1274 = vpack.c.b16 %v1272, %v1270
      %v1275 = vpack.c.b16 %v1273, %v1271
      %vm1277 = vcmask 130048
      %v1279 = vsel %vm1277, %v1275, 0
      %1281 = vmatprep.subr.bf16.mxu0 %v1239
      %1282 = vmatpush1.bf16.msra.mxu0 %v1238
      %1283 = vmatprep.subr.bf16.mxu0 %v1241
      %1284 = vmatpush1.bf16.msra.mxu0 %v1240
      %1285 = vmatprep.subr.bf16.mxu0 %v1243
      %1286 = vmatpush1.bf16.msra.mxu0 %v1242
      %1287 = vmatprep.subr.bf16.mxu0 %v1245
      %1288 = vmatpush1.bf16.msra.mxu0 %v1244
      %1289 = vmatprep.subr.bf16.mxu0 %v1247
      %1290 = vmatpush1.bf16.msra.mxu0 %v1246
      %1291 = vmatprep.subr.bf16.mxu0 %v1249
      %1292 = vmatpush1.bf16.msra.mxu0 %v1248
      %1293 = vmatprep.subr.bf16.mxu0 %v1251
      %1294 = vmatpush1.bf16.msra.mxu0 %v1250
      %1295 = vmatprep.subr.bf16.mxu0 %v1253
      %1296 = vmatpush1.bf16.msra.mxu0 %v1252
      %1297 = vmatprep.subr.bf16.mxu0 %v1255
      %1298 = vmatpush1.bf16.msra.mxu0 %v1254
      %1299 = vmatprep.subr.bf16.mxu0 0
      %1300 = vmatpush1.bf16.msra.mxu0 0
      %1301 = vmatprep.subr.bf16.mxu0 0
      %1302 = vmatpush1.bf16.msra.mxu0 0
      %1303 = vmatprep.subr.bf16.mxu0 0
      %1304 = vmatpush1.bf16.msra.mxu0 0
      %1305 = vmatprep.subr.bf16.mxu0 0
      %1306 = vmatpush1.bf16.msra.mxu0 0
      %1307 = vmatprep.subr.bf16.mxu0 0
      %1308 = vmatpush1.bf16.msra.mxu0 0
      %1309 = vmatprep.subr.bf16.mxu0 0
      %1310 = vmatpush1.bf16.msra.mxu0 0
      %1311 = vmatprep.subr.bf16.mxu0 0
      %1312 = vmatpush1.bf16.msra.mxu0 0
      %1313 = vmatprep.mubr.bf16.mxu0 %v1279
      %1314 = vmatmul.mubr.bf16.gmra.mrb[0].mxu0 %v1274
      %v1315 = vpop.f32.mrb[0].mxu0
      %v1316 = vadd.f32 %v1261, %v1315
      %v1317 = vpop.f32.mrb[0].mxu0
      %v1318 = vadd.f32 %v1261, %v1317
      %v1319 = vpop.f32.mrb[0].mxu0
      %v1320 = vadd.f32 %v1266, %v1319
      %v1321 = vpop.f32.mrb[0].mxu0
      %v1322 = vadd.f32 %v1266, %v1321
      %1323 = vdwg.mxu0
      %v1324 = vmax.f32 %v1316, 0.0
      %v1325 = vmax.f32 %v1318, 0.0
      %v1326 = vmax.f32 %v1320, 0.0
      %v1327 = vmax.f32 %v1322, 0.0
      %v1328 = vpack.c.bf16 %v1326, %v1324
      %v1329 = vpack.c.bf16 %v1327, %v1325
      %1332 = vrot.lane.b32.xlu0 %v1328, 17
      %v1333 = vpop.permute.xlu0 %1332
      %1334 = vrot.lane.b32.xlu0 %v1329, 17
      %v1335 = vpop.permute.xlu0 %1334
      %v1336 = vsel %vm928, %v1333, %v1335
      %1340 = vst.msk [vmem:[#allocation2] sm:$0xff] %vm933, %v1333
      %1341 = vst [vmem:[#allocation2 + $0x8] sm:$0xff] %v1336
      %1342 = vst.msk [vmem:[#allocation2 + $0x10] sm:$0xff] %vm936, %v1335
      %v1343 = vld [vmem:[%s3] sm:$0x3]
      %v1344 = vld [vmem:[%s5] sm:$0x3]
      %v1345 = vld [vmem:[#allocation2] sm:$0xff]
      %v1346 = vld [vmem:[#allocation2 + $0x8] sm:$0xff]
      %v1349 = vunpack.c.l.s4 1966171168
      %v1350 = vunpack.c.0.s8 %v1349
      %v1351 = vlaneseq
      %v1352 = vshrl.u32 %v1351, 7
      %v1353 = vsub.s32 %v1350, %v1352
      %v1354 = vrot.slane %v1343, %v1353
      %v1355 = vcombine.high %v1354, %v1354
      %v1357 = vunpack.c.l.s4 1966171168
      %v1358 = vunpack.c.0.s8 %v1357
      %v1359 = vlaneseq
      %v1360 = vshrl.u32 %v1359, 7
      %v1361 = vsub.s32 %v1358, %v1360
      %v1362 = vrot.slane %v1354, %v1361
      %v1364 = vunpack.c.l.s4 1966171168
      %v1365 = vunpack.c.0.s8 %v1364
      %v1366 = vlaneseq
      %v1367 = vshrl.u32 %v1366, 7
      %v1368 = vsub.s32 %v1365, %v1367
      %v1369 = vrot.slane %v1355, %v1368
      %v1371 = vpack.i.b16 %v1362, %v1362
      %v1373 = vlaneseq
      %v1374 = vshrl.u32 %v1373, 7
      %v1375 = vsub.s32 0, %v1374
      %v1376 = vrot.slane %v1371, %v1375
      %v1378 = vpack.i.b16 %v1369, %v1369
      %v1380 = vlaneseq
      %v1381 = vshrl.u32 %v1380, 7
      %v1382 = vsub.s32 0, %v1381
      %v1383 = vrot.slane %v1378, %v1382
      %v1384 = vmul.bf16 %v1345, %v1376
      %v1385 = vmul.bf16 %v1346, %v1383
      %1386 = vst [vmem:[#allocation5] sm:$0xff] %v1384
      %1387 = vst [vmem:[#allocation5 + $0x8] sm:$0xff] %v1385
      %v1388 = vld [vmem:[#allocation2] sm:$0xff]
      %v1389 = vld [vmem:[#allocation2 + $0x8] sm:$0xff]
      %v1390 = vld [vmem:[#allocation2 + $0x10] sm:$0xff]
      %1394 = vrot.lane.b32.xlu0 %v1388, 127
      %v1395 = vpop.permute.xlu0 %1394
      %1396 = vrot.lane.b32.xlu0 %v1389, 127
      %v1397 = vpop.permute.xlu0 %1396
      %1398 = vrot.lane.b32.xlu0 %v1390, 127
      %v1399 = vpop.permute.xlu0 %1398
      %v1400 = vsel %vm995, %v1395, %v1397
      %v1401 = vsel %vm995, %v1397, %v1399
      %1404 = vst [vmem:[#allocation5 + $0x10] sm:$0xff] %v1400
      %1405 = vst [vmem:[#allocation5 + $0x18] sm:$0xff] %v1401
      %v1406 = vld [vmem:[#allocation2] sm:$0xff]
      %v1407 = vld [vmem:[#allocation2 + $0x8] sm:$0xff]
      %v1408 = vld [vmem:[#allocation2 + $0x10] sm:$0xff]
      %v1411 = vunpack.c.l.s4 1966171168
      %v1412 = vunpack.c.0.s8 %v1411
      %v1413 = vlaneseq
      %v1414 = vshrl.u32 %v1413, 7
      %v1415 = vsub.s32 %v1412, %v1414
      %v1416 = vrot.slane %v1344, %v1415
      %v1417 = vcombine.high %v1416, %v1416
      %v1419 = vunpack.c.l.s4 1966171168
      %v1420 = vunpack.c.0.s8 %v1419
      %v1421 = vlaneseq
      %v1422 = vshrl.u32 %v1421, 7
      %v1423 = vsub.s32 %v1420, %v1422
      %v1424 = vrot.slane %v1416, %v1423
      %v1426 = vunpack.c.l.s4 1966171168
      %v1427 = vunpack.c.0.s8 %v1426
      %v1428 = vlaneseq
      %v1429 = vshrl.u32 %v1428, 7
      %v1430 = vsub.s32 %v1427, %v1429
      %v1431 = vrot.slane %v1417, %v1430
      %v1433 = vpack.i.b16 %v1424, %v1424
      %v1435 = vlaneseq
      %v1436 = vshrl.u32 %v1435, 7
      %v1437 = vsub.s32 0, %v1436
      %v1438 = vrot.slane %v1433, %v1437
      %v1440 = vpack.i.b16 %v1431, %v1431
      %v1442 = vlaneseq
      %v1443 = vshrl.u32 %v1442, 7
      %v1444 = vsub.s32 0, %v1443
      %v1445 = vrot.slane %v1440, %v1444
      %1448 = vrot.lane.b32.xlu0 %v1438, 2
      %v1449 = vpop.permute.xlu0 %1448
      %1450 = vrot.lane.b32.xlu0 %v1445, 2
      %v1451 = vpop.permute.xlu0 %1450
      %v1452 = vsel %vm1048, %v1449, %v1451
      %v1456 = vmul.bf16 %v1406, %v1449
      %v1457 = vmul.bf16 %v1407, %v1452
      %v1458 = vmul.bf16 %v1408, %v1451
      %1462 = vrot.lane.b32.xlu0 %v1456, 126
      %v1463 = vpop.permute.xlu0 %1462
      %1464 = vrot.lane.b32.xlu0 %v1457, 126
      %v1465 = vpop.permute.xlu0 %1464
      %1466 = vrot.lane.b32.xlu0 %v1458, 126
      %v1467 = vpop.permute.xlu0 %1466
      %v1468 = vsel %vm1065, %v1463, %v1465
      %v1469 = vsel %vm1065, %v1465, %v1467
      %1472 = vst [vmem:[#allocation5 + $0x20] sm:$0xff] %v1468
      %1473 = vst [vmem:[#allocation5 + $0x28] sm:$0xff] %v1469
      %v1474 = vld [vmem:[#allocation2] sm:$0xff]
      %v1475 = vld [vmem:[#allocation2 + $0x8] sm:$0xff]
      %v1476 = vld [vmem:[#allocation2 + $0x10] sm:$0xff]
      %1479 = vrot.lane.b32.xlu0 %v1376, 16
      %v1480 = vpop.permute.xlu0 %1479
      %1481 = vrot.lane.b32.xlu0 %v1383, 16
      %v1482 = vpop.permute.xlu0 %1481
      %v1483 = vsel %vm1081, %v1480, %v1482
      %v1487 = vmul.bf16 %v1474, %v1480
      %v1488 = vmul.bf16 %v1475, %v1483
      %v1489 = vmul.bf16 %v1476, %v1482
      %1493 = vrot.lane.b32.xlu0 %v1487, 112
      %v1494 = vpop.permute.xlu0 %1493
      %1495 = vrot.lane.b32.xlu0 %v1488, 112
      %v1496 = vpop.permute.xlu0 %1495
      %1497 = vrot.lane.b32.xlu0 %v1489, 112
      %v1498 = vpop.permute.xlu0 %1497
      %v1499 = vsel %vm1098, %v1494, %v1496
      %v1500 = vsel %vm1098, %v1496, %v1498
      %1503 = vst [vmem:[#allocation5 + $0x30] sm:$0xff] %v1499
      %1504 = vst [vmem:[#allocation5 + $0x38] sm:$0xff] %v1500
      %v1505 = vld [vmem:[#allocation2] sm:$0xff]
      %v1506 = vld [vmem:[#allocation2 + $0x8] sm:$0xff]
      %v1507 = vld [vmem:[#allocation2 + $0x10] sm:$0xff]
      %1511 = vrot.lane.b32.xlu0 %v1505, 111
      %v1512 = vpop.permute.xlu0 %1511
      %1513 = vrot.lane.b32.xlu0 %v1506, 111
      %v1514 = vpop.permute.xlu0 %1513
      %1515 = vrot.lane.b32.xlu0 %v1507, 111
      %v1516 = vpop.permute.xlu0 %1515
      %v1517 = vsel %vm1117, %v1512, %v1514
      %v1518 = vsel %vm1117, %v1514, %v1516
      %1521 = vst [vmem:[#allocation5 + $0x40] sm:$0xff] %v1517
      %1522 = vst [vmem:[#allocation5 + $0x48] sm:$0xff] %v1518
      %v1523 = vld [vmem:[#allocation2] sm:$0xff]
      %v1524 = vld [vmem:[#allocation2 + $0x8] sm:$0xff]
      %v1525 = vld [vmem:[#allocation2 + $0x10] sm:$0xff]
      %1526 = vrot.lane.b32.xlu0 %v1438, 18
      %v1527 = vpop.permute.xlu0 %1526
      %1528 = vrot.lane.b32.xlu0 %v1445, 18
      %v1529 = vpop.permute.xlu0 %1528
      %v1530 = vsel %vm1131, %v1527, %v1529
      %v1534 = vmul.bf16 %v1523, %v1527
      %v1535 = vmul.bf16 %v1524, %v1530
      %v1536 = vmul.bf16 %v1525, %v1529
      %1540 = vrot.lane.b32.xlu0 %v1534, 110
      %v1541 = vpop.permute.xlu0 %1540
      %1542 = vrot.lane.b32.xlu0 %v1535, 110
      %v1543 = vpop.permute.xlu0 %1542
      %1544 = vrot.lane.b32.xlu0 %v1536, 110
      %v1545 = vpop.permute.xlu0 %1544
      %v1546 = vsel %vm1148, %v1541, %v1543
      %v1547 = vsel %vm1148, %v1543, %v1545
      %1550 = vst [vmem:[#allocation5 + $0x50] sm:$0xff] %v1546
      %1551 = vst [vmem:[#allocation5 + $0x58] sm:$0xff] %v1547
      %v1552 = vld [vmem:[#allocation2] sm:$0xff]
      %v1553 = vld [vmem:[#allocation2 + $0x8] sm:$0xff]
      %v1554 = vld [vmem:[#allocation2 + $0x10] sm:$0xff]
      %1555 = vrot.lane.b32.xlu0 %v1376, 32
      %v1556 = vpop.permute.xlu0 %1555
      %1557 = vrot.lane.b32.xlu0 %v1383, 32
      %v1558 = vpop.permute.xlu0 %1557
      %v1559 = vsel %vm1162, %v1556, %v1558
      %v1563 = vmul.bf16 %v1552, %v1556
      %v1564 = vmul.bf16 %v1553, %v1559
      %v1565 = vmul.bf16 %v1554, %v1558
      %1569 = vrot.lane.b32.xlu0 %v1563, 96
      %v1570 = vpop.permute.xlu0 %1569
      %1571 = vrot.lane.b32.xlu0 %v1564, 96
      %v1572 = vpop.permute.xlu0 %1571
      %1573 = vrot.lane.b32.xlu0 %v1565, 96
      %v1574 = vpop.permute.xlu0 %1573
      %v1575 = vsel %vm1179, %v1570, %v1572
      %v1576 = vsel %vm1179, %v1572, %v1574
      %1579 = vst [vmem:[#allocation5 + $0x60] sm:$0xff] %v1575
      %1580 = vst [vmem:[#allocation5 + $0x68] sm:$0xff] %v1576
      %v1581 = vld [vmem:[#allocation2] sm:$0xff]
      %v1582 = vld [vmem:[#allocation2 + $0x8] sm:$0xff]
      %v1583 = vld [vmem:[#allocation2 + $0x10] sm:$0xff]
      %1587 = vrot.lane.b32.xlu0 %v1581, 95
      %v1588 = vpop.permute.xlu0 %1587
      %1589 = vrot.lane.b32.xlu0 %v1582, 95
      %v1590 = vpop.permute.xlu0 %1589
      %1591 = vrot.lane.b32.xlu0 %v1583, 95
      %v1592 = vpop.permute.xlu0 %1591
      %v1593 = vsel %vm1198, %v1588, %v1590
      %v1594 = vsel %vm1198, %v1590, %v1592
      %1597 = vst [vmem:[#allocation5 + $0x70] sm:$0xff] %v1593
      %1598 = vst [vmem:[#allocation5 + $0x78] sm:$0xff] %v1594
      %v1599 = vld [vmem:[#allocation2] sm:$0xff]
      %v1600 = vld [vmem:[#allocation2 + $0x8] sm:$0xff]
      %v1601 = vld [vmem:[#allocation2 + $0x10] sm:$0xff]
      %1602 = vrot.lane.b32.xlu0 %v1438, 34
      %v1603 = vpop.permute.xlu0 %1602
      %1604 = vrot.lane.b32.xlu0 %v1445, 34
      %v1605 = vpop.permute.xlu0 %1604
      %v1606 = vsel %vm1212, %v1603, %v1605
      %v1610 = vmul.bf16 %v1599, %v1603
      %v1611 = vmul.bf16 %v1600, %v1606
      %v1612 = vmul.bf16 %v1601, %v1605
      %1616 = vrot.lane.b32.xlu0 %v1610, 94
      %v1617 = vpop.permute.xlu0 %1616
      %1618 = vrot.lane.b32.xlu0 %v1611, 94
      %v1619 = vpop.permute.xlu0 %1618
      %1620 = vrot.lane.b32.xlu0 %v1612, 94
      %v1621 = vpop.permute.xlu0 %1620
      %v1622 = vsel %vm1229, %v1617, %v1619
      %v1623 = vsel %vm1229, %v1619, %v1621
      %1626 = vst [vmem:[#allocation5 + $0x80] sm:$0xff] %v1622
      %1627 = vst [vmem:[#allocation5 + $0x88] sm:$0xff] %v1623
      %v1628 = vld [vmem:[%s23] sm:$0xff]
      %v1629 = vld [vmem:[%s23 + $0x8] sm:$0xff]
      %v1630 = vld [vmem:[#allocation5] sm:$0xff]
      %v1631 = vld [vmem:[#allocation5 + $0x8] sm:$0xff]
      %v1632 = vld [vmem:[#allocation5 + $0x10] sm:$0xff]
      %v1633 = vld [vmem:[#allocation5 + $0x18] sm:$0xff]
      %v1634 = vld [vmem:[#allocation5 + $0x20] sm:$0xff]
      %v1635 = vld [vmem:[#allocation5 + $0x28] sm:$0xff]
      %v1636 = vld [vmem:[#allocation5 + $0x30] sm:$0xff]
      %v1637 = vld [vmem:[#allocation5 + $0x38] sm:$0xff]
      %v1638 = vld [vmem:[#allocation5 + $0x40] sm:$0xff]
      %v1639 = vld [vmem:[#allocation5 + $0x48] sm:$0xff]
      %v1640 = vld [vmem:[#allocation5 + $0x50] sm:$0xff]
      %v1641 = vld [vmem:[#allocation5 + $0x58] sm:$0xff]
      %v1642 = vld [vmem:[#allocation5 + $0x60] sm:$0xff]
      %v1643 = vld [vmem:[#allocation5 + $0x68] sm:$0xff]
      %v1644 = vld [vmem:[#allocation5 + $0x70] sm:$0xff]
      %v1645 = vld [vmem:[#allocation5 + $0x78] sm:$0xff]
      %v1646 = vld [vmem:[#allocation5 + $0x80] sm:$0xff]
      %v1647 = vld [vmem:[#allocation5 + $0x88] sm:$0xff]
      %v1648 = vld [vmem:[%s25] sm:$0xff]
      %v1649 = vld [vmem:[%s25 + $0x8] sm:$0xff]
      %1651 = vset.pattern.permute.xlu0 0
      %1652 = vperm.xlu0 %1651, %v1648
      %v1653 = vpop.permute.xlu0 %1652
      %1656 = vset.pattern.permute.xlu0 0
      %1657 = vperm.xlu0 %1656, %v1649
      %v1658 = vpop.permute.xlu0 %1657
      %v1662 = vunpack.c.l.b16 %v1628
      %v1663 = vunpack.c.h.b16 %v1628
      %v1664 = vunpack.c.l.b16 %v1629
      %v1665 = vunpack.c.h.b16 %v1629
      %v1666 = vpack.c.b16 %v1664, %v1662
      %v1667 = vpack.c.b16 %v1665, %v1663
      %v1670 = vsel %vm1277, %v1667, 0
      %1672 = vmatprep.subr.bf16.mxu0 %v1631
      %1673 = vmatpush1.bf16.msra.mxu0 %v1630
      %1674 = vmatprep.subr.bf16.mxu0 %v1633
      %1675 = vmatpush1.bf16.msra.mxu0 %v1632
      %1676 = vmatprep.subr.bf16.mxu0 %v1635
      %1677 = vmatpush1.bf16.msra.mxu0 %v1634
      %1678 = vmatprep.subr.bf16.mxu0 %v1637
      %1679 = vmatpush1.bf16.msra.mxu0 %v1636
      %1680 = vmatprep.subr.bf16.mxu0 %v1639
      %1681 = vmatpush1.bf16.msra.mxu0 %v1638
      %1682 = vmatprep.subr.bf16.mxu0 %v1641
      %1683 = vmatpush1.bf16.msra.mxu0 %v1640
      %1684 = vmatprep.subr.bf16.mxu0 %v1643
      %1685 = vmatpush1.bf16.msra.mxu0 %v1642
      %1686 = vmatprep.subr.bf16.mxu0 %v1645
      %1687 = vmatpush1.bf16.msra.mxu0 %v1644
      %1688 = vmatprep.subr.bf16.mxu0 %v1647
      %1689 = vmatpush1.bf16.msra.mxu0 %v1646
      %1690 = vmatprep.subr.bf16.mxu0 0
      %1691 = vmatpush1.bf16.msra.mxu0 0
      %1692 = vmatprep.subr.bf16.mxu0 0
      %1693 = vmatpush1.bf16.msra.mxu0 0
      %1694 = vmatprep.subr.bf16.mxu0 0
      %1695 = vmatpush1.bf16.msra.mxu0 0
      %1696 = vmatprep.subr.bf16.mxu0 0
      %1697 = vmatpush1.bf16.msra.mxu0 0
      %1698 = vmatprep.subr.bf16.mxu0 0
      %1699 = vmatpush1.bf16.msra.mxu0 0
      %1700 = vmatprep.subr.bf16.mxu0 0
      %1701 = vmatpush1.bf16.msra.mxu0 0
      %1702 = vmatprep.subr.bf16.mxu0 0
      %1703 = vmatpush1.bf16.msra.mxu0 0
      %1704 = vmatprep.mubr.bf16.mxu0 %v1670
      %1705 = vmatmul.mubr.bf16.gmra.mrb[0].mxu0 %v1666
      %v1706 = vpop.f32.mrb[0].mxu0
      %v1707 = vadd.f32 %v1653, %v1706
      %v1708 = vpop.f32.mrb[0].mxu0
      %v1709 = vadd.f32 %v1653, %v1708
      %v1710 = vpop.f32.mrb[0].mxu0
      %v1711 = vadd.f32 %v1658, %v1710
      %v1712 = vpop.f32.mrb[0].mxu0
      %v1713 = vadd.f32 %v1658, %v1712
      %1714 = vdwg.mxu0
      %v1715 = vmax.f32 %v1707, 0.0
      %v1716 = vmax.f32 %v1709, 0.0
      %v1717 = vmax.f32 %v1711, 0.0
      %v1718 = vmax.f32 %v1713, 0.0
      %v1719 = vpack.c.bf16 %v1717, %v1715
      %v1720 = vpack.c.bf16 %v1718, %v1716
      %1723 = vrot.lane.b32.xlu0 %v1719, 17
      %v1724 = vpop.permute.xlu0 %1723
      %1725 = vrot.lane.b32.xlu0 %v1720, 17
      %v1726 = vpop.permute.xlu0 %1725
      %v1727 = vsel %vm928, %v1724, %v1726
      %1731 = vst.msk [vmem:[#allocation2] sm:$0xff] %vm933, %v1724
      %1732 = vst [vmem:[#allocation2 + $0x8] sm:$0xff] %v1727
      %1733 = vst.msk [vmem:[#allocation2 + $0x10] sm:$0xff] %vm936, %v1726
      %v1734 = vld [vmem:[%s3] sm:$0x3]
      %v1735 = vld [vmem:[%s5] sm:$0x3]
      %v1736 = vld [vmem:[#allocation2] sm:$0xff]
      %v1737 = vld [vmem:[#allocation2 + $0x8] sm:$0xff]
      %v1740 = vunpack.c.l.s4 1966171168
      %v1741 = vunpack.c.0.s8 %v1740
      %v1742 = vlaneseq
      %v1743 = vshrl.u32 %v1742, 7
      %v1744 = vsub.s32 %v1741, %v1743
      %v1745 = vrot.slane %v1734, %v1744
      %v1746 = vcombine.high %v1745, %v1745
      %v1748 = vunpack.c.l.s4 1966171168
      %v1749 = vunpack.c.0.s8 %v1748
      %v1750 = vlaneseq
      %v1751 = vshrl.u32 %v1750, 7
      %v1752 = vsub.s32 %v1749, %v1751
      %v1753 = vrot.slane %v1745, %v1752
      %v1755 = vunpack.c.l.s4 1966171168
      %v1756 = vunpack.c.0.s8 %v1755
      %v1757 = vlaneseq
      %v1758 = vshrl.u32 %v1757, 7
      %v1759 = vsub.s32 %v1756, %v1758
      %v1760 = vrot.slane %v1746, %v1759
      %v1762 = vpack.i.b16 %v1753, %v1753
      %v1764 = vlaneseq
      %v1765 = vshrl.u32 %v1764, 7
      %v1766 = vsub.s32 0, %v1765
      %v1767 = vrot.slane %v1762, %v1766
      %v1769 = vpack.i.b16 %v1760, %v1760
      %v1771 = vlaneseq
      %v1772 = vshrl.u32 %v1771, 7
      %v1773 = vsub.s32 0, %v1772
      %v1774 = vrot.slane %v1769, %v1773
      %v1775 = vmul.bf16 %v1736, %v1767
      %v1776 = vmul.bf16 %v1737, %v1774
      %1777 = vst [vmem:[#allocation5] sm:$0xff] %v1775
      %1778 = vst [vmem:[#allocation5 + $0x8] sm:$0xff] %v1776
      %v1779 = vld [vmem:[#allocation2] sm:$0xff]
      %v1780 = vld [vmem:[#allocation2 + $0x8] sm:$0xff]
      %v1781 = vld [vmem:[#allocation2 + $0x10] sm:$0xff]
      %1785 = vrot.lane.b32.xlu0 %v1779, 127
      %v1786 = vpop.permute.xlu0 %1785
      %1787 = vrot.lane.b32.xlu0 %v1780, 127
      %v1788 = vpop.permute.xlu0 %1787
      %1789 = vrot.lane.b32.xlu0 %v1781, 127
      %v1790 = vpop.permute.xlu0 %1789
      %v1791 = vsel %vm995, %v1786, %v1788
      %v1792 = vsel %vm995, %v1788, %v1790
      %1795 = vst [vmem:[#allocation5 + $0x10] sm:$0xff] %v1791
      %1796 = vst [vmem:[#allocation5 + $0x18] sm:$0xff] %v1792
      %v1797 = vld [vmem:[#allocation2] sm:$0xff]
      %v1798 = vld [vmem:[#allocation2 + $0x8] sm:$0xff]
      %v1799 = vld [vmem:[#allocation2 + $0x10] sm:$0xff]
      %v1802 = vunpack.c.l.s4 1966171168
      %v1803 = vunpack.c.0.s8 %v1802
      %v1804 = vlaneseq
      %v1805 = vshrl.u32 %v1804, 7
      %v1806 = vsub.s32 %v1803, %v1805
      %v1807 = vrot.slane %v1735, %v1806
      %v1808 = vcombine.high %v1807, %v1807
      %v1810 = vunpack.c.l.s4 1966171168
      %v1811 = vunpack.c.0.s8 %v1810
      %v1812 = vlaneseq
      %v1813 = vshrl.u32 %v1812, 7
      %v1814 = vsub.s32 %v1811, %v1813
      %v1815 = vrot.slane %v1807, %v1814
      %v1817 = vunpack.c.l.s4 1966171168
      %v1818 = vunpack.c.0.s8 %v1817
      %v1819 = vlaneseq
      %v1820 = vshrl.u32 %v1819, 7
      %v1821 = vsub.s32 %v1818, %v1820
      %v1822 = vrot.slane %v1808, %v1821
      %v1824 = vpack.i.b16 %v1815, %v1815
      %v1826 = vlaneseq
      %v1827 = vshrl.u32 %v1826, 7
      %v1828 = vsub.s32 0, %v1827
      %v1829 = vrot.slane %v1824, %v1828
      %v1831 = vpack.i.b16 %v1822, %v1822
      %v1833 = vlaneseq
      %v1834 = vshrl.u32 %v1833, 7
      %v1835 = vsub.s32 0, %v1834
      %v1836 = vrot.slane %v1831, %v1835
      %1839 = vrot.lane.b32.xlu0 %v1829, 2
      %v1840 = vpop.permute.xlu0 %1839
      %1841 = vrot.lane.b32.xlu0 %v1836, 2
      %v1842 = vpop.permute.xlu0 %1841
      %v1843 = vsel %vm1048, %v1840, %v1842
      %v1847 = vmul.bf16 %v1797, %v1840
      %v1848 = vmul.bf16 %v1798, %v1843
      %v1849 = vmul.bf16 %v1799, %v1842
      %1853 = vrot.lane.b32.xlu0 %v1847, 126
      %v1854 = vpop.permute.xlu0 %1853
      %1855 = vrot.lane.b32.xlu0 %v1848, 126
      %v1856 = vpop.permute.xlu0 %1855
      %1857 = vrot.lane.b32.xlu0 %v1849, 126
      %v1858 = vpop.permute.xlu0 %1857
      %v1859 = vsel %vm1065, %v1854, %v1856
      %v1860 = vsel %vm1065, %v1856, %v1858
      %1863 = vst [vmem:[#allocation5 + $0x20] sm:$0xff] %v1859
      %1864 = vst [vmem:[#allocation5 + $0x28] sm:$0xff] %v1860
      %v1865 = vld [vmem:[#allocation2] sm:$0xff]
      %v1866 = vld [vmem:[#allocation2 + $0x8] sm:$0xff]
      %v1867 = vld [vmem:[#allocation2 + $0x10] sm:$0xff]
      %1870 = vrot.lane.b32.xlu0 %v1767, 16
      %v1871 = vpop.permute.xlu0 %1870
      %1872 = vrot.lane.b32.xlu0 %v1774, 16
      %v1873 = vpop.permute.xlu0 %1872
      %v1874 = vsel %vm1081, %v1871, %v1873
      %v1878 = vmul.bf16 %v1865, %v1871
      %v1879 = vmul.bf16 %v1866, %v1874
      %v1880 = vmul.bf16 %v1867, %v1873
      %1884 = vrot.lane.b32.xlu0 %v1878, 112
      %v1885 = vpop.permute.xlu0 %1884
      %1886 = vrot.lane.b32.xlu0 %v1879, 112
      %v1887 = vpop.permute.xlu0 %1886
      %1888 = vrot.lane.b32.xlu0 %v1880, 112
      %v1889 = vpop.permute.xlu0 %1888
      %v1890 = vsel %vm1098, %v1885, %v1887
      %v1891 = vsel %vm1098, %v1887, %v1889
      %1894 = vst [vmem:[#allocation5 + $0x30] sm:$0xff] %v1890
      %1895 = vst [vmem:[#allocation5 + $0x38] sm:$0xff] %v1891
      %v1896 = vld [vmem:[#allocation2] sm:$0xff]
      %v1897 = vld [vmem:[#allocation2 + $0x8] sm:$0xff]
      %v1898 = vld [vmem:[#allocation2 + $0x10] sm:$0xff]
      %1902 = vrot.lane.b32.xlu0 %v1896, 111
      %v1903 = vpop.permute.xlu0 %1902
      %1904 = vrot.lane.b32.xlu0 %v1897, 111
      %v1905 = vpop.permute.xlu0 %1904
      %1906 = vrot.lane.b32.xlu0 %v1898, 111
      %v1907 = vpop.permute.xlu0 %1906
      %v1908 = vsel %vm1117, %v1903, %v1905
      %v1909 = vsel %vm1117, %v1905, %v1907
      %1912 = vst [vmem:[#allocation5 + $0x40] sm:$0xff] %v1908
      %1913 = vst [vmem:[#allocation5 + $0x48] sm:$0xff] %v1909
      %v1914 = vld [vmem:[#allocation2] sm:$0xff]
      %v1915 = vld [vmem:[#allocation2 + $0x8] sm:$0xff]
      %v1916 = vld [vmem:[#allocation2 + $0x10] sm:$0xff]
      %1917 = vrot.lane.b32.xlu0 %v1829, 18
      %v1918 = vpop.permute.xlu0 %1917
      %1919 = vrot.lane.b32.xlu0 %v1836, 18
      %v1920 = vpop.permute.xlu0 %1919
      %v1921 = vsel %vm1131, %v1918, %v1920
      %v1925 = vmul.bf16 %v1914, %v1918
      %v1926 = vmul.bf16 %v1915, %v1921
      %v1927 = vmul.bf16 %v1916, %v1920
      %1931 = vrot.lane.b32.xlu0 %v1925, 110
      %v1932 = vpop.permute.xlu0 %1931
      %1933 = vrot.lane.b32.xlu0 %v1926, 110
      %v1934 = vpop.permute.xlu0 %1933
      %1935 = vrot.lane.b32.xlu0 %v1927, 110
      %v1936 = vpop.permute.xlu0 %1935
      %v1937 = vsel %vm1148, %v1932, %v1934
      %v1938 = vsel %vm1148, %v1934, %v1936
      %1941 = vst [vmem:[#allocation5 + $0x50] sm:$0xff] %v1937
      %1942 = vst [vmem:[#allocation5 + $0x58] sm:$0xff] %v1938
      %v1943 = vld [vmem:[#allocation2] sm:$0xff]
      %v1944 = vld [vmem:[#allocation2 + $0x8] sm:$0xff]
      %v1945 = vld [vmem:[#allocation2 + $0x10] sm:$0xff]
      %1946 = vrot.lane.b32.xlu0 %v1767, 32
      %v1947 = vpop.permute.xlu0 %1946
      %1948 = vrot.lane.b32.xlu0 %v1774, 32
      %v1949 = vpop.permute.xlu0 %1948
      %v1950 = vsel %vm1162, %v1947, %v1949
      %v1954 = vmul.bf16 %v1943, %v1947
      %v1955 = vmul.bf16 %v1944, %v1950
      %v1956 = vmul.bf16 %v1945, %v1949
      %1960 = vrot.lane.b32.xlu0 %v1954, 96
      %v1961 = vpop.permute.xlu0 %1960
      %1962 = vrot.lane.b32.xlu0 %v1955, 96
      %v1963 = vpop.permute.xlu0 %1962
      %1964 = vrot.lane.b32.xlu0 %v1956, 96
      %v1965 = vpop.permute.xlu0 %1964
      %v1966 = vsel %vm1179, %v1961, %v1963
      %v1967 = vsel %vm1179, %v1963, %v1965
      %1970 = vst [vmem:[#allocation5 + $0x60] sm:$0xff] %v1966
      %1971 = vst [vmem:[#allocation5 + $0x68] sm:$0xff] %v1967
      %v1972 = vld [vmem:[#allocation2] sm:$0xff]
      %v1973 = vld [vmem:[#allocation2 + $0x8] sm:$0xff]
      %v1974 = vld [vmem:[#allocation2 + $0x10] sm:$0xff]
      %1978 = vrot.lane.b32.xlu0 %v1972, 95
      %v1979 = vpop.permute.xlu0 %1978
      %1980 = vrot.lane.b32.xlu0 %v1973, 95
      %v1981 = vpop.permute.xlu0 %1980
      %1982 = vrot.lane.b32.xlu0 %v1974, 95
      %v1983 = vpop.permute.xlu0 %1982
      %v1984 = vsel %vm1198, %v1979, %v1981
      %v1985 = vsel %vm1198, %v1981, %v1983
      %1988 = vst [vmem:[#allocation5 + $0x70] sm:$0xff] %v1984
      %1989 = vst [vmem:[#allocation5 + $0x78] sm:$0xff] %v1985
      %v1990 = vld [vmem:[#allocation2] sm:$0xff]
      %v1991 = vld [vmem:[#allocation2 + $0x8] sm:$0xff]
      %v1992 = vld [vmem:[#allocation2 + $0x10] sm:$0xff]
      %1993 = vrot.lane.b32.xlu0 %v1829, 34
      %v1994 = vpop.permute.xlu0 %1993
      %1995 = vrot.lane.b32.xlu0 %v1836, 34
      %v1996 = vpop.permute.xlu0 %1995
      %v1997 = vsel %vm1212, %v1994, %v1996
      %v2001 = vmul.bf16 %v1990, %v1994
      %v2002 = vmul.bf16 %v1991, %v1997
      %v2003 = vmul.bf16 %v1992, %v1996
      %2007 = vrot.lane.b32.xlu0 %v2001, 94
      %v2008 = vpop.permute.xlu0 %2007
      %2009 = vrot.lane.b32.xlu0 %v2002, 94
      %v2010 = vpop.permute.xlu0 %2009
      %2011 = vrot.lane.b32.xlu0 %v2003, 94
      %v2012 = vpop.permute.xlu0 %2011
      %v2013 = vsel %vm1229, %v2008, %v2010
      %v2014 = vsel %vm1229, %v2010, %v2012
      %2017 = vst [vmem:[#allocation5 + $0x80] sm:$0xff] %v2013
      %2018 = vst [vmem:[#allocation5 + $0x88] sm:$0xff] %v2014
      %v2019 = vld [vmem:[%s27] sm:$0xff]
      %v2020 = vld [vmem:[%s27 + $0x8] sm:$0xff]
      %v2021 = vld [vmem:[#allocation5] sm:$0xff]
      %v2022 = vld [vmem:[#allocation5 + $0x8] sm:$0xff]
      %v2023 = vld [vmem:[#allocation5 + $0x10] sm:$0xff]
      %v2024 = vld [vmem:[#allocation5 + $0x18] sm:$0xff]
      %v2025 = vld [vmem:[#allocation5 + $0x20] sm:$0xff]
      %v2026 = vld [vmem:[#allocation5 + $0x28] sm:$0xff]
      %v2027 = vld [vmem:[#allocation5 + $0x30] sm:$0xff]
      %v2028 = vld [vmem:[#allocation5 + $0x38] sm:$0xff]
      %v2029 = vld [vmem:[#allocation5 + $0x40] sm:$0xff]
      %v2030 = vld [vmem:[#allocation5 + $0x48] sm:$0xff]
      %v2031 = vld [vmem:[#allocation5 + $0x50] sm:$0xff]
      %v2032 = vld [vmem:[#allocation5 + $0x58] sm:$0xff]
      %v2033 = vld [vmem:[#allocation5 + $0x60] sm:$0xff]
      %v2034 = vld [vmem:[#allocation5 + $0x68] sm:$0xff]
      %v2035 = vld [vmem:[#allocation5 + $0x70] sm:$0xff]
      %v2036 = vld [vmem:[#allocation5 + $0x78] sm:$0xff]
      %v2037 = vld [vmem:[#allocation5 + $0x80] sm:$0xff]
      %v2038 = vld [vmem:[#allocation5 + $0x88] sm:$0xff]
      %v2039 = vld [vmem:[%s29] sm:$0xff]
      %v2040 = vld [vmem:[%s29 + $0x8] sm:$0xff]
      %2042 = vset.pattern.permute.xlu0 0
      %2043 = vperm.xlu0 %2042, %v2039
      %v2044 = vpop.permute.xlu0 %2043
      %2047 = vset.pattern.permute.xlu0 0
      %2048 = vperm.xlu0 %2047, %v2040
      %v2049 = vpop.permute.xlu0 %2048
      %v2053 = vunpack.c.l.b16 %v2019
      %v2054 = vunpack.c.h.b16 %v2019
      %v2055 = vunpack.c.l.b16 %v2020
      %v2056 = vunpack.c.h.b16 %v2020
      %v2057 = vpack.c.b16 %v2055, %v2053
      %v2058 = vpack.c.b16 %v2056, %v2054
      %v2061 = vsel %vm1277, %v2058, 0
      %2063 = vmatprep.subr.bf16.mxu0 %v2022
      %2064 = vmatpush1.bf16.msra.mxu0 %v2021
      %2065 = vmatprep.subr.bf16.mxu0 %v2024
      %2066 = vmatpush1.bf16.msra.mxu0 %v2023
      %2067 = vmatprep.subr.bf16.mxu0 %v2026
      %2068 = vmatpush1.bf16.msra.mxu0 %v2025
      %2069 = vmatprep.subr.bf16.mxu0 %v2028
      %2070 = vmatpush1.bf16.msra.mxu0 %v2027
      %2071 = vmatprep.subr.bf16.mxu0 %v2030
      %2072 = vmatpush1.bf16.msra.mxu0 %v2029
      %2073 = vmatprep.subr.bf16.mxu0 %v2032
      %2074 = vmatpush1.bf16.msra.mxu0 %v2031
      %2075 = vmatprep.subr.bf16.mxu0 %v2034
      %2076 = vmatpush1.bf16.msra.mxu0 %v2033
      %2077 = vmatprep.subr.bf16.mxu0 %v2036
      %2078 = vmatpush1.bf16.msra.mxu0 %v2035
      %2079 = vmatprep.subr.bf16.mxu0 %v2038
      %2080 = vmatpush1.bf16.msra.mxu0 %v2037
      %2081 = vmatprep.subr.bf16.mxu0 0
      %2082 = vmatpush1.bf16.msra.mxu0 0
      %2083 = vmatprep.subr.bf16.mxu0 0
      %2084 = vmatpush1.bf16.msra.mxu0 0
      %2085 = vmatprep.subr.bf16.mxu0 0
      %2086 = vmatpush1.bf16.msra.mxu0 0
      %2087 = vmatprep.subr.bf16.mxu0 0
      %2088 = vmatpush1.bf16.msra.mxu0 0
      %2089 = vmatprep.subr.bf16.mxu0 0
      %2090 = vmatpush1.bf16.msra.mxu0 0
      %2091 = vmatprep.subr.bf16.mxu0 0
      %2092 = vmatpush1.bf16.msra.mxu0 0
      %2093 = vmatprep.subr.bf16.mxu0 0
      %2094 = vmatpush1.bf16.msra.mxu0 0
      %2095 = vmatprep.mubr.bf16.mxu0 %v2061
      %2096 = vmatmul.mubr.bf16.gmra.mrb[0].mxu0 %v2057
      %v2097 = vpop.f32.mrb[0].mxu0
      %v2098 = vadd.f32 %v2044, %v2097
      %v2099 = vpop.f32.mrb[0].mxu0
      %v2100 = vadd.f32 %v2044, %v2099
      %v2101 = vpop.f32.mrb[0].mxu0
      %v2102 = vadd.f32 %v2049, %v2101
      %v2103 = vpop.f32.mrb[0].mxu0
      %v2104 = vadd.f32 %v2049, %v2103
      %2105 = vdwg.mxu0
      %v2106 = vadd.f32 %v2098, %v1324
      %v2107 = vadd.f32 %v2100, %v1325
      %v2108 = vadd.f32 %v2102, %v1326
      %v2109 = vadd.f32 %v2104, %v1327
      %v2110 = vmax.f32 %v2106, 0.0
      %v2111 = vmax.f32 %v2107, 0.0
      %v2112 = vmax.f32 %v2108, 0.0
      %v2113 = vmax.f32 %v2109, 0.0
      %v2114 = vpack.c.bf16 %v2112, %v2110
      %v2115 = vpack.c.bf16 %v2113, %v2111
      %2118 = vrot.lane.b32.xlu0 %v2114, 17
      %v2119 = vpop.permute.xlu0 %2118
      %2120 = vrot.lane.b32.xlu0 %v2115, 17
      %v2121 = vpop.permute.xlu0 %2120
      %v2122 = vsel %vm928, %v2119, %v2121
      %2126 = vst.msk [vmem:[#allocation2] sm:$0xff] %vm933, %v2119
      %2127 = vst [vmem:[#allocation2 + $0x8] sm:$0xff] %v2122
      %2128 = vst.msk [vmem:[#allocation2 + $0x10] sm:$0xff] %vm936, %v2121
      %v2129 = vld [vmem:[%s3] sm:$0x3]
      %v2130 = vld [vmem:[%s5] sm:$0x3]
      %v2131 = vld [vmem:[#allocation2] sm:$0xff]
      %v2132 = vld [vmem:[#allocation2 + $0x8] sm:$0xff]
      %v2135 = vunpack.c.l.s4 1966171168
      %v2136 = vunpack.c.0.s8 %v2135
      %v2137 = vlaneseq
      %v2138 = vshrl.u32 %v2137, 7
      %v2139 = vsub.s32 %v2136, %v2138
      %v2140 = vrot.slane %v2129, %v2139
      %v2141 = vcombine.high %v2140, %v2140
      %v2143 = vunpack.c.l.s4 1966171168
      %v2144 = vunpack.c.0.s8 %v2143
      %v2145 = vlaneseq
      %v2146 = vshrl.u32 %v2145, 7
      %v2147 = vsub.s32 %v2144, %v2146
      %v2148 = vrot.slane %v2140, %v2147
      %v2150 = vunpack.c.l.s4 1966171168
      %v2151 = vunpack.c.0.s8 %v2150
      %v2152 = vlaneseq
      %v2153 = vshrl.u32 %v2152, 7
      %v2154 = vsub.s32 %v2151, %v2153
      %v2155 = vrot.slane %v2141, %v2154
      %v2157 = vpack.i.b16 %v2148, %v2148
      %v2159 = vlaneseq
      %v2160 = vshrl.u32 %v2159, 7
      %v2161 = vsub.s32 0, %v2160
      %v2162 = vrot.slane %v2157, %v2161
      %v2164 = vpack.i.b16 %v2155, %v2155
      %v2166 = vlaneseq
      %v2167 = vshrl.u32 %v2166, 7
      %v2168 = vsub.s32 0, %v2167
      %v2169 = vrot.slane %v2164, %v2168
      %v2170 = vmul.bf16 %v2131, %v2162
      %v2171 = vmul.bf16 %v2132, %v2169
      %2172 = vst [vmem:[#allocation5] sm:$0xff] %v2170
      %2173 = vst [vmem:[#allocation5 + $0x8] sm:$0xff] %v2171
      %v2174 = vld [vmem:[#allocation2] sm:$0xff]
      %v2175 = vld [vmem:[#allocation2 + $0x8] sm:$0xff]
      %v2176 = vld [vmem:[#allocation2 + $0x10] sm:$0xff]
      %2180 = vrot.lane.b32.xlu0 %v2174, 127
      %v2181 = vpop.permute.xlu0 %2180
      %2182 = vrot.lane.b32.xlu0 %v2175, 127
      %v2183 = vpop.permute.xlu0 %2182
      %2184 = vrot.lane.b32.xlu0 %v2176, 127
      %v2185 = vpop.permute.xlu0 %2184
      %v2186 = vsel %vm995, %v2181, %v2183
      %v2187 = vsel %vm995, %v2183, %v2185
      %2190 = vst [vmem:[#allocation5 + $0x10] sm:$0xff] %v2186
      %2191 = vst [vmem:[#allocation5 + $0x18] sm:$0xff] %v2187
      %v2192 = vld [vmem:[#allocation2] sm:$0xff]
      %v2193 = vld [vmem:[#allocation2 + $0x8] sm:$0xff]
      %v2194 = vld [vmem:[#allocation2 + $0x10] sm:$0xff]
      %v2197 = vunpack.c.l.s4 1966171168
      %v2198 = vunpack.c.0.s8 %v2197
      %v2199 = vlaneseq
      %v2200 = vshrl.u32 %v2199, 7
      %v2201 = vsub.s32 %v2198, %v2200
      %v2202 = vrot.slane %v2130, %v2201
      %v2203 = vcombine.high %v2202, %v2202
      %v2205 = vunpack.c.l.s4 1966171168
      %v2206 = vunpack.c.0.s8 %v2205
      %v2207 = vlaneseq
      %v2208 = vshrl.u32 %v2207, 7
      %v2209 = vsub.s32 %v2206, %v2208
      %v2210 = vrot.slane %v2202, %v2209
      %v2212 = vunpack.c.l.s4 1966171168
      %v2213 = vunpack.c.0.s8 %v2212
      %v2214 = vlaneseq
      %v2215 = vshrl.u32 %v2214, 7
      %v2216 = vsub.s32 %v2213, %v2215
      %v2217 = vrot.slane %v2203, %v2216
      %v2219 = vpack.i.b16 %v2210, %v2210
      %v2221 = vlaneseq
      %v2222 = vshrl.u32 %v2221, 7
      %v2223 = vsub.s32 0, %v2222
      %v2224 = vrot.slane %v2219, %v2223
      %v2226 = vpack.i.b16 %v2217, %v2217
      %v2228 = vlaneseq
      %v2229 = vshrl.u32 %v2228, 7
      %v2230 = vsub.s32 0, %v2229
      %v2231 = vrot.slane %v2226, %v2230
      %2234 = vrot.lane.b32.xlu0 %v2224, 2
      %v2235 = vpop.permute.xlu0 %2234
      %2236 = vrot.lane.b32.xlu0 %v2231, 2
      %v2237 = vpop.permute.xlu0 %2236
      %v2238 = vsel %vm1048, %v2235, %v2237
      %v2242 = vmul.bf16 %v2192, %v2235
      %v2243 = vmul.bf16 %v2193, %v2238
      %v2244 = vmul.bf16 %v2194, %v2237
      %2248 = vrot.lane.b32.xlu0 %v2242, 126
      %v2249 = vpop.permute.xlu0 %2248
      %2250 = vrot.lane.b32.xlu0 %v2243, 126
      %v2251 = vpop.permute.xlu0 %2250
      %2252 = vrot.lane.b32.xlu0 %v2244, 126
      %v2253 = vpop.permute.xlu0 %2252
      %v2254 = vsel %vm1065, %v2249, %v2251
      %v2255 = vsel %vm1065, %v2251, %v2253
      %2258 = vst [vmem:[#allocation5 + $0x20] sm:$0xff] %v2254
      %2259 = vst [vmem:[#allocation5 + $0x28] sm:$0xff] %v2255
      %v2260 = vld [vmem:[#allocation2] sm:$0xff]
      %v2261 = vld [vmem:[#allocation2 + $0x8] sm:$0xff]
      %v2262 = vld [vmem:[#allocation2 + $0x10] sm:$0xff]
      %2265 = vrot.lane.b32.xlu0 %v2162, 16
      %v2266 = vpop.permute.xlu0 %2265
      %2267 = vrot.lane.b32.xlu0 %v2169, 16
      %v2268 = vpop.permute.xlu0 %2267
      %v2269 = vsel %vm1081, %v2266, %v2268
      %v2273 = vmul.bf16 %v2260, %v2266
      %v2274 = vmul.bf16 %v2261, %v2269
      %v2275 = vmul.bf16 %v2262, %v2268
      %2279 = vrot.lane.b32.xlu0 %v2273, 112
      %v2280 = vpop.permute.xlu0 %2279
      %2281 = vrot.lane.b32.xlu0 %v2274, 112
      %v2282 = vpop.permute.xlu0 %2281
      %2283 = vrot.lane.b32.xlu0 %v2275, 112
      %v2284 = vpop.permute.xlu0 %2283
      %v2285 = vsel %vm1098, %v2280, %v2282
      %v2286 = vsel %vm1098, %v2282, %v2284
      %2289 = vst [vmem:[#allocation5 + $0x30] sm:$0xff] %v2285
      %2290 = vst [vmem:[#allocation5 + $0x38] sm:$0xff] %v2286
      %v2291 = vld [vmem:[#allocation2] sm:$0xff]
      %v2292 = vld [vmem:[#allocation2 + $0x8] sm:$0xff]
      %v2293 = vld [vmem:[#allocation2 + $0x10] sm:$0xff]
      %2297 = vrot.lane.b32.xlu0 %v2291, 111
      %v2298 = vpop.permute.xlu0 %2297
      %2299 = vrot.lane.b32.xlu0 %v2292, 111
      %v2300 = vpop.permute.xlu0 %2299
      %2301 = vrot.lane.b32.xlu0 %v2293, 111
      %v2302 = vpop.permute.xlu0 %2301
      %v2303 = vsel %vm1117, %v2298, %v2300
      %v2304 = vsel %vm1117, %v2300, %v2302
      %2307 = vst [vmem:[#allocation5 + $0x40] sm:$0xff] %v2303
      %2308 = vst [vmem:[#allocation5 + $0x48] sm:$0xff] %v2304
      %v2309 = vld [vmem:[#allocation2] sm:$0xff]
      %v2310 = vld [vmem:[#allocation2 + $0x8] sm:$0xff]
      %v2311 = vld [vmem:[#allocation2 + $0x10] sm:$0xff]
      %2312 = vrot.lane.b32.xlu0 %v2224, 18
      %v2313 = vpop.permute.xlu0 %2312
      %2314 = vrot.lane.b32.xlu0 %v2231, 18
      %v2315 = vpop.permute.xlu0 %2314
      %v2316 = vsel %vm1131, %v2313, %v2315
      %v2320 = vmul.bf16 %v2309, %v2313
      %v2321 = vmul.bf16 %v2310, %v2316
      %v2322 = vmul.bf16 %v2311, %v2315
      %2326 = vrot.lane.b32.xlu0 %v2320, 110
      %v2327 = vpop.permute.xlu0 %2326
      %2328 = vrot.lane.b32.xlu0 %v2321, 110
      %v2329 = vpop.permute.xlu0 %2328
      %2330 = vrot.lane.b32.xlu0 %v2322, 110
      %v2331 = vpop.permute.xlu0 %2330
      %v2332 = vsel %vm1148, %v2327, %v2329
      %v2333 = vsel %vm1148, %v2329, %v2331
      %2336 = vst [vmem:[#allocation5 + $0x50] sm:$0xff] %v2332
      %2337 = vst [vmem:[#allocation5 + $0x58] sm:$0xff] %v2333
      %v2338 = vld [vmem:[#allocation2] sm:$0xff]
      %v2339 = vld [vmem:[#allocation2 + $0x8] sm:$0xff]
      %v2340 = vld [vmem:[#allocation2 + $0x10] sm:$0xff]
      %2341 = vrot.lane.b32.xlu0 %v2162, 32
      %v2342 = vpop.permute.xlu0 %2341
      %2343 = vrot.lane.b32.xlu0 %v2169, 32
      %v2344 = vpop.permute.xlu0 %2343
      %v2345 = vsel %vm1162, %v2342, %v2344
      %v2349 = vmul.bf16 %v2338, %v2342
      %v2350 = vmul.bf16 %v2339, %v2345
      %v2351 = vmul.bf16 %v2340, %v2344
      %2355 = vrot.lane.b32.xlu0 %v2349, 96
      %v2356 = vpop.permute.xlu0 %2355
      %2357 = vrot.lane.b32.xlu0 %v2350, 96
      %v2358 = vpop.permute.xlu0 %2357
      %2359 = vrot.lane.b32.xlu0 %v2351, 96
      %v2360 = vpop.permute.xlu0 %2359
      %v2361 = vsel %vm1179, %v2356, %v2358
      %v2362 = vsel %vm1179, %v2358, %v2360
      %2365 = vst [vmem:[#allocation5 + $0x60] sm:$0xff] %v2361
      %2366 = vst [vmem:[#allocation5 + $0x68] sm:$0xff] %v2362
      %v2367 = vld [vmem:[#allocation2] sm:$0xff]
      %v2368 = vld [vmem:[#allocation2 + $0x8] sm:$0xff]
      %v2369 = vld [vmem:[#allocation2 + $0x10] sm:$0xff]
      %2373 = vrot.lane.b32.xlu0 %v2367, 95
      %v2374 = vpop.permute.xlu0 %2373
      %2375 = vrot.lane.b32.xlu0 %v2368, 95
      %v2376 = vpop.permute.xlu0 %2375
      %2377 = vrot.lane.b32.xlu0 %v2369, 95
      %v2378 = vpop.permute.xlu0 %2377
      %v2379 = vsel %vm1198, %v2374, %v2376
      %v2380 = vsel %vm1198, %v2376, %v2378
      %2383 = vst [vmem:[#allocation5 + $0x70] sm:$0xff] %v2379
      %2384 = vst [vmem:[#allocation5 + $0x78] sm:$0xff] %v2380
      %v2385 = vld [vmem:[#allocation2] sm:$0xff]
      %v2386 = vld [vmem:[#allocation2 + $0x8] sm:$0xff]
      %v2387 = vld [vmem:[#allocation2 + $0x10] sm:$0xff]
      %2388 = vrot.lane.b32.xlu0 %v2224, 34
      %v2389 = vpop.permute.xlu0 %2388
      %2390 = vrot.lane.b32.xlu0 %v2231, 34
      %v2391 = vpop.permute.xlu0 %2390
      %v2392 = vsel %vm1212, %v2389, %v2391
      %v2396 = vmul.bf16 %v2385, %v2389
      %v2397 = vmul.bf16 %v2386, %v2392
      %v2398 = vmul.bf16 %v2387, %v2391
      %2402 = vrot.lane.b32.xlu0 %v2396, 94
      %v2403 = vpop.permute.xlu0 %2402
      %2404 = vrot.lane.b32.xlu0 %v2397, 94
      %v2405 = vpop.permute.xlu0 %2404
      %2406 = vrot.lane.b32.xlu0 %v2398, 94
      %v2407 = vpop.permute.xlu0 %2406
      %v2408 = vsel %vm1229, %v2403, %v2405
      %v2409 = vsel %vm1229, %v2405, %v2407
      %2412 = vst [vmem:[#allocation5 + $0x80] sm:$0xff] %v2408
      %2413 = vst [vmem:[#allocation5 + $0x88] sm:$0xff] %v2409
      %v2414 = vld [vmem:[%s31] sm:$0xff]
      %v2415 = vld [vmem:[%s31 + $0x8] sm:$0xff]
      %v2416 = vld [vmem:[%s31 + $0x10] sm:$0xff]
      %v2417 = vld [vmem:[%s31 + $0x18] sm:$0xff]
      %v2418 = vld [vmem:[#allocation5] sm:$0xff]
      %v2419 = vld [vmem:[#allocation5 + $0x8] sm:$0xff]
      %v2420 = vld [vmem:[#allocation5 + $0x10] sm:$0xff]
      %v2421 = vld [vmem:[#allocation5 + $0x18] sm:$0xff]
      %v2422 = vld [vmem:[#allocation5 + $0x20] sm:$0xff]
      %v2423 = vld [vmem:[#allocation5 + $0x28] sm:$0xff]
      %v2424 = vld [vmem:[#allocation5 + $0x30] sm:$0xff]
      %v2425 = vld [vmem:[#allocation5 + $0x38] sm:$0xff]
      %v2426 = vld [vmem:[#allocation5 + $0x40] sm:$0xff]
      %v2427 = vld [vmem:[#allocation5 + $0x48] sm:$0xff]
      %v2428 = vld [vmem:[#allocation5 + $0x50] sm:$0xff]
      %v2429 = vld [vmem:[#allocation5 + $0x58] sm:$0xff]
      %v2430 = vld [vmem:[#allocation5 + $0x60] sm:$0xff]
      %v2431 = vld [vmem:[#allocation5 + $0x68] sm:$0xff]
      %v2432 = vld [vmem:[#allocation5 + $0x70] sm:$0xff]
      %v2433 = vld [vmem:[#allocation5 + $0x78] sm:$0xff]
      %v2434 = vld [vmem:[#allocation5 + $0x80] sm:$0xff]
      %v2435 = vld [vmem:[#allocation5 + $0x88] sm:$0xff]
      %v2436 = vld [vmem:[%s33] sm:$0xff]
      %v2437 = vld [vmem:[%s33 + $0x8] sm:$0xff]
      %v2438 = vld [vmem:[%s33 + $0x10] sm:$0xff]
      %v2439 = vld [vmem:[%s33 + $0x18] sm:$0xff]
      %2441 = vset.pattern.permute.xlu0 0
      %2442 = vperm.xlu0 %2441, %v2436
      %v2443 = vpop.permute.xlu0 %2442
      %2446 = vset.pattern.permute.xlu0 0
      %2447 = vperm.xlu0 %2446, %v2437
      %v2448 = vpop.permute.xlu0 %2447
      %2451 = vset.pattern.permute.xlu0 0
      %2452 = vperm.xlu0 %2451, %v2438
      %v2453 = vpop.permute.xlu0 %2452
      %2456 = vset.pattern.permute.xlu0 0
      %2457 = vperm.xlu0 %2456, %v2439
      %v2458 = vpop.permute.xlu0 %2457
      %v2464 = vunpack.c.l.b16 %v2414
      %v2465 = vunpack.c.h.b16 %v2414
      %v2466 = vunpack.c.l.b16 %v2415
      %v2467 = vunpack.c.h.b16 %v2415
      %v2468 = vunpack.c.l.b16 %v2416
      %v2469 = vunpack.c.h.b16 %v2416
      %v2470 = vunpack.c.l.b16 %v2417
      %v2471 = vunpack.c.h.b16 %v2417
      %v2472 = vpack.c.b16 %v2466, %v2464
      %v2473 = vpack.c.b16 %v2467, %v2465
      %v2474 = vpack.c.b16 %v2470, %v2468
      %v2475 = vpack.c.b16 %v2471, %v2469
      %v2479 = vsel %vm1277, %v2473, 0
      %v2482 = vsel %vm1277, %v2475, 0
      %2484 = vmatprep.subr.bf16.mxu0 %v2419
      %2485 = vmatpush1.bf16.msra.mxu0 %v2418
      %2486 = vmatprep.subr.bf16.mxu0 %v2421
      %2487 = vmatpush1.bf16.msra.mxu0 %v2420
      %2488 = vmatprep.subr.bf16.mxu0 %v2423
      %2489 = vmatpush1.bf16.msra.mxu0 %v2422
      %2490 = vmatprep.subr.bf16.mxu0 %v2425
      %2491 = vmatpush1.bf16.msra.mxu0 %v2424
      %2492 = vmatprep.subr.bf16.mxu0 %v2427
      %2493 = vmatpush1.bf16.msra.mxu0 %v2426
      %2494 = vmatprep.subr.bf16.mxu0 %v2429
      %2495 = vmatpush1.bf16.msra.mxu0 %v2428
      %2496 = vmatprep.subr.bf16.mxu0 %v2431
      %2497 = vmatpush1.bf16.msra.mxu0 %v2430
      %2498 = vmatprep.subr.bf16.mxu0 %v2433
      %2499 = vmatpush1.bf16.msra.mxu0 %v2432
      %2500 = vmatprep.subr.bf16.mxu0 %v2435
      %2501 = vmatpush1.bf16.msra.mxu0 %v2434
      %2502 = vmatprep.subr.bf16.mxu0 0
      %2503 = vmatpush1.bf16.msra.mxu0 0
      %2504 = vmatprep.subr.bf16.mxu0 0
      %2505 = vmatpush1.bf16.msra.mxu0 0
      %2506 = vmatprep.subr.bf16.mxu0 0
      %2507 = vmatpush1.bf16.msra.mxu0 0
      %2508 = vmatprep.subr.bf16.mxu0 0
      %2509 = vmatpush1.bf16.msra.mxu0 0
      %2510 = vmatprep.subr.bf16.mxu0 0
      %2511 = vmatpush1.bf16.msra.mxu0 0
      %2512 = vmatprep.subr.bf16.mxu0 0
      %2513 = vmatpush1.bf16.msra.mxu0 0
      %2514 = vmatprep.subr.bf16.mxu0 0
      %2515 = vmatpush1.bf16.msra.mxu0 0
      %2516 = vmatprep.mubr.bf16.mxu0 %v2479
      %2517 = vmatmul.mubr.bf16.gmra.mrb[0].mxu0 %v2472
      %v2518 = vpop.f32.mrb[0].mxu0
      %v2519 = vadd.f32 %v2443, %v2518
      %v2520 = vpop.f32.mrb[0].mxu0
      %v2521 = vadd.f32 %v2443, %v2520
      %v2522 = vpop.f32.mrb[0].mxu0
      %v2523 = vadd.f32 %v2448, %v2522
      %v2524 = vpop.f32.mrb[0].mxu0
      %v2525 = vadd.f32 %v2448, %v2524
      %2526 = vmatprep.mubr.bf16.mxu0 %v2482
      %2527 = vmatmul.mubr.bf16.gmra.mrb[0].mxu0 %v2474
      %v2528 = vpop.f32.mrb[0].mxu0
      %v2529 = vadd.f32 %v2453, %v2528
      %v2530 = vpop.f32.mrb[0].mxu0
      %v2531 = vadd.f32 %v2453, %v2530
      %v2532 = vpop.f32.mrb[0].mxu0
      %v2533 = vadd.f32 %v2458, %v2532
      %v2534 = vpop.f32.mrb[0].mxu0
      %v2535 = vadd.f32 %v2458, %v2534
      %2536 = vdwg.mxu0
      %v2537 = vmax.f32 %v2519, 0.0
      %v2538 = vmax.f32 %v2521, 0.0
      %v2539 = vmax.f32 %v2523, 0.0
      %v2540 = vmax.f32 %v2525, 0.0
      %v2541 = vmax.f32 %v2529, 0.0
      %v2542 = vmax.f32 %v2531, 0.0
      %v2543 = vmax.f32 %v2533, 0.0
      %v2544 = vmax.f32 %v2535, 0.0
      %v2545 = vpack.c.bf16 %v2539, %v2537
      %v2546 = vpack.c.bf16 %v2540, %v2538
      %v2547 = vpack.c.bf16 %v2543, %v2541
      %v2548 = vpack.c.bf16 %v2544, %v2542
      %v2549 = vld [vmem:[%s15] sm:$0xf]
      %v2550 = vld [vmem:[%s15 + $0x4] sm:$0xf]
      %v2551 = vld [vmem:[%s15 + $0x8] sm:$0xf]
      %v2552 = vld [vmem:[%s15 + $0xc] sm:$0xf]
      %v2553 = vld [vmem:[%s15 + $0x10] sm:$0xf]
      %v2554 = vld [vmem:[%s15 + $0x14] sm:$0xf]
      %v2555 = vld [vmem:[%s15 + $0x18] sm:$0xf]
      %v2556 = vld [vmem:[%s15 + $0x1c] sm:$0xf]
      %v2557 = vld [vmem:[%s15 + $0x20] sm:$0xf]
      %v2558 = vld [vmem:[%s15 + $0x24] sm:$0xf]
      %v2559 = vld [vmem:[%s15 + $0x28] sm:$0xf]
      %v2560 = vld [vmem:[%s15 + $0x2c] sm:$0xf]
      %v2561 = vld [vmem:[%s15 + $0x30] sm:$0xf]
      %v2562 = vld [vmem:[%s15 + $0x34] sm:$0xf]
      %v2563 = vld [vmem:[%s15 + $0x38] sm:$0xf]
      %v2564 = vld [vmem:[%s15 + $0x3c] sm:$0xf]
      %v2565 = vld [vmem:[%s15 + $0x40] sm:$0xf]
      %v2566 = vld [vmem:[%s15 + $0x44] sm:$0xf]
      %v2567 = vld [vmem:[%s15 + $0x48] sm:$0xf]
      %v2568 = vld [vmem:[%s15 + $0x4c] sm:$0xf]
      %v2569 = vld [vmem:[%s15 + $0x50] sm:$0xf]
      %v2570 = vld [vmem:[%s15 + $0x54] sm:$0xf]
      %v2571 = vld [vmem:[%s15 + $0x58] sm:$0xf]
      %v2572 = vld [vmem:[%s15 + $0x5c] sm:$0xf]
      %v2573 = vld [vmem:[%s15 + $0x60] sm:$0xf]
      %v2574 = vld [vmem:[%s15 + $0x64] sm:$0xf]
      %v2575 = vld [vmem:[%s15 + $0x68] sm:$0xf]
      %v2576 = vld [vmem:[%s15 + $0x6c] sm:$0xf]
      %v2577 = vld [vmem:[%s15 + $0x70] sm:$0xf]
      %v2578 = vld [vmem:[%s15 + $0x74] sm:$0xf]
      %v2579 = vld [vmem:[%s15 + $0x78] sm:$0xf]
      %v2580 = vld [vmem:[%s15 + $0x7c] sm:$0xf]
      %v2613 = vunpack.c.l.b16 %v2549
      %v2614 = vunpack.c.l.b16 %v2550
      %v2615 = vunpack.c.l.b16 %v2551
      %v2616 = vunpack.c.l.b16 %v2552
      %v2617 = vunpack.c.l.b16 %v2553
      %v2618 = vunpack.c.l.b16 %v2554
      %v2619 = vunpack.c.l.b16 %v2555
      %v2620 = vunpack.c.l.b16 %v2556
      %v2621 = vunpack.c.l.b16 %v2557
      %v2622 = vunpack.c.l.b16 %v2558
      %v2623 = vunpack.c.l.b16 %v2559
      %v2624 = vunpack.c.l.b16 %v2560
      %v2625 = vunpack.c.l.b16 %v2561
      %v2626 = vunpack.c.l.b16 %v2562
      %v2627 = vunpack.c.l.b16 %v2563
      %v2628 = vunpack.c.l.b16 %v2564
      %v2629 = vunpack.c.l.b16 %v2565
      %v2630 = vunpack.c.l.b16 %v2566
      %v2631 = vunpack.c.l.b16 %v2567
      %v2632 = vunpack.c.l.b16 %v2568
      %v2633 = vunpack.c.l.b16 %v2569
      %v2634 = vunpack.c.l.b16 %v2570
      %v2635 = vunpack.c.l.b16 %v2571
      %v2636 = vunpack.c.l.b16 %v2572
      %v2637 = vunpack.c.l.b16 %v2573
      %v2638 = vunpack.c.l.b16 %v2574
      %v2639 = vunpack.c.l.b16 %v2575
      %v2640 = vunpack.c.l.b16 %v2576
      %v2641 = vunpack.c.l.b16 %v2577
      %v2642 = vunpack.c.l.b16 %v2578
      %v2643 = vunpack.c.l.b16 %v2579
      %v2644 = vunpack.c.l.b16 %v2580
      %v2645 = vpack.c.b16 %v2614, %v2613
      %v2646 = vpack.c.b16 %v2616, %v2615
      %v2647 = vpack.c.b16 %v2618, %v2617
      %v2648 = vpack.c.b16 %v2620, %v2619
      %v2649 = vpack.c.b16 %v2622, %v2621
      %v2650 = vpack.c.b16 %v2624, %v2623
      %v2651 = vpack.c.b16 %v2626, %v2625
      %v2652 = vpack.c.b16 %v2628, %v2627
      %v2653 = vpack.c.b16 %v2630, %v2629
      %v2654 = vpack.c.b16 %v2632, %v2631
      %v2655 = vpack.c.b16 %v2634, %v2633
      %v2656 = vpack.c.b16 %v2636, %v2635
      %v2657 = vpack.c.b16 %v2638, %v2637
      %v2658 = vpack.c.b16 %v2640, %v2639
      %v2659 = vpack.c.b16 %v2642, %v2641
      %v2660 = vpack.c.b16 %v2644, %v2643
      %2677 = vmatprep.subr.bf16.mxu0 0
      %2678 = vmatpush1.bf16.msra.mxu0 %v2645
      %2679 = vmatprep.subr.bf16.mxu0 0
      %2680 = vmatpush1.bf16.msra.mxu0 %v2646
      %2681 = vmatprep.subr.bf16.mxu0 0
      %2682 = vmatpush1.bf16.msra.mxu0 %v2647
      %2683 = vmatprep.subr.bf16.mxu0 0
      %2684 = vmatpush1.bf16.msra.mxu0 %v2648
      %2685 = vmatprep.subr.bf16.mxu0 0
      %2686 = vmatpush1.bf16.msra.mxu0 %v2649
      %2687 = vmatprep.subr.bf16.mxu0 0
      %2688 = vmatpush1.bf16.msra.mxu0 %v2650
      %2689 = vmatprep.subr.bf16.mxu0 0
      %2690 = vmatpush1.bf16.msra.mxu0 %v2651
      %2691 = vmatprep.subr.bf16.mxu0 0
      %2692 = vmatpush1.bf16.msra.mxu0 %v2652
      %2693 = vmatprep.subr.bf16.mxu0 0
      %2694 = vmatpush1.bf16.msra.mxu0 %v2653
      %2695 = vmatprep.subr.bf16.mxu0 0
      %2696 = vmatpush1.bf16.msra.mxu0 %v2654
      %2697 = vmatprep.subr.bf16.mxu0 0
      %2698 = vmatpush1.bf16.msra.mxu0 %v2655
      %2699 = vmatprep.subr.bf16.mxu0 0
      %2700 = vmatpush1.bf16.msra.mxu0 %v2656
      %2701 = vmatprep.subr.bf16.mxu0 0
      %2702 = vmatpush1.bf16.msra.mxu0 %v2657
      %2703 = vmatprep.subr.bf16.mxu0 0
      %2704 = vmatpush1.bf16.msra.mxu0 %v2658
      %2705 = vmatprep.subr.bf16.mxu0 0
      %2706 = vmatpush1.bf16.msra.mxu0 %v2659
      %2707 = vmatprep.subr.bf16.mxu0 0
      %2708 = vmatpush1.bf16.msra.mxu0 %v2660
      %2709 = vmatprep.mubr.bf16.mxu0 %v2546
      %2710 = vmatmul.mubr.bf16.gmra.mrb[0].mxu0 %v2545
      %v2711 = vpop.f32.mrb[0].mxu0
      %v2712 = vadd.f32 0.0, %v2711
      %v2713 = vpop.f32.mrb[0].mxu0
      %v2714 = vpop.f32.mrb[0].mxu0
      %v2715 = vadd.f32 0.0, %v2714
      %v2716 = vpop.f32.mrb[0].mxu0
      %2717 = vmatprep.mubr.bf16.mxu0 %v2548
      %2718 = vmatmul.mubr.bf16.gmra.mrb[0].mxu0 %v2547
      %v2719 = vpop.f32.mrb[0].mxu0
      %v2720 = vadd.f32 0.0, %v2719
      %v2721 = vpop.f32.mrb[0].mxu0
      %v2722 = vpop.f32.mrb[0].mxu0
      %v2723 = vadd.f32 0.0, %v2722
      %v2724 = vpop.f32.mrb[0].mxu0
      %2725 = vdwg.mxu0
      %v2726 = vpack.c.bf16 %v2715, %v2712
      %v2727 = vpack.c.bf16 %v2723, %v2720
      %2730 = vrot.lane.b32.xlu0 %v2726, 9
      %v2731 = vpop.permute.xlu0 %2730
      %2732 = vrot.lane.b32.xlu0 %v2727, 9
      %v2733 = vpop.permute.xlu0 %2732
      %vm2736 = vcmask 597064
      %2737 = vst.msk [vmem:[#allocation3] sm:$0xff] %vm2736, %v2731
      %2738 = vst.msk [vmem:[#allocation3 + $0x8] sm:$0xff] %vm2736, %v2733
      %v2739 = vld [vmem:[%s7] sm:$0x1]
      %v2740 = vld [vmem:[%s9] sm:$0x1]
      %v2741 = vld [vmem:[#allocation3] sm:$0xff]
      %v2742 = vld [vmem:[#allocation3 + $0x8] sm:$0xff]
      %v2744 = vpack.i.b16 %v2739, %v2739
      %v2746 = vlaneseq
      %v2747 = vshrl.u32 %v2746, 7
      %v2748 = vsub.s32 0, %v2747
      %v2749 = vrot.slane %v2744, %v2748
      %v2750 = vmul.bf16 %v2741, %v2749
      %v2751 = vmul.bf16 %v2742, %v2749
      %vm2752 = vcmask 523264
      %2753 = vst.msk [vmem:[#allocation5] sm:$0xff] %vm2752, %v2750
      %2754 = vst.msk [vmem:[#allocation5 + $0x10] sm:$0xff] %vm2752, %v2751
      %v2755 = vld [vmem:[#allocation3] sm:$0xff]
      %v2756 = vld [vmem:[#allocation3 + $0x8] sm:$0xff]
      %2759 = vrot.lane.b32.xlu0 %v2755, 127
      %v2760 = vpop.permute.xlu0 %2759
      %2761 = vrot.lane.b32.xlu0 %v2756, 127
      %v2762 = vpop.permute.xlu0 %2761
      %2765 = vst.msk [vmem:[#allocation5 + $0x20] sm:$0xff] %vm2752, %v2760
      %2766 = vst.msk [vmem:[#allocation5 + $0x30] sm:$0xff] %vm2752, %v2762
      %v2767 = vld [vmem:[#allocation3] sm:$0xff]
      %v2768 = vld [vmem:[#allocation3 + $0x8] sm:$0xff]
      %v2770 = vpack.i.b16 %v2740, %v2740
      %v2772 = vlaneseq
      %v2773 = vshrl.u32 %v2772, 7
      %v2774 = vsub.s32 0, %v2773
      %v2775 = vrot.slane %v2770, %v2774
      %2777 = vrot.lane.b32.xlu0 %v2775, 2
      %v2778 = vpop.permute.xlu0 %2777
      %v2780 = vmul.bf16 %v2767, %v2778
      %v2781 = vmul.bf16 %v2768, %v2778
      %2784 = vrot.lane.b32.xlu0 %v2780, 126
      %v2785 = vpop.permute.xlu0 %2784
      %2786 = vrot.lane.b32.xlu0 %v2781, 126
      %v2787 = vpop.permute.xlu0 %2786
      %2790 = vst.msk [vmem:[#allocation5 + $0x40] sm:$0xff] %vm2752, %v2785
      %2791 = vst.msk [vmem:[#allocation5 + $0x50] sm:$0xff] %vm2752, %v2787
      %v2792 = vld [vmem:[#allocation3] sm:$0xff]
      %v2793 = vld [vmem:[#allocation3 + $0x8] sm:$0xff]
      %2795 = vrot.lane.b32.xlu0 %v2749, 8
      %v2796 = vpop.permute.xlu0 %2795
      %v2798 = vmul.bf16 %v2792, %v2796
      %v2799 = vmul.bf16 %v2793, %v2796
      %2802 = vrot.lane.b32.xlu0 %v2798, 120
      %v2803 = vpop.permute.xlu0 %2802
      %2804 = vrot.lane.b32.xlu0 %v2799, 120
      %v2805 = vpop.permute.xlu0 %2804
      %2808 = vst.msk [vmem:[#allocation5 + $0x60] sm:$0xff] %vm2752, %v2803
      %2809 = vst.msk [vmem:[#allocation5 + $0x70] sm:$0xff] %vm2752, %v2805
      %v2810 = vld [vmem:[#allocation3] sm:$0xff]
      %v2811 = vld [vmem:[#allocation3 + $0x8] sm:$0xff]
      %2814 = vrot.lane.b32.xlu0 %v2810, 119
      %v2815 = vpop.permute.xlu0 %2814
      %2816 = vrot.lane.b32.xlu0 %v2811, 119
      %v2817 = vpop.permute.xlu0 %2816
      %2820 = vst.msk [vmem:[#allocation5 + $0x80] sm:$0xff] %vm2752, %v2815
      %2821 = vst.msk [vmem:[#allocation5 + $0x90] sm:$0xff] %vm2752, %v2817
      %v2822 = vld [vmem:[#allocation3] sm:$0xff]
      %v2823 = vld [vmem:[#allocation3 + $0x8] sm:$0xff]
      %2824 = vrot.lane.b32.xlu0 %v2775, 10
      %v2825 = vpop.permute.xlu0 %2824
      %v2827 = vmul.bf16 %v2822, %v2825
      %v2828 = vmul.bf16 %v2823, %v2825
      %2831 = vrot.lane.b32.xlu0 %v2827, 118
      %v2832 = vpop.permute.xlu0 %2831
      %2833 = vrot.lane.b32.xlu0 %v2828, 118
      %v2834 = vpop.permute.xlu0 %2833
      %2837 = vst.msk [vmem:[#allocation5 + $0xa0] sm:$0xff] %vm2752, %v2832
      %2838 = vst.msk [vmem:[#allocation5 + $0xb0] sm:$0xff] %vm2752, %v2834
      %v2839 = vld [vmem:[#allocation3] sm:$0xff]
      %v2840 = vld [vmem:[#allocation3 + $0x8] sm:$0xff]
      %2841 = vrot.lane.b32.xlu0 %v2749, 16
      %v2842 = vpop.permute.xlu0 %2841
      %v2844 = vmul.bf16 %v2839, %v2842
      %v2845 = vmul.bf16 %v2840, %v2842
      %2848 = vrot.lane.b32.xlu0 %v2844, 112
      %v2849 = vpop.permute.xlu0 %2848
      %2850 = vrot.lane.b32.xlu0 %v2845, 112
      %v2851 = vpop.permute.xlu0 %2850
      %2854 = vst.msk [vmem:[#allocation5 + $0xc0] sm:$0xff] %vm2752, %v2849
      %2855 = vst.msk [vmem:[#allocation5 + $0xd0] sm:$0xff] %vm2752, %v2851
      %v2856 = vld [vmem:[#allocation3] sm:$0xff]
      %v2857 = vld [vmem:[#allocation3 + $0x8] sm:$0xff]
      %2860 = vrot.lane.b32.xlu0 %v2856, 111
      %v2861 = vpop.permute.xlu0 %2860
      %2862 = vrot.lane.b32.xlu0 %v2857, 111
      %v2863 = vpop.permute.xlu0 %2862
      %2866 = vst.msk [vmem:[#allocation5 + $0xe0] sm:$0xff] %vm2752, %v2861
      %2867 = vst.msk [vmem:[#allocation5 + $0xf0] sm:$0xff] %vm2752, %v2863
      %v2868 = vld [vmem:[#allocation3] sm:$0xff]
      %v2869 = vld [vmem:[#allocation3 + $0x8] sm:$0xff]
      %2870 = vrot.lane.b32.xlu0 %v2775, 18
      %v2871 = vpop.permute.xlu0 %2870
      %v2873 = vmul.bf16 %v2868, %v2871
      %v2874 = vmul.bf16 %v2869, %v2871
      %2877 = vrot.lane.b32.xlu0 %v2873, 110
      %v2878 = vpop.permute.xlu0 %2877
      %2879 = vrot.lane.b32.xlu0 %v2874, 110
      %v2880 = vpop.permute.xlu0 %2879
      %2883 = vst.msk [vmem:[#allocation5 + $0x100] sm:$0xff] %vm2752, %v2878
      %2884 = vst.msk [vmem:[#allocation5 + $0x110] sm:$0xff] %vm2752, %v2880
      %v2885 = vld [vmem:[%s35] sm:$0xff]
      %v2886 = vld [vmem:[%s35 + $0x8] sm:$0xf]
      %v2887 = vld [vmem:[%s35 + $0xc] sm:$0xff]
      %v2888 = vld [vmem:[%s35 + $0x14] sm:$0xf]
      %v2889 = vld [vmem:[%s35 + $0x18] sm:$0xff]
      %v2890 = vld [vmem:[%s35 + $0x20] sm:$0xf]
      %v2891 = vld [vmem:[%s35 + $0x24] sm:$0xff]
      %v2892 = vld [vmem:[%s35 + $0x2c] sm:$0xf]
      %v2893 = vld [vmem:[#allocation5] sm:$0xff]
      %v2894 = vld [vmem:[#allocation5 + $0x10] sm:$0xff]
      %v2895 = vld [vmem:[#allocation5 + $0x20] sm:$0xff]
      %v2896 = vld [vmem:[#allocation5 + $0x30] sm:$0xff]
      %v2897 = vld [vmem:[#allocation5 + $0x40] sm:$0xff]
      %v2898 = vld [vmem:[#allocation5 + $0x50] sm:$0xff]
      %v2899 = vld [vmem:[#allocation5 + $0x60] sm:$0xff]
      %v2900 = vld [vmem:[#allocation5 + $0x70] sm:$0xff]
      %v2901 = vld [vmem:[#allocation5 + $0x80] sm:$0xff]
      %v2902 = vld [vmem:[#allocation5 + $0x90] sm:$0xff]
      %v2903 = vld [vmem:[#allocation5 + $0xa0] sm:$0xff]
      %v2904 = vld [vmem:[#allocation5 + $0xb0] sm:$0xff]
      %v2905 = vld [vmem:[#allocation5 + $0xc0] sm:$0xff]
      %v2906 = vld [vmem:[#allocation5 + $0xd0] sm:$0xff]
      %v2907 = vld [vmem:[#allocation5 + $0xe0] sm:$0xff]
      %v2908 = vld [vmem:[#allocation5 + $0xf0] sm:$0xff]
      %v2909 = vld [vmem:[#allocation5 + $0x100] sm:$0xff]
      %v2910 = vld [vmem:[#allocation5 + $0x110] sm:$0xff]
      %v2911 = vld [vmem:[%s37] sm:$0xff]
      %v2912 = vld [vmem:[%s37 + $0x8] sm:$0xff]
      %v2913 = vld [vmem:[%s37 + $0x10] sm:$0xff]
      %v2914 = vld [vmem:[%s37 + $0x18] sm:$0xff]
      %2916 = vset.pattern.permute.xlu0 0
      %2917 = vperm.xlu0 %2916, %v2911
      %v2918 = vpop.permute.xlu0 %2917
      %2921 = vset.pattern.permute.xlu0 0
      %2922 = vperm.xlu0 %2921, %v2912
      %v2923 = vpop.permute.xlu0 %2922
      %2926 = vset.pattern.permute.xlu0 0
      %2927 = vperm.xlu0 %2926, %v2913
      %v2928 = vpop.permute.xlu0 %2927
      %2931 = vset.pattern.permute.xlu0 0
      %2932 = vperm.xlu0 %2931, %v2914
      %v2933 = vpop.permute.xlu0 %2932
      %v2943 = vunpack.c.l.b16 %v2885
      %v2944 = vunpack.c.h.b16 %v2885
      %v2945 = vunpack.c.l.b16 %v2886
      %v2946 = vunpack.c.l.b16 %v2887
      %v2947 = vunpack.c.h.b16 %v2887
      %v2948 = vunpack.c.l.b16 %v2888
      %v2949 = vunpack.c.l.b16 %v2889
      %v2950 = vunpack.c.h.b16 %v2889
      %v2951 = vunpack.c.l.b16 %v2890
      %v2952 = vunpack.c.l.b16 %v2891
      %v2953 = vunpack.c.h.b16 %v2891
      %v2954 = vunpack.c.l.b16 %v2892
      %v2955 = vpack.c.b16 %v2946, %v2943
      %v2956 = vpack.c.b16 %v2947, %v2944
      %v2957 = vpack.c.b16 %v2948, %v2945
      %v2958 = vpack.c.b16 %v2952, %v2949
      %v2959 = vpack.c.b16 %v2953, %v2950
      %v2960 = vpack.c.b16 %v2954, %v2951
      %vm2965 = vcmask 261120
      %v2967 = vsel %vm2965, %v2957, 0
      %v2970 = vsel %vm2965, %v2960, 0
      %2972 = vmatprep.subr.bf16.mxu0 0
      %2973 = vmatpush1.bf16.msra.mxu0 %v2893
      %2974 = vmatprep.subr.bf16.mxu0 0
      %2975 = vmatpush1.bf16.msra.mxu0 %v2894
      %2976 = vmatprep.subr.bf16.mxu0 0
      %2977 = vmatpush1.bf16.msra.mxu0 %v2895
      %2978 = vmatprep.subr.bf16.mxu0 0
      %2979 = vmatpush1.bf16.msra.mxu0 %v2896
      %2980 = vmatprep.subr.bf16.mxu0 0
      %2981 = vmatpush1.bf16.msra.mxu0 %v2897
      %2982 = vmatprep.subr.bf16.mxu0 0
      %2983 = vmatpush1.bf16.msra.mxu0 %v2898
      %2984 = vmatprep.subr.bf16.mxu0 0
      %2985 = vmatpush1.bf16.msra.mxu0 %v2899
      %2986 = vmatprep.subr.bf16.mxu0 0
      %2987 = vmatpush1.bf16.msra.mxu0 %v2900
      %2988 = vmatprep.subr.bf16.mxu0 0
      %2989 = vmatpush1.bf16.msra.mxu0 %v2901
      %2990 = vmatprep.subr.bf16.mxu0 0
      %2991 = vmatpush1.bf16.msra.mxu0 %v2902
      %2992 = vmatprep.subr.bf16.mxu0 0
      %2993 = vmatpush1.bf16.msra.mxu0 %v2903
      %2994 = vmatprep.subr.bf16.mxu0 0
      %2995 = vmatpush1.bf16.msra.mxu0 %v2904
      %2996 = vmatprep.subr.bf16.mxu0 0
      %2997 = vmatpush1.bf16.msra.mxu0 %v2905
      %2998 = vmatprep.subr.bf16.mxu0 0
      %2999 = vmatpush1.bf16.msra.mxu0 %v2906
      %3000 = vmatprep.subr.bf16.mxu0 0
      %3001 = vmatpush1.bf16.msra.mxu0 %v2907
      %3002 = vmatprep.subr.bf16.mxu0 0
      %3003 = vmatpush1.bf16.msra.mxu0 %v2908
      %3004 = vmatprep.mubr.bf16.mxu0 %v2956
      %3005 = vmatmul.mubr.bf16.gmra.mrb[0].mxu0 %v2955
      %v3006 = vpop.f32.mrb[0].mxu0
      %v3007 = vadd.f32 %v2918, %v3006
      %v3008 = vpop.f32.mrb[0].mxu0
      %v3009 = vpop.f32.mrb[0].mxu0
      %v3010 = vadd.f32 %v2923, %v3009
      %v3011 = vpop.f32.mrb[0].mxu0
      %3012 = vmatprep.mubr.bf16.mxu0 %v2959
      %3013 = vmatmul.mubr.bf16.gmra.mrb[0].mxu0 %v2958
      %v3014 = vpop.f32.mrb[0].mxu0
      %v3015 = vadd.f32 %v2928, %v3014
      %v3016 = vpop.f32.mrb[0].mxu0
      %v3017 = vpop.f32.mrb[0].mxu0
      %v3018 = vadd.f32 %v2933, %v3017
      %v3019 = vpop.f32.mrb[0].mxu0
      %3020 = vdwg.mxu0
      %3021 = vmatprep.subr.bf16.mxu0 0
      %3022 = vmatpush1.bf16.msra.mxu0 %v2909
      %3023 = vmatprep.subr.bf16.mxu0 0
      %3024 = vmatpush1.bf16.msra.mxu0 %v2910
      %3025 = vmatprep.subr.bf16.mxu0 0
      %3026 = vmatpush1.bf16.msra.mxu0 0
      %3027 = vmatprep.subr.bf16.mxu0 0
      %3028 = vmatpush1.bf16.msra.mxu0 0
      %3029 = vmatprep.subr.bf16.mxu0 0
      %3030 = vmatpush1.bf16.msra.mxu0 0
      %3031 = vmatprep.subr.bf16.mxu0 0
      %3032 = vmatpush1.bf16.msra.mxu0 0
      %3033 = vmatprep.subr.bf16.mxu0 0
      %3034 = vmatpush1.bf16.msra.mxu0 0
      %3035 = vmatprep.subr.bf16.mxu0 0
      %3036 = vmatpush1.bf16.msra.mxu0 0
      %3037 = vmatprep.subr.bf16.mxu0 0
      %3038 = vmatpush1.bf16.msra.mxu0 0
      %3039 = vmatprep.subr.bf16.mxu0 0
      %3040 = vmatpush1.bf16.msra.mxu0 0
      %3041 = vmatprep.subr.bf16.mxu0 0
      %3042 = vmatpush1.bf16.msra.mxu0 0
      %3043 = vmatprep.subr.bf16.mxu0 0
      %3044 = vmatpush1.bf16.msra.mxu0 0
      %3045 = vmatprep.subr.bf16.mxu0 0
      %3046 = vmatpush1.bf16.msra.mxu0 0
      %3047 = vmatprep.subr.bf16.mxu0 0
      %3048 = vmatpush1.bf16.msra.mxu0 0
      %3049 = vmatprep.subr.bf16.mxu0 0
      %3050 = vmatpush1.bf16.msra.mxu0 0
      %3051 = vmatprep.subr.bf16.mxu0 0
      %3052 = vmatpush1.bf16.msra.mxu0 0
      %3053 = vmatprep.mubr.bf16.mxu0 0
      %3054 = vmatmul.mubr.bf16.gmra.mrb[0].mxu0 %v2967
      %v3055 = vpop.f32.mrb[0].mxu0
      %v3056 = vadd.f32 %v3007, %v3055
      %v3057 = vpop.f32.mrb[0].mxu0
      %v3058 = vpop.f32.mrb[0].mxu0
      %v3059 = vadd.f32 %v3010, %v3058
      %v3060 = vpop.f32.mrb[0].mxu0
      %3061 = vmatprep.mubr.bf16.mxu0 0
      %3062 = vmatmul.mubr.bf16.gmra.mrb[0].mxu0 %v2970
      %v3063 = vpop.f32.mrb[0].mxu0
      %v3064 = vadd.f32 %v3015, %v3063
      %v3065 = vpop.f32.mrb[0].mxu0
      %v3066 = vpop.f32.mrb[0].mxu0
      %v3067 = vadd.f32 %v3018, %v3066
      %v3068 = vpop.f32.mrb[0].mxu0
      %3069 = vdwg.mxu0
      %v3070 = vld [vmem:[%s39] sm:$0xf]
      %v3071 = vld [vmem:[%s39 + $0x4] sm:$0xf]
      %v3072 = vld [vmem:[%s39 + $0x8] sm:$0xf]
      %v3073 = vld [vmem:[%s39 + $0xc] sm:$0xf]
      %v3074 = vld [vmem:[%s41] sm:$0xff]
      %v3075 = vld [vmem:[%s41 + $0x8] sm:$0xff]
      %v3076 = vld [vmem:[%s41 + $0x10] sm:$0xff]
      %v3077 = vld [vmem:[%s41 + $0x18] sm:$0xff]
      %3079 = vset.pattern.permute.xlu0 0
      %3080 = vperm.xlu0 %3079, %v3074
      %v3081 = vpop.permute.xlu0 %3080
      %3084 = vset.pattern.permute.xlu0 0
      %3085 = vperm.xlu0 %3084, %v3075
      %v3086 = vpop.permute.xlu0 %3085
      %3089 = vset.pattern.permute.xlu0 0
      %3090 = vperm.xlu0 %3089, %v3076
      %v3091 = vpop.permute.xlu0 %3090
      %3094 = vset.pattern.permute.xlu0 0
      %3095 = vperm.xlu0 %3094, %v3077
      %v3096 = vpop.permute.xlu0 %3095
      %v3102 = vunpack.c.l.b16 %v3070
      %v3103 = vunpack.c.l.b16 %v3071
      %v3104 = vunpack.c.l.b16 %v3072
      %v3105 = vunpack.c.l.b16 %v3073
      %v3106 = vpack.c.b16 %v3103, %v3102
      %v3107 = vpack.c.b16 %v3105, %v3104
      %v3109 = vsel %vm1277, %v3106, 0
      %v3112 = vsel %vm1277, %v3107, 0
      %3114 = vmatprep.subr.bf16.mxu0 %v2115
      %3115 = vmatpush1.bf16.msra.mxu0 %v2114
      %3116 = vmatprep.subr.bf16.mxu0 0
      %3117 = vmatpush1.bf16.msra.mxu0 0
      %3118 = vmatprep.subr.bf16.mxu0 0
      %3119 = vmatpush1.bf16.msra.mxu0 0
      %3120 = vmatprep.subr.bf16.mxu0 0
      %3121 = vmatpush1.bf16.msra.mxu0 0
      %3122 = vmatprep.subr.bf16.mxu0 0
      %3123 = vmatpush1.bf16.msra.mxu0 0
      %3124 = vmatprep.subr.bf16.mxu0 0
      %3125 = vmatpush1.bf16.msra.mxu0 0
      %3126 = vmatprep.subr.bf16.mxu0 0
      %3127 = vmatpush1.bf16.msra.mxu0 0
      %3128 = vmatprep.subr.bf16.mxu0 0
      %3129 = vmatpush1.bf16.msra.mxu0 0
      %3130 = vmatprep.subr.bf16.mxu0 0
      %3131 = vmatpush1.bf16.msra.mxu0 0
      %3132 = vmatprep.subr.bf16.mxu0 0
      %3133 = vmatpush1.bf16.msra.mxu0 0
      %3134 = vmatprep.subr.bf16.mxu0 0
      %3135 = vmatpush1.bf16.msra.mxu0 0
      %3136 = vmatprep.subr.bf16.mxu0 0
      %3137 = vmatpush1.bf16.msra.mxu0 0
      %3138 = vmatprep.subr.bf16.mxu0 0
      %3139 = vmatpush1.bf16.msra.mxu0 0
      %3140 = vmatprep.subr.bf16.mxu0 0
      %3141 = vmatpush1.bf16.msra.mxu0 0
      %3142 = vmatprep.subr.bf16.mxu0 0
      %3143 = vmatpush1.bf16.msra.mxu0 0
      %3144 = vmatprep.subr.bf16.mxu0 0
      %3145 = vmatpush1.bf16.msra.mxu0 0
      %3146 = vmatprep.mubr.bf16.mxu0 0
      %3147 = vmatmul.mubr.bf16.gmra.mrb[0].mxu0 %v3109
      %v3148 = vpop.f32.mrb[0].mxu0
      %v3149 = vadd.f32 %v3081, %v3148
      %v3150 = vpop.f32.mrb[0].mxu0
      %v3151 = vadd.f32 %v3081, %v3150
      %v3152 = vpop.f32.mrb[0].mxu0
      %v3153 = vadd.f32 %v3086, %v3152
      %v3154 = vpop.f32.mrb[0].mxu0
      %v3155 = vadd.f32 %v3086, %v3154
      %3156 = vmatprep.mubr.bf16.mxu0 0
      %3157 = vmatmul.mubr.bf16.gmra.mrb[0].mxu0 %v3112
      %v3158 = vpop.f32.mrb[0].mxu0
      %v3159 = vadd.f32 %v3091, %v3158
      %v3160 = vpop.f32.mrb[0].mxu0
      %v3161 = vadd.f32 %v3091, %v3160
      %v3162 = vpop.f32.mrb[0].mxu0
      %v3163 = vadd.f32 %v3096, %v3162
      %v3164 = vpop.f32.mrb[0].mxu0
      %v3165 = vadd.f32 %v3096, %v3164
      %3166 = vdwg.mxu0
      %v3167 = vpack.c.bf16 %v3153, %v3149
      %v3168 = vpack.c.bf16 %v3155, %v3151
      %v3169 = vpack.c.bf16 %v3163, %v3159
      %v3170 = vpack.c.bf16 %v3165, %v3161
      %v3171 = vld [vmem:[%s15] sm:$0xf]
      %v3172 = vld [vmem:[%s15 + $0x4] sm:$0xf]
      %v3173 = vld [vmem:[%s15 + $0x8] sm:$0xf]
      %v3174 = vld [vmem:[%s15 + $0xc] sm:$0xf]
      %v3175 = vld [vmem:[%s15 + $0x10] sm:$0xf]
      %v3176 = vld [vmem:[%s15 + $0x14] sm:$0xf]
      %v3177 = vld [vmem:[%s15 + $0x18] sm:$0xf]
      %v3178 = vld [vmem:[%s15 + $0x1c] sm:$0xf]
      %v3179 = vld [vmem:[%s15 + $0x20] sm:$0xf]
      %v3180 = vld [vmem:[%s15 + $0x24] sm:$0xf]
      %v3181 = vld [vmem:[%s15 + $0x28] sm:$0xf]
      %v3182 = vld [vmem:[%s15 + $0x2c] sm:$0xf]
      %v3183 = vld [vmem:[%s15 + $0x30] sm:$0xf]
      %v3184 = vld [vmem:[%s15 + $0x34] sm:$0xf]
      %v3185 = vld [vmem:[%s15 + $0x38] sm:$0xf]
      %v3186 = vld [vmem:[%s15 + $0x3c] sm:$0xf]
      %v3187 = vld [vmem:[%s15 + $0x40] sm:$0xf]
      %v3188 = vld [vmem:[%s15 + $0x44] sm:$0xf]
      %v3189 = vld [vmem:[%s15 + $0x48] sm:$0xf]
      %v3190 = vld [vmem:[%s15 + $0x4c] sm:$0xf]
      %v3191 = vld [vmem:[%s15 + $0x50] sm:$0xf]
      %v3192 = vld [vmem:[%s15 + $0x54] sm:$0xf]
      %v3193 = vld [vmem:[%s15 + $0x58] sm:$0xf]
      %v3194 = vld [vmem:[%s15 + $0x5c] sm:$0xf]
      %v3195 = vld [vmem:[%s15 + $0x60] sm:$0xf]
      %v3196 = vld [vmem:[%s15 + $0x64] sm:$0xf]
      %v3197 = vld [vmem:[%s15 + $0x68] sm:$0xf]
      %v3198 = vld [vmem:[%s15 + $0x6c] sm:$0xf]
      %v3199 = vld [vmem:[%s15 + $0x70] sm:$0xf]
      %v3200 = vld [vmem:[%s15 + $0x74] sm:$0xf]
      %v3201 = vld [vmem:[%s15 + $0x78] sm:$0xf]
      %v3202 = vld [vmem:[%s15 + $0x7c] sm:$0xf]
      %v3235 = vunpack.c.l.b16 %v3171
      %v3236 = vunpack.c.l.b16 %v3172
      %v3237 = vunpack.c.l.b16 %v3173
      %v3238 = vunpack.c.l.b16 %v3174
      %v3239 = vunpack.c.l.b16 %v3175
      %v3240 = vunpack.c.l.b16 %v3176
      %v3241 = vunpack.c.l.b16 %v3177
      %v3242 = vunpack.c.l.b16 %v3178
      %v3243 = vunpack.c.l.b16 %v3179
      %v3244 = vunpack.c.l.b16 %v3180
      %v3245 = vunpack.c.l.b16 %v3181
      %v3246 = vunpack.c.l.b16 %v3182
      %v3247 = vunpack.c.l.b16 %v3183
      %v3248 = vunpack.c.l.b16 %v3184
      %v3249 = vunpack.c.l.b16 %v3185
      %v3250 = vunpack.c.l.b16 %v3186
      %v3251 = vunpack.c.l.b16 %v3187
      %v3252 = vunpack.c.l.b16 %v3188
      %v3253 = vunpack.c.l.b16 %v3189
      %v3254 = vunpack.c.l.b16 %v3190
      %v3255 = vunpack.c.l.b16 %v3191
      %v3256 = vunpack.c.l.b16 %v3192
      %v3257 = vunpack.c.l.b16 %v3193
      %v3258 = vunpack.c.l.b16 %v3194
      %v3259 = vunpack.c.l.b16 %v3195
      %v3260 = vunpack.c.l.b16 %v3196
      %v3261 = vunpack.c.l.b16 %v3197
      %v3262 = vunpack.c.l.b16 %v3198
      %v3263 = vunpack.c.l.b16 %v3199
      %v3264 = vunpack.c.l.b16 %v3200
      %v3265 = vunpack.c.l.b16 %v3201
      %v3266 = vunpack.c.l.b16 %v3202
      %v3267 = vpack.c.b16 %v3236, %v3235
      %v3268 = vpack.c.b16 %v3238, %v3237
      %v3269 = vpack.c.b16 %v3240, %v3239
      %v3270 = vpack.c.b16 %v3242, %v3241
      %v3271 = vpack.c.b16 %v3244, %v3243
      %v3272 = vpack.c.b16 %v3246, %v3245
      %v3273 = vpack.c.b16 %v3248, %v3247
      %v3274 = vpack.c.b16 %v3250, %v3249
      %v3275 = vpack.c.b16 %v3252, %v3251
      %v3276 = vpack.c.b16 %v3254, %v3253
      %v3277 = vpack.c.b16 %v3256, %v3255
      %v3278 = vpack.c.b16 %v3258, %v3257
      %v3279 = vpack.c.b16 %v3260, %v3259
      %v3280 = vpack.c.b16 %v3262, %v3261
      %v3281 = vpack.c.b16 %v3264, %v3263
      %v3282 = vpack.c.b16 %v3266, %v3265
      %3299 = vmatprep.subr.bf16.mxu0 0
      %3300 = vmatpush1.bf16.msra.mxu0 %v3267
      %3301 = vmatprep.subr.bf16.mxu0 0
      %3302 = vmatpush1.bf16.msra.mxu0 %v3268
      %3303 = vmatprep.subr.bf16.mxu0 0
      %3304 = vmatpush1.bf16.msra.mxu0 %v3269
      %3305 = vmatprep.subr.bf16.mxu0 0
      %3306 = vmatpush1.bf16.msra.mxu0 %v3270
      %3307 = vmatprep.subr.bf16.mxu0 0
      %3308 = vmatpush1.bf16.msra.mxu0 %v3271
      %3309 = vmatprep.subr.bf16.mxu0 0
      %3310 = vmatpush1.bf16.msra.mxu0 %v3272
      %3311 = vmatprep.subr.bf16.mxu0 0
      %3312 = vmatpush1.bf16.msra.mxu0 %v3273
      %3313 = vmatprep.subr.bf16.mxu0 0
      %3314 = vmatpush1.bf16.msra.mxu0 %v3274
      %3315 = vmatprep.subr.bf16.mxu0 0
      %3316 = vmatpush1.bf16.msra.mxu0 %v3275
      %3317 = vmatprep.subr.bf16.mxu0 0
      %3318 = vmatpush1.bf16.msra.mxu0 %v3276
      %3319 = vmatprep.subr.bf16.mxu0 0
      %3320 = vmatpush1.bf16.msra.mxu0 %v3277
      %3321 = vmatprep.subr.bf16.mxu0 0
      %3322 = vmatpush1.bf16.msra.mxu0 %v3278
      %3323 = vmatprep.subr.bf16.mxu0 0
      %3324 = vmatpush1.bf16.msra.mxu0 %v3279
      %3325 = vmatprep.subr.bf16.mxu0 0
      %3326 = vmatpush1.bf16.msra.mxu0 %v3280
      %3327 = vmatprep.subr.bf16.mxu0 0
      %3328 = vmatpush1.bf16.msra.mxu0 %v3281
      %3329 = vmatprep.subr.bf16.mxu0 0
      %3330 = vmatpush1.bf16.msra.mxu0 %v3282
      %3331 = vmatprep.mubr.bf16.mxu0 %v3168
      %3332 = vmatmul.mubr.bf16.gmra.mrb[0].mxu0 %v3167
      %v3333 = vpop.f32.mrb[0].mxu0
      %v3334 = vadd.f32 0.0, %v3333
      %v3335 = vpop.f32.mrb[0].mxu0
      %v3336 = vpop.f32.mrb[0].mxu0
      %v3337 = vadd.f32 0.0, %v3336
      %v3338 = vpop.f32.mrb[0].mxu0
      %3339 = vmatprep.mubr.bf16.mxu0 %v3170
      %3340 = vmatmul.mubr.bf16.gmra.mrb[0].mxu0 %v3169
      %v3341 = vpop.f32.mrb[0].mxu0
      %v3342 = vadd.f32 0.0, %v3341
      %v3343 = vpop.f32.mrb[0].mxu0
      %v3344 = vpop.f32.mrb[0].mxu0
      %v3345 = vadd.f32 0.0, %v3344
      %v3346 = vpop.f32.mrb[0].mxu0
      %3347 = vdwg.mxu0
      %v3348 = vadd.f32 %v3056, %v3334
      %v3349 = vadd.f32 %v3059, %v3337
      %v3350 = vadd.f32 %v3064, %v3342
      %v3351 = vadd.f32 %v3067, %v3345
      %v3352 = vmax.f32 %v3348, 0.0
      %v3353 = vmax.f32 %v3349, 0.0
      %v3354 = vmax.f32 %v3350, 0.0
      %v3355 = vmax.f32 %v3351, 0.0
      %v3356 = vpack.c.bf16 %v3353, %v3352
      %v3357 = vpack.c.bf16 %v3355, %v3354
      %3360 = vrot.lane.b32.xlu0 %v3356, 9
      %v3361 = vpop.permute.xlu0 %3360
      %3362 = vrot.lane.b32.xlu0 %v3357, 9
      %v3363 = vpop.permute.xlu0 %3362
      %3366 = vst.msk [vmem:[#allocation3] sm:$0xff] %vm2736, %v3361
      %3367 = vst.msk [vmem:[#allocation3 + $0x8] sm:$0xff] %vm2736, %v3363
      %v3368 = vld [vmem:[%s7] sm:$0x1]
      %v3369 = vld [vmem:[%s9] sm:$0x1]
      %v3370 = vld [vmem:[#allocation3] sm:$0xff]
      %v3371 = vld [vmem:[#allocation3 + $0x8] sm:$0xff]
      %v3373 = vpack.i.b16 %v3368, %v3368
      %v3375 = vlaneseq
      %v3376 = vshrl.u32 %v3375, 7
      %v3377 = vsub.s32 0, %v3376
      %v3378 = vrot.slane %v3373, %v3377
      %v3379 = vmul.bf16 %v3370, %v3378
      %v3380 = vmul.bf16 %v3371, %v3378
      %3381 = vst.msk [vmem:[#allocation5] sm:$0xff] %vm2752, %v3379
      %3382 = vst.msk [vmem:[#allocation5 + $0x10] sm:$0xff] %vm2752, %v3380
      %v3383 = vld [vmem:[#allocation3] sm:$0xff]
      %v3384 = vld [vmem:[#allocation3 + $0x8] sm:$0xff]
      %3387 = vrot.lane.b32.xlu0 %v3383, 127
      %v3388 = vpop.permute.xlu0 %3387
      %3389 = vrot.lane.b32.xlu0 %v3384, 127
      %v3390 = vpop.permute.xlu0 %3389
      %3393 = vst.msk [vmem:[#allocation5 + $0x20] sm:$0xff] %vm2752, %v3388
      %3394 = vst.msk [vmem:[#allocation5 + $0x30] sm:$0xff] %vm2752, %v3390
      %v3395 = vld [vmem:[#allocation3] sm:$0xff]
      %v3396 = vld [vmem:[#allocation3 + $0x8] sm:$0xff]
      %v3398 = vpack.i.b16 %v3369, %v3369
      %v3400 = vlaneseq
      %v3401 = vshrl.u32 %v3400, 7
      %v3402 = vsub.s32 0, %v3401
      %v3403 = vrot.slane %v3398, %v3402
      %3405 = vrot.lane.b32.xlu0 %v3403, 2
      %v3406 = vpop.permute.xlu0 %3405
      %v3408 = vmul.bf16 %v3395, %v3406
      %v3409 = vmul.bf16 %v3396, %v3406
      %3412 = vrot.lane.b32.xlu0 %v3408, 126
      %v3413 = vpop.permute.xlu0 %3412
      %3414 = vrot.lane.b32.xlu0 %v3409, 126
      %v3415 = vpop.permute.xlu0 %3414
      %3418 = vst.msk [vmem:[#allocation5 + $0x40] sm:$0xff] %vm2752, %v3413
      %3419 = vst.msk [vmem:[#allocation5 + $0x50] sm:$0xff] %vm2752, %v3415
      %v3420 = vld [vmem:[#allocation3] sm:$0xff]
      %v3421 = vld [vmem:[#allocation3 + $0x8] sm:$0xff]
      %3423 = vrot.lane.b32.xlu0 %v3378, 8
      %v3424 = vpop.permute.xlu0 %3423
      %v3426 = vmul.bf16 %v3420, %v3424
      %v3427 = vmul.bf16 %v3421, %v3424
      %3430 = vrot.lane.b32.xlu0 %v3426, 120
      %v3431 = vpop.permute.xlu0 %3430
      %3432 = vrot.lane.b32.xlu0 %v3427, 120
      %v3433 = vpop.permute.xlu0 %3432
      %3436 = vst.msk [vmem:[#allocation5 + $0x60] sm:$0xff] %vm2752, %v3431
      %3437 = vst.msk [vmem:[#allocation5 + $0x70] sm:$0xff] %vm2752, %v3433
      %v3438 = vld [vmem:[#allocation3] sm:$0xff]
      %v3439 = vld [vmem:[#allocation3 + $0x8] sm:$0xff]
      %3442 = vrot.lane.b32.xlu0 %v3438, 119
      %v3443 = vpop.permute.xlu0 %3442
      %3444 = vrot.lane.b32.xlu0 %v3439, 119
      %v3445 = vpop.permute.xlu0 %3444
      %3448 = vst.msk [vmem:[#allocation5 + $0x80] sm:$0xff] %vm2752, %v3443
      %3449 = vst.msk [vmem:[#allocation5 + $0x90] sm:$0xff] %vm2752, %v3445
      %v3450 = vld [vmem:[#allocation3] sm:$0xff]
      %v3451 = vld [vmem:[#allocation3 + $0x8] sm:$0xff]
      %3452 = vrot.lane.b32.xlu0 %v3403, 10
      %v3453 = vpop.permute.xlu0 %3452
      %v3455 = vmul.bf16 %v3450, %v3453
      %v3456 = vmul.bf16 %v3451, %v3453
      %3459 = vrot.lane.b32.xlu0 %v3455, 118
      %v3460 = vpop.permute.xlu0 %3459
      %3461 = vrot.lane.b32.xlu0 %v3456, 118
      %v3462 = vpop.permute.xlu0 %3461
      %3465 = vst.msk [vmem:[#allocation5 + $0xa0] sm:$0xff] %vm2752, %v3460
      %3466 = vst.msk [vmem:[#allocation5 + $0xb0] sm:$0xff] %vm2752, %v3462
      %v3467 = vld [vmem:[#allocation3] sm:$0xff]
      %v3468 = vld [vmem:[#allocation3 + $0x8] sm:$0xff]
      %3469 = vrot.lane.b32.xlu0 %v3378, 16
      %v3470 = vpop.permute.xlu0 %3469
      %v3472 = vmul.bf16 %v3467, %v3470
      %v3473 = vmul.bf16 %v3468, %v3470
      %3476 = vrot.lane.b32.xlu0 %v3472, 112
      %v3477 = vpop.permute.xlu0 %3476
      %3478 = vrot.lane.b32.xlu0 %v3473, 112
      %v3479 = vpop.permute.xlu0 %3478
      %3482 = vst.msk [vmem:[#allocation5 + $0xc0] sm:$0xff] %vm2752, %v3477
      %3483 = vst.msk [vmem:[#allocation5 + $0xd0] sm:$0xff] %vm2752, %v3479
      %v3484 = vld [vmem:[#allocation3] sm:$0xff]
      %v3485 = vld [vmem:[#allocation3 + $0x8] sm:$0xff]
      %3488 = vrot.lane.b32.xlu0 %v3484, 111
      %v3489 = vpop.permute.xlu0 %3488
      %3490 = vrot.lane.b32.xlu0 %v3485, 111
      %v3491 = vpop.permute.xlu0 %3490
      %3494 = vst.msk [vmem:[#allocation5 + $0xe0] sm:$0xff] %vm2752, %v3489
      %3495 = vst.msk [vmem:[#allocation5 + $0xf0] sm:$0xff] %vm2752, %v3491
      %v3496 = vld [vmem:[#allocation3] sm:$0xff]
      %v3497 = vld [vmem:[#allocation3 + $0x8] sm:$0xff]
      %3498 = vrot.lane.b32.xlu0 %v3403, 18
      %v3499 = vpop.permute.xlu0 %3498
      %v3501 = vmul.bf16 %v3496, %v3499
      %v3502 = vmul.bf16 %v3497, %v3499
      %3505 = vrot.lane.b32.xlu0 %v3501, 110
      %v3506 = vpop.permute.xlu0 %3505
      %3507 = vrot.lane.b32.xlu0 %v3502, 110
      %v3508 = vpop.permute.xlu0 %3507
      %3511 = vst.msk [vmem:[#allocation5 + $0x100] sm:$0xff] %vm2752, %v3506
      %3512 = vst.msk [vmem:[#allocation5 + $0x110] sm:$0xff] %vm2752, %v3508
      %v3513 = vld [vmem:[%s43] sm:$0xff]
      %v3514 = vld [vmem:[%s43 + $0x8] sm:$0xf]
      %v3515 = vld [vmem:[%s43 + $0xc] sm:$0xff]
      %v3516 = vld [vmem:[%s43 + $0x14] sm:$0xf]
      %v3517 = vld [vmem:[%s43 + $0x18] sm:$0xff]
      %v3518 = vld [vmem:[%s43 + $0x20] sm:$0xf]
      %v3519 = vld [vmem:[%s43 + $0x24] sm:$0xff]
      %v3520 = vld [vmem:[%s43 + $0x2c] sm:$0xf]
      %v3521 = vld [vmem:[%s43 + $0x30] sm:$0xff]
      %v3522 = vld [vmem:[%s43 + $0x38] sm:$0xf]
      %v3523 = vld [vmem:[%s43 + $0x3c] sm:$0xff]
      %v3524 = vld [vmem:[%s43 + $0x44] sm:$0xf]
      %v3525 = vld [vmem:[%s43 + $0x48] sm:$0xff]
      %v3526 = vld [vmem:[%s43 + $0x50] sm:$0xf]
      %v3527 = vld [vmem:[%s43 + $0x54] sm:$0xff]
      %v3528 = vld [vmem:[%s43 + $0x5c] sm:$0xf]
      %v3529 = vld [vmem:[#allocation5] sm:$0xff]
      %v3530 = vld [vmem:[#allocation5 + $0x10] sm:$0xff]
      %v3531 = vld [vmem:[#allocation5 + $0x20] sm:$0xff]
      %v3532 = vld [vmem:[#allocation5 + $0x30] sm:$0xff]
      %v3533 = vld [vmem:[#allocation5 + $0x40] sm:$0xff]
      %v3534 = vld [vmem:[#allocation5 + $0x50] sm:$0xff]
      %v3535 = vld [vmem:[#allocation5 + $0x60] sm:$0xff]
      %v3536 = vld [vmem:[#allocation5 + $0x70] sm:$0xff]
      %v3537 = vld [vmem:[#allocation5 + $0x80] sm:$0xff]
      %v3538 = vld [vmem:[#allocation5 + $0x90] sm:$0xff]
      %v3539 = vld [vmem:[#allocation5 + $0xa0] sm:$0xff]
      %v3540 = vld [vmem:[#allocation5 + $0xb0] sm:$0xff]
      %v3541 = vld [vmem:[#allocation5 + $0xc0] sm:$0xff]
      %v3542 = vld [vmem:[#allocation5 + $0xd0] sm:$0xff]
      %v3543 = vld [vmem:[#allocation5 + $0xe0] sm:$0xff]
      %v3544 = vld [vmem:[#allocation5 + $0xf0] sm:$0xff]
      %v3545 = vld [vmem:[#allocation5 + $0x100] sm:$0xff]
      %v3546 = vld [vmem:[#allocation5 + $0x110] sm:$0xff]
      %v3547 = vld [vmem:[%s45] sm:$0xff]
      %v3548 = vld [vmem:[%s45 + $0x8] sm:$0xff]
      %v3549 = vld [vmem:[%s45 + $0x10] sm:$0xff]
      %v3550 = vld [vmem:[%s45 + $0x18] sm:$0xff]
      %v3551 = vld [vmem:[%s45 + $0x20] sm:$0xff]
      %v3552 = vld [vmem:[%s45 + $0x28] sm:$0xff]
      %v3553 = vld [vmem:[%s45 + $0x30] sm:$0xff]
      %v3554 = vld [vmem:[%s45 + $0x38] sm:$0xff]
      %3556 = vset.pattern.permute.xlu0 0
      %3557 = vperm.xlu0 %3556, %v3547
      %v3558 = vpop.permute.xlu0 %3557
      %3561 = vset.pattern.permute.xlu0 0
      %3562 = vperm.xlu0 %3561, %v3548
      %v3563 = vpop.permute.xlu0 %3562
      %3566 = vset.pattern.permute.xlu0 0
      %3567 = vperm.xlu0 %3566, %v3549
      %v3568 = vpop.permute.xlu0 %3567
      %3571 = vset.pattern.permute.xlu0 0
      %3572 = vperm.xlu0 %3571, %v3550
      %v3573 = vpop.permute.xlu0 %3572
      %3576 = vset.pattern.permute.xlu0 0
      %3577 = vperm.xlu0 %3576, %v3551
      %v3578 = vpop.permute.xlu0 %3577
      %3581 = vset.pattern.permute.xlu0 0
      %3582 = vperm.xlu0 %3581, %v3552
      %v3583 = vpop.permute.xlu0 %3582
      %3586 = vset.pattern.permute.xlu0 0
      %3587 = vperm.xlu0 %3586, %v3553
      %v3588 = vpop.permute.xlu0 %3587
      %3591 = vset.pattern.permute.xlu0 0
      %3592 = vperm.xlu0 %3591, %v3554
      %v3593 = vpop.permute.xlu0 %3592
      %v3611 = vunpack.c.l.b16 %v3513
      %v3612 = vunpack.c.h.b16 %v3513
      %v3613 = vunpack.c.l.b16 %v3514
      %v3614 = vunpack.c.l.b16 %v3515
      %v3615 = vunpack.c.h.b16 %v3515
      %v3616 = vunpack.c.l.b16 %v3516
      %v3617 = vunpack.c.l.b16 %v3517
      %v3618 = vunpack.c.h.b16 %v3517
      %v3619 = vunpack.c.l.b16 %v3518
      %v3620 = vunpack.c.l.b16 %v3519
      %v3621 = vunpack.c.h.b16 %v3519
      %v3622 = vunpack.c.l.b16 %v3520
      %v3623 = vunpack.c.l.b16 %v3521
      %v3624 = vunpack.c.h.b16 %v3521
      %v3625 = vunpack.c.l.b16 %v3522
      %v3626 = vunpack.c.l.b16 %v3523
      %v3627 = vunpack.c.h.b16 %v3523
      %v3628 = vunpack.c.l.b16 %v3524
      %v3629 = vunpack.c.l.b16 %v3525
      %v3630 = vunpack.c.h.b16 %v3525
      %v3631 = vunpack.c.l.b16 %v3526
      %v3632 = vunpack.c.l.b16 %v3527
      %v3633 = vunpack.c.h.b16 %v3527
      %v3634 = vunpack.c.l.b16 %v3528
      %v3635 = vpack.c.b16 %v3614, %v3611
      %v3636 = vpack.c.b16 %v3615, %v3612
      %v3637 = vpack.c.b16 %v3616, %v3613
      %v3638 = vpack.c.b16 %v3620, %v3617
      %v3639 = vpack.c.b16 %v3621, %v3618
      %v3640 = vpack.c.b16 %v3622, %v3619
      %v3641 = vpack.c.b16 %v3626, %v3623
      %v3642 = vpack.c.b16 %v3627, %v3624
      %v3643 = vpack.c.b16 %v3628, %v3625
      %v3644 = vpack.c.b16 %v3632, %v3629
      %v3645 = vpack.c.b16 %v3633, %v3630
      %v3646 = vpack.c.b16 %v3634, %v3631
      %v3656 = vsel %vm2965, %v3637, 0
      %v3659 = vsel %vm2965, %v3640, 0
      %v3662 = vsel %vm2965, %v3643, 0
      %v3665 = vsel %vm2965, %v3646, 0
      %3667 = vmatprep.subr.bf16.mxu0 0
      %3668 = vmatpush1.bf16.msra.mxu0 %v3529
      %3669 = vmatprep.subr.bf16.mxu0 0
      %3670 = vmatpush1.bf16.msra.mxu0 %v3530
      %3671 = vmatprep.subr.bf16.mxu0 0
      %3672 = vmatpush1.bf16.msra.mxu0 %v3531
      %3673 = vmatprep.subr.bf16.mxu0 0
      %3674 = vmatpush1.bf16.msra.mxu0 %v3532
      %3675 = vmatprep.subr.bf16.mxu0 0
      %3676 = vmatpush1.bf16.msra.mxu0 %v3533
      %3677 = vmatprep.subr.bf16.mxu0 0
      %3678 = vmatpush1.bf16.msra.mxu0 %v3534
      %3679 = vmatprep.subr.bf16.mxu0 0
      %3680 = vmatpush1.bf16.msra.mxu0 %v3535
      %3681 = vmatprep.subr.bf16.mxu0 0
      %3682 = vmatpush1.bf16.msra.mxu0 %v3536
      %3683 = vmatprep.subr.bf16.mxu0 0
      %3684 = vmatpush1.bf16.msra.mxu0 %v3537
      %3685 = vmatprep.subr.bf16.mxu0 0
      %3686 = vmatpush1.bf16.msra.mxu0 %v3538
      %3687 = vmatprep.subr.bf16.mxu0 0
      %3688 = vmatpush1.bf16.msra.mxu0 %v3539
      %3689 = vmatprep.subr.bf16.mxu0 0
      %3690 = vmatpush1.bf16.msra.mxu0 %v3540
      %3691 = vmatprep.subr.bf16.mxu0 0
      %3692 = vmatpush1.bf16.msra.mxu0 %v3541
      %3693 = vmatprep.subr.bf16.mxu0 0
      %3694 = vmatpush1.bf16.msra.mxu0 %v3542
      %3695 = vmatprep.subr.bf16.mxu0 0
      %3696 = vmatpush1.bf16.msra.mxu0 %v3543
      %3697 = vmatprep.subr.bf16.mxu0 0
      %3698 = vmatpush1.bf16.msra.mxu0 %v3544
      %3699 = vmatprep.mubr.bf16.mxu0 %v3636
      %3700 = vmatmul.mubr.bf16.gmra.mrb[0].mxu0 %v3635
      %v3701 = vpop.f32.mrb[0].mxu0
      %v3702 = vadd.f32 %v3558, %v3701
      %v3703 = vpop.f32.mrb[0].mxu0
      %v3704 = vpop.f32.mrb[0].mxu0
      %v3705 = vadd.f32 %v3563, %v3704
      %v3706 = vpop.f32.mrb[0].mxu0
      %3707 = vmatprep.mubr.bf16.mxu0 %v3639
      %3708 = vmatmul.mubr.bf16.gmra.mrb[0].mxu0 %v3638
      %v3709 = vpop.f32.mrb[0].mxu0
      %v3710 = vadd.f32 %v3568, %v3709
      %v3711 = vpop.f32.mrb[0].mxu0
      %v3712 = vpop.f32.mrb[0].mxu0
      %v3713 = vadd.f32 %v3573, %v3712
      %v3714 = vpop.f32.mrb[0].mxu0
      %3715 = vmatprep.mubr.bf16.mxu0 %v3642
      %3716 = vmatmul.mubr.bf16.gmra.mrb[0].mxu0 %v3641
      %v3717 = vpop.f32.mrb[0].mxu0
      %v3718 = vadd.f32 %v3578, %v3717
      %v3719 = vpop.f32.mrb[0].mxu0
      %v3720 = vpop.f32.mrb[0].mxu0
      %v3721 = vadd.f32 %v3583, %v3720
      %v3722 = vpop.f32.mrb[0].mxu0
      %3723 = vmatprep.mubr.bf16.mxu0 %v3645
      %3724 = vmatmul.mubr.bf16.gmra.mrb[0].mxu0 %v3644
      %v3725 = vpop.f32.mrb[0].mxu0
      %v3726 = vadd.f32 %v3588, %v3725
      %v3727 = vpop.f32.mrb[0].mxu0
      %v3728 = vpop.f32.mrb[0].mxu0
      %v3729 = vadd.f32 %v3593, %v3728
      %v3730 = vpop.f32.mrb[0].mxu0
      %3731 = vdwg.mxu0
      %3732 = vmatprep.subr.bf16.mxu0 0
      %3733 = vmatpush1.bf16.msra.mxu0 %v3545
      %3734 = vmatprep.subr.bf16.mxu0 0
      %3735 = vmatpush1.bf16.msra.mxu0 %v3546
      %3736 = vmatprep.subr.bf16.mxu0 0
      %3737 = vmatpush1.bf16.msra.mxu0 0
      %3738 = vmatprep.subr.bf16.mxu0 0
      %3739 = vmatpush1.bf16.msra.mxu0 0
      %3740 = vmatprep.subr.bf16.mxu0 0
      %3741 = vmatpush1.bf16.msra.mxu0 0
      %3742 = vmatprep.subr.bf16.mxu0 0
      %3743 = vmatpush1.bf16.msra.mxu0 0
      %3744 = vmatprep.subr.bf16.mxu0 0
      %3745 = vmatpush1.bf16.msra.mxu0 0
      %3746 = vmatprep.subr.bf16.mxu0 0
      %3747 = vmatpush1.bf16.msra.mxu0 0
      %3748 = vmatprep.subr.bf16.mxu0 0
      %3749 = vmatpush1.bf16.msra.mxu0 0
      %3750 = vmatprep.subr.bf16.mxu0 0
      %3751 = vmatpush1.bf16.msra.mxu0 0
      %3752 = vmatprep.subr.bf16.mxu0 0
      %3753 = vmatpush1.bf16.msra.mxu0 0
      %3754 = vmatprep.subr.bf16.mxu0 0
      %3755 = vmatpush1.bf16.msra.mxu0 0
      %3756 = vmatprep.subr.bf16.mxu0 0
      %3757 = vmatpush1.bf16.msra.mxu0 0
      %3758 = vmatprep.subr.bf16.mxu0 0
      %3759 = vmatpush1.bf16.msra.mxu0 0
      %3760 = vmatprep.subr.bf16.mxu0 0
      %3761 = vmatpush1.bf16.msra.mxu0 0
      %3762 = vmatprep.subr.bf16.mxu0 0
      %3763 = vmatpush1.bf16.msra.mxu0 0
      %3764 = vmatprep.mubr.bf16.mxu0 0
      %3765 = vmatmul.mubr.bf16.gmra.mrb[0].mxu0 %v3656
      %v3766 = vpop.f32.mrb[0].mxu0
      %v3767 = vadd.f32 %v3702, %v3766
      %v3768 = vpop.f32.mrb[0].mxu0
      %v3769 = vpop.f32.mrb[0].mxu0
      %v3770 = vadd.f32 %v3705, %v3769
      %v3771 = vpop.f32.mrb[0].mxu0
      %3772 = vmatprep.mubr.bf16.mxu0 0
      %3773 = vmatmul.mubr.bf16.gmra.mrb[0].mxu0 %v3659
      %v3774 = vpop.f32.mrb[0].mxu0
      %v3775 = vadd.f32 %v3710, %v3774
      %v3776 = vpop.f32.mrb[0].mxu0
      %v3777 = vpop.f32.mrb[0].mxu0
      %v3778 = vadd.f32 %v3713, %v3777
      %v3779 = vpop.f32.mrb[0].mxu0
      %3780 = vmatprep.mubr.bf16.mxu0 0
      %3781 = vmatmul.mubr.bf16.gmra.mrb[0].mxu0 %v3662
      %v3782 = vpop.f32.mrb[0].mxu0
      %v3783 = vadd.f32 %v3718, %v3782
      %v3784 = vpop.f32.mrb[0].mxu0
      %v3785 = vpop.f32.mrb[0].mxu0
      %v3786 = vadd.f32 %v3721, %v3785
      %v3787 = vpop.f32.mrb[0].mxu0
      %3788 = vmatprep.mubr.bf16.mxu0 0
      %3789 = vmatmul.mubr.bf16.gmra.mrb[0].mxu0 %v3665
      %v3790 = vpop.f32.mrb[0].mxu0
      %v3791 = vadd.f32 %v3726, %v3790
      %v3792 = vpop.f32.mrb[0].mxu0
      %v3793 = vpop.f32.mrb[0].mxu0
      %v3794 = vadd.f32 %v3729, %v3793
      %v3795 = vpop.f32.mrb[0].mxu0
      %3796 = vdwg.mxu0
      %v3797 = vmax.f32 %v3767, 0.0
      %v3798 = vmax.f32 %v3770, 0.0
      %v3799 = vmax.f32 %v3775, 0.0
      %v3800 = vmax.f32 %v3778, 0.0
      %v3801 = vmax.f32 %v3783, 0.0
      %v3802 = vmax.f32 %v3786, 0.0
      %v3803 = vmax.f32 %v3791, 0.0
      %v3804 = vmax.f32 %v3794, 0.0
      %v3805 = vpack.c.bf16 %v3798, %v3797
      %v3806 = vpack.c.bf16 %v3800, %v3799
      %v3807 = vpack.c.bf16 %v3802, %v3801
      %v3808 = vpack.c.bf16 %v3804, %v3803
      %v3809 = vld [vmem:[%s17] sm:$0xf]
      %v3810 = vld [vmem:[%s17 + $0x4] sm:$0xf]
      %v3811 = vld [vmem:[%s17 + $0x8] sm:$0xf]
      %v3812 = vld [vmem:[%s17 + $0xc] sm:$0xf]
      %v3813 = vld [vmem:[%s17 + $0x10] sm:$0xf]
      %v3814 = vld [vmem:[%s17 + $0x14] sm:$0xf]
      %v3815 = vld [vmem:[%s17 + $0x18] sm:$0xf]
      %v3816 = vld [vmem:[%s17 + $0x1c] sm:$0xf]
      %v3825 = vunpack.c.l.b16 %v3809
      %v3826 = vunpack.c.l.b16 %v3810
      %v3827 = vunpack.c.l.b16 %v3811
      %v3828 = vunpack.c.l.b16 %v3812
      %v3829 = vunpack.c.l.b16 %v3813
      %v3830 = vunpack.c.l.b16 %v3814
      %v3831 = vunpack.c.l.b16 %v3815
      %v3832 = vunpack.c.l.b16 %v3816
      %v3833 = vpack.c.b16 %v3826, %v3825
      %v3834 = vpack.c.b16 %v3828, %v3827
      %v3835 = vpack.c.b16 %v3830, %v3829
      %v3836 = vpack.c.b16 %v3832, %v3831
      %v3842 = vsel %vm2752, %v3805, 0
      %v3845 = vsel %vm2752, %v3806, 0
      %v3848 = vsel %vm2752, %v3807, 0
      %v3851 = vsel %vm2752, %v3808, 0
      %3853 = vmatprep.subr.bf16.mxu0 0
      %3854 = vmatpush1.bf16.msra.mxu0 %v3833
      %3855 = vmatprep.subr.bf16.mxu0 0
      %3856 = vmatpush1.bf16.msra.mxu0 %v3834
      %3857 = vmatprep.subr.bf16.mxu0 0
      %3858 = vmatpush1.bf16.msra.mxu0 %v3835
      %3859 = vmatprep.subr.bf16.mxu0 0
      %3860 = vmatpush1.bf16.msra.mxu0 %v3836
      %3861 = vmatprep.subr.bf16.mxu0 0
      %3862 = vmatpush1.bf16.msra.mxu0 0
      %3863 = vmatprep.subr.bf16.mxu0 0
      %3864 = vmatpush1.bf16.msra.mxu0 0
      %3865 = vmatprep.subr.bf16.mxu0 0
      %3866 = vmatpush1.bf16.msra.mxu0 0
      %3867 = vmatprep.subr.bf16.mxu0 0
      %3868 = vmatpush1.bf16.msra.mxu0 0
      %3869 = vmatprep.subr.bf16.mxu0 0
      %3870 = vmatpush1.bf16.msra.mxu0 0
      %3871 = vmatprep.subr.bf16.mxu0 0
      %3872 = vmatpush1.bf16.msra.mxu0 0
      %3873 = vmatprep.subr.bf16.mxu0 0
      %3874 = vmatpush1.bf16.msra.mxu0 0
      %3875 = vmatprep.subr.bf16.mxu0 0
      %3876 = vmatpush1.bf16.msra.mxu0 0
      %3877 = vmatprep.subr.bf16.mxu0 0
      %3878 = vmatpush1.bf16.msra.mxu0 0
      %3879 = vmatprep.subr.bf16.mxu0 0
      %3880 = vmatpush1.bf16.msra.mxu0 0
      %3881 = vmatprep.subr.bf16.mxu0 0
      %3882 = vmatpush1.bf16.msra.mxu0 0
      %3883 = vmatprep.subr.bf16.mxu0 0
      %3884 = vmatpush1.bf16.msra.mxu0 0
      %3885 = vmatprep.mubr.bf16.mxu0 0
      %3886 = vmatmul.mubr.bf16.gmra.mrb[0].mxu0 %v3842
      %v3887 = vpop.f32.mrb[0].mxu0
      %v3888 = vadd.f32 0.0, %v3887
      %v3889 = vpop.f32.mrb[0].mxu0
      %v3890 = vpop.f32.mrb[0].mxu0
      %v3891 = vadd.f32 0.0, %v3890
      %v3892 = vpop.f32.mrb[0].mxu0
      %3893 = vmatprep.mubr.bf16.mxu0 0
      %3894 = vmatmul.mubr.bf16.gmra.mrb[0].mxu0 %v3845
      %v3895 = vpop.f32.mrb[0].mxu0
      %v3896 = vadd.f32 0.0, %v3895
      %v3897 = vpop.f32.mrb[0].mxu0
      %v3898 = vpop.f32.mrb[0].mxu0
      %v3899 = vadd.f32 0.0, %v3898
      %v3900 = vpop.f32.mrb[0].mxu0
      %3901 = vmatprep.mubr.bf16.mxu0 0
      %3902 = vmatmul.mubr.bf16.gmra.mrb[0].mxu0 %v3848
      %v3903 = vpop.f32.mrb[0].mxu0
      %v3904 = vadd.f32 0.0, %v3903
      %v3905 = vpop.f32.mrb[0].mxu0
      %v3906 = vpop.f32.mrb[0].mxu0
      %v3907 = vadd.f32 0.0, %v3906
      %v3908 = vpop.f32.mrb[0].mxu0
      %3909 = vmatprep.mubr.bf16.mxu0 0
      %3910 = vmatmul.mubr.bf16.gmra.mrb[0].mxu0 %v3851
      %v3911 = vpop.f32.mrb[0].mxu0
      %v3912 = vadd.f32 0.0, %v3911
      %v3913 = vpop.f32.mrb[0].mxu0
      %v3914 = vpop.f32.mrb[0].mxu0
      %v3915 = vadd.f32 0.0, %v3914
      %v3916 = vpop.f32.mrb[0].mxu0
      %3917 = vdwg.mxu0
      %v3918 = vpack.c.bf16 %v3891, %v3888
      %v3919 = vpack.c.bf16 %v3899, %v3896
      %v3920 = vpack.c.bf16 %v3907, %v3904
      %v3921 = vpack.c.bf16 %v3915, %v3912
      %3926 = vrot.lane.b32.xlu0 %v3918, 5
      %v3927 = vpop.permute.xlu0 %3926
      %3928 = vrot.lane.b32.xlu0 %v3919, 5
      %v3929 = vpop.permute.xlu0 %3928
      %3930 = vrot.lane.b32.xlu0 %v3920, 5
      %v3931 = vpop.permute.xlu0 %3930
      %3932 = vrot.lane.b32.xlu0 %v3921, 5
      %v3933 = vpop.permute.xlu0 %3932
      %vm3938 = vcmask 171048
      %3939 = vst.msk [vmem:[#allocation4] sm:$0xff] %vm3938, %v3927
      %3940 = vst.msk [vmem:[#allocation4 + $0x8] sm:$0xff] %vm3938, %v3929
      %3941 = vst.msk [vmem:[#allocation4 + $0x10] sm:$0xff] %vm3938, %v3931
      %3942 = vst.msk [vmem:[#allocation4 + $0x18] sm:$0xff] %vm3938, %v3933
      %v3943 = vld [vmem:[%s11] sm:$0x1]
      %v3944 = vld [vmem:[%s13] sm:$0x1]
      %v3945 = vld [vmem:[#allocation4] sm:$0xff]
      %v3946 = vld [vmem:[#allocation4 + $0x8] sm:$0xff]
      %v3947 = vld [vmem:[#allocation4 + $0x10] sm:$0xff]
      %v3948 = vld [vmem:[#allocation4 + $0x18] sm:$0xff]
      %v3950 = vpack.i.b16 %v3943, %v3943
      %v3952 = vlaneseq
      %v3953 = vshrl.u32 %v3952, 7
      %v3954 = vsub.s32 0, %v3953
      %v3955 = vrot.slane %v3950, %v3954
      %v3956 = vmul.bf16 %v3945, %v3955
      %v3957 = vmul.bf16 %v3946, %v3955
      %v3958 = vmul.bf16 %v3947, %v3955
      %v3959 = vmul.bf16 %v3948, %v3955
      %3960 = vst.msk [vmem:[#allocation5] sm:$0xff] %vm1277, %v3956
      %3961 = vst.msk [vmem:[#allocation5 + $0x10] sm:$0xff] %vm1277, %v3957
      %3962 = vst.msk [vmem:[#allocation5 + $0x20] sm:$0xff] %vm1277, %v3958
      %3963 = vst.msk [vmem:[#allocation5 + $0x30] sm:$0xff] %vm1277, %v3959
      %v3964 = vld [vmem:[#allocation4] sm:$0xff]
      %v3965 = vld [vmem:[#allocation4 + $0x8] sm:$0xff]
      %v3966 = vld [vmem:[#allocation4 + $0x10] sm:$0xff]
      %v3967 = vld [vmem:[#allocation4 + $0x18] sm:$0xff]
      %3972 = vrot.lane.b32.xlu0 %v3964, 127
      %v3973 = vpop.permute.xlu0 %3972
      %3974 = vrot.lane.b32.xlu0 %v3965, 127
      %v3975 = vpop.permute.xlu0 %3974
      %3976 = vrot.lane.b32.xlu0 %v3966, 127
      %v3977 = vpop.permute.xlu0 %3976
      %3978 = vrot.lane.b32.xlu0 %v3967, 127
      %v3979 = vpop.permute.xlu0 %3978
      %3984 = vst.msk [vmem:[#allocation5 + $0x40] sm:$0xff] %vm1277, %v3973
      %3985 = vst.msk [vmem:[#allocation5 + $0x50] sm:$0xff] %vm1277, %v3975
      %3986 = vst.msk [vmem:[#allocation5 + $0x60] sm:$0xff] %vm1277, %v3977
      %3987 = vst.msk [vmem:[#allocation5 + $0x70] sm:$0xff] %vm1277, %v3979
      %v3988 = vld [vmem:[#allocation4] sm:$0xff]
      %v3989 = vld [vmem:[#allocation4 + $0x8] sm:$0xff]
      %v3990 = vld [vmem:[#allocation4 + $0x10] sm:$0xff]
      %v3991 = vld [vmem:[#allocation4 + $0x18] sm:$0xff]
      %v3993 = vpack.i.b16 %v3944, %v3944
      %v3995 = vlaneseq
      %v3996 = vshrl.u32 %v3995, 7
      %v3997 = vsub.s32 0, %v3996
      %v3998 = vrot.slane %v3993, %v3997
      %4000 = vrot.lane.b32.xlu0 %v3998, 2
      %v4001 = vpop.permute.xlu0 %4000
      %v4003 = vmul.bf16 %v3988, %v4001
      %v4004 = vmul.bf16 %v3989, %v4001
      %v4005 = vmul.bf16 %v3990, %v4001
      %v4006 = vmul.bf16 %v3991, %v4001
      %4011 = vrot.lane.b32.xlu0 %v4003, 126
      %v4012 = vpop.permute.xlu0 %4011
      %4013 = vrot.lane.b32.xlu0 %v4004, 126
      %v4014 = vpop.permute.xlu0 %4013
      %4015 = vrot.lane.b32.xlu0 %v4005, 126
      %v4016 = vpop.permute.xlu0 %4015
      %4017 = vrot.lane.b32.xlu0 %v4006, 126
      %v4018 = vpop.permute.xlu0 %4017
      %4023 = vst.msk [vmem:[#allocation5 + $0x80] sm:$0xff] %vm1277, %v4012
      %4024 = vst.msk [vmem:[#allocation5 + $0x90] sm:$0xff] %vm1277, %v4014
      %4025 = vst.msk [vmem:[#allocation5 + $0xa0] sm:$0xff] %vm1277, %v4016
      %4026 = vst.msk [vmem:[#allocation5 + $0xb0] sm:$0xff] %vm1277, %v4018
      %v4027 = vld [vmem:[#allocation4] sm:$0xff]
      %v4028 = vld [vmem:[#allocation4 + $0x8] sm:$0xff]
      %v4029 = vld [vmem:[#allocation4 + $0x10] sm:$0xff]
      %v4030 = vld [vmem:[#allocation4 + $0x18] sm:$0xff]
      %4032 = vrot.lane.b32.xlu0 %v3955, 4
      %v4033 = vpop.permute.xlu0 %4032
      %v4035 = vmul.bf16 %v4027, %v4033
      %v4036 = vmul.bf16 %v4028, %v4033
      %v4037 = vmul.bf16 %v4029, %v4033
      %v4038 = vmul.bf16 %v4030, %v4033
      %4043 = vrot.lane.b32.xlu0 %v4035, 124
      %v4044 = vpop.permute.xlu0 %4043
      %4045 = vrot.lane.b32.xlu0 %v4036, 124
      %v4046 = vpop.permute.xlu0 %4045
      %4047 = vrot.lane.b32.xlu0 %v4037, 124
      %v4048 = vpop.permute.xlu0 %4047
      %4049 = vrot.lane.b32.xlu0 %v4038, 124
      %v4050 = vpop.permute.xlu0 %4049
      %4055 = vst.msk [vmem:[#allocation5 + $0xc0] sm:$0xff] %vm1277, %v4044
      %4056 = vst.msk [vmem:[#allocation5 + $0xd0] sm:$0xff] %vm1277, %v4046
      %4057 = vst.msk [vmem:[#allocation5 + $0xe0] sm:$0xff] %vm1277, %v4048
      %4058 = vst.msk [vmem:[#allocation5 + $0xf0] sm:$0xff] %vm1277, %v4050
      %v4059 = vld [vmem:[#allocation4] sm:$0xff]
      %v4060 = vld [vmem:[#allocation4 + $0x8] sm:$0xff]
      %v4061 = vld [vmem:[#allocation4 + $0x10] sm:$0xff]
      %v4062 = vld [vmem:[#allocation4 + $0x18] sm:$0xff]
      %4067 = vrot.lane.b32.xlu0 %v4059, 123
      %v4068 = vpop.permute.xlu0 %4067
      %4069 = vrot.lane.b32.xlu0 %v4060, 123
      %v4070 = vpop.permute.xlu0 %4069
      %4071 = vrot.lane.b32.xlu0 %v4061, 123
      %v4072 = vpop.permute.xlu0 %4071
      %4073 = vrot.lane.b32.xlu0 %v4062, 123
      %v4074 = vpop.permute.xlu0 %4073
      %4079 = vst.msk [vmem:[#allocation5 + $0x100] sm:$0xff] %vm1277, %v4068
      %4080 = vst.msk [vmem:[#allocation5 + $0x110] sm:$0xff] %vm1277, %v4070
      %4081 = vst.msk [vmem:[#allocation5 + $0x120] sm:$0xff] %vm1277, %v4072
      %4082 = vst.msk [vmem:[#allocation5 + $0x130] sm:$0xff] %vm1277, %v4074
      %v4083 = vld [vmem:[#allocation4] sm:$0xff]
      %v4084 = vld [vmem:[#allocation4 + $0x8] sm:$0xff]
      %v4085 = vld [vmem:[#allocation4 + $0x10] sm:$0xff]
      %v4086 = vld [vmem:[#allocation4 + $0x18] sm:$0xff]
      %4087 = vrot.lane.b32.xlu0 %v3998, 6
      %v4088 = vpop.permute.xlu0 %4087
      %v4090 = vmul.bf16 %v4083, %v4088
      %v4091 = vmul.bf16 %v4084, %v4088
      %v4092 = vmul.bf16 %v4085, %v4088
      %v4093 = vmul.bf16 %v4086, %v4088
      %4098 = vrot.lane.b32.xlu0 %v4090, 122
      %v4099 = vpop.permute.xlu0 %4098
      %4100 = vrot.lane.b32.xlu0 %v4091, 122
      %v4101 = vpop.permute.xlu0 %4100
      %4102 = vrot.lane.b32.xlu0 %v4092, 122
      %v4103 = vpop.permute.xlu0 %4102
      %4104 = vrot.lane.b32.xlu0 %v4093, 122
      %v4105 = vpop.permute.xlu0 %4104
      %4110 = vst.msk [vmem:[#allocation5 + $0x140] sm:$0xff] %vm1277, %v4099
      %4111 = vst.msk [vmem:[#allocation5 + $0x150] sm:$0xff] %vm1277, %v4101
      %4112 = vst.msk [vmem:[#allocation5 + $0x160] sm:$0xff] %vm1277, %v4103
      %4113 = vst.msk [vmem:[#allocation5 + $0x170] sm:$0xff] %vm1277, %v4105
      %v4114 = vld [vmem:[#allocation4] sm:$0xff]
      %v4115 = vld [vmem:[#allocation4 + $0x8] sm:$0xff]
      %v4116 = vld [vmem:[#allocation4 + $0x10] sm:$0xff]
      %v4117 = vld [vmem:[#allocation4 + $0x18] sm:$0xff]
      %4118 = vrot.lane.b32.xlu0 %v3955, 8
      %v4119 = vpop.permute.xlu0 %4118
      %v4121 = vmul.bf16 %v4114, %v4119
      %v4122 = vmul.bf16 %v4115, %v4119
      %v4123 = vmul.bf16 %v4116, %v4119
      %v4124 = vmul.bf16 %v4117, %v4119
      %4129 = vrot.lane.b32.xlu0 %v4121, 120
      %v4130 = vpop.permute.xlu0 %4129
      %4131 = vrot.lane.b32.xlu0 %v4122, 120
      %v4132 = vpop.permute.xlu0 %4131
      %4133 = vrot.lane.b32.xlu0 %v4123, 120
      %v4134 = vpop.permute.xlu0 %4133
      %4135 = vrot.lane.b32.xlu0 %v4124, 120
      %v4136 = vpop.permute.xlu0 %4135
      %4141 = vst.msk [vmem:[#allocation5 + $0x180] sm:$0xff] %vm1277, %v4130
      %4142 = vst.msk [vmem:[#allocation5 + $0x190] sm:$0xff] %vm1277, %v4132
      %4143 = vst.msk [vmem:[#allocation5 + $0x1a0] sm:$0xff] %vm1277, %v4134
      %4144 = vst.msk [vmem:[#allocation5 + $0x1b0] sm:$0xff] %vm1277, %v4136
      %v4145 = vld [vmem:[#allocation4] sm:$0xff]
      %v4146 = vld [vmem:[#allocation4 + $0x8] sm:$0xff]
      %v4147 = vld [vmem:[#allocation4 + $0x10] sm:$0xff]
      %v4148 = vld [vmem:[#allocation4 + $0x18] sm:$0xff]
      %4153 = vrot.lane.b32.xlu0 %v4145, 119
      %v4154 = vpop.permute.xlu0 %4153
      %4155 = vrot.lane.b32.xlu0 %v4146, 119
      %v4156 = vpop.permute.xlu0 %4155
      %4157 = vrot.lane.b32.xlu0 %v4147, 119
      %v4158 = vpop.permute.xlu0 %4157
      %4159 = vrot.lane.b32.xlu0 %v4148, 119
      %v4160 = vpop.permute.xlu0 %4159
      %4165 = vst.msk [vmem:[#allocation5 + $0x1c0] sm:$0xff] %vm1277, %v4154
      %4166 = vst.msk [vmem:[#allocation5 + $0x1d0] sm:$0xff] %vm1277, %v4156
      %4167 = vst.msk [vmem:[#allocation5 + $0x1e0] sm:$0xff] %vm1277, %v4158
      %4168 = vst.msk [vmem:[#allocation5 + $0x1f0] sm:$0xff] %vm1277, %v4160
      %v4169 = vld [vmem:[#allocation4] sm:$0xff]
      %v4170 = vld [vmem:[#allocation4 + $0x8] sm:$0xff]
      %v4171 = vld [vmem:[#allocation4 + $0x10] sm:$0xff]
      %v4172 = vld [vmem:[#allocation4 + $0x18] sm:$0xff]
      %4173 = vrot.lane.b32.xlu0 %v3998, 10
      %v4174 = vpop.permute.xlu0 %4173
      %v4176 = vmul.bf16 %v4169, %v4174
      %v4177 = vmul.bf16 %v4170, %v4174
      %v4178 = vmul.bf16 %v4171, %v4174
      %v4179 = vmul.bf16 %v4172, %v4174
      %4184 = vrot.lane.b32.xlu0 %v4176, 118
      %v4185 = vpop.permute.xlu0 %4184
      %4186 = vrot.lane.b32.xlu0 %v4177, 118
      %v4187 = vpop.permute.xlu0 %4186
      %4188 = vrot.lane.b32.xlu0 %v4178, 118
      %v4189 = vpop.permute.xlu0 %4188
      %4190 = vrot.lane.b32.xlu0 %v4179, 118
      %v4191 = vpop.permute.xlu0 %4190
      %4196 = vst.msk [vmem:[#allocation5 + $0x200] sm:$0xff] %vm1277, %v4185
      %4197 = vst.msk [vmem:[#allocation5 + $0x210] sm:$0xff] %vm1277, %v4187
      %4198 = vst.msk [vmem:[#allocation5 + $0x220] sm:$0xff] %vm1277, %v4189
      %4199 = vst.msk [vmem:[#allocation5 + $0x230] sm:$0xff] %vm1277, %v4191
      %v4200 = vld [vmem:[%s47] sm:$0xff]
      %v4201 = vld [vmem:[%s47 + $0x8] sm:$0xff]
      %v4202 = vld [vmem:[%s47 + $0x10] sm:$0xf]
      %v4203 = vld [vmem:[%s47 + $0x14] sm:$0xff]
      %v4204 = vld [vmem:[%s47 + $0x1c] sm:$0xff]
      %v4205 = vld [vmem:[%s47 + $0x24] sm:$0xf]
      %v4206 = vld [vmem:[%s47 + $0x28] sm:$0xff]
      %v4207 = vld [vmem:[%s47 + $0x30] sm:$0xff]
      %v4208 = vld [vmem:[%s47 + $0x38] sm:$0xf]
      %v4209 = vld [vmem:[%s47 + $0x3c] sm:$0xff]
      %v4210 = vld [vmem:[%s47 + $0x44] sm:$0xff]
      %v4211 = vld [vmem:[%s47 + $0x4c] sm:$0xf]
      %v4212 = vld [vmem:[%s47 + $0x50] sm:$0xff]
      %v4213 = vld [vmem:[%s47 + $0x58] sm:$0xff]
      %v4214 = vld [vmem:[%s47 + $0x60] sm:$0xf]
      %v4215 = vld [vmem:[%s47 + $0x64] sm:$0xff]
      %v4216 = vld [vmem:[%s47 + $0x6c] sm:$0xff]
      %v4217 = vld [vmem:[%s47 + $0x74] sm:$0xf]
      %v4218 = vld [vmem:[%s47 + $0x78] sm:$0xff]
      %v4219 = vld [vmem:[%s47 + $0x80] sm:$0xff]
      %v4220 = vld [vmem:[%s47 + $0x88] sm:$0xf]
      %v4221 = vld [vmem:[%s47 + $0x8c] sm:$0xff]
      %v4222 = vld [vmem:[%s47 + $0x94] sm:$0xff]
      %v4223 = vld [vmem:[%s47 + $0x9c] sm:$0xf]
      %v4224 = vld [vmem:[#allocation5] sm:$0xff]
      %v4225 = vld [vmem:[#allocation5 + $0x10] sm:$0xff]
      %v4226 = vld [vmem:[#allocation5 + $0x20] sm:$0xff]
      %v4227 = vld [vmem:[#allocation5 + $0x30] sm:$0xff]
      %v4228 = vld [vmem:[#allocation5 + $0x40] sm:$0xff]
      %v4229 = vld [vmem:[#allocation5 + $0x50] sm:$0xff]
      %v4230 = vld [vmem:[#allocation5 + $0x60] sm:$0xff]
      %v4231 = vld [vmem:[#allocation5 + $0x70] sm:$0xff]
      %v4232 = vld [vmem:[#allocation5 + $0x80] sm:$0xff]
      %v4233 = vld [vmem:[#allocation5 + $0x90] sm:$0xff]
      %v4234 = vld [vmem:[#allocation5 + $0xa0] sm:$0xff]
      %v4235 = vld [vmem:[#allocation5 + $0xb0] sm:$0xff]
      %v4236 = vld [vmem:[#allocation5 + $0xc0] sm:$0xff]
      %v4237 = vld [vmem:[#allocation5 + $0xd0] sm:$0xff]
      %v4238 = vld [vmem:[#allocation5 + $0xe0] sm:$0xff]
      %v4239 = vld [vmem:[#allocation5 + $0xf0] sm:$0xff]
      %v4240 = vld [vmem:[#allocation5 + $0x100] sm:$0xff]
      %v4241 = vld [vmem:[#allocation5 + $0x110] sm:$0xff]
      %v4242 = vld [vmem:[#allocation5 + $0x120] sm:$0xff]
      %v4243 = vld [vmem:[#allocation5 + $0x130] sm:$0xff]
      %v4244 = vld [vmem:[#allocation5 + $0x140] sm:$0xff]
      %v4245 = vld [vmem:[#allocation5 + $0x150] sm:$0xff]
      %v4246 = vld [vmem:[#allocation5 + $0x160] sm:$0xff]
      %v4247 = vld [vmem:[#allocation5 + $0x170] sm:$0xff]
      %v4248 = vld [vmem:[#allocation5 + $0x180] sm:$0xff]
      %v4249 = vld [vmem:[#allocation5 + $0x190] sm:$0xff]
      %v4250 = vld [vmem:[#allocation5 + $0x1a0] sm:$0xff]
      %v4251 = vld [vmem:[#allocation5 + $0x1b0] sm:$0xff]
      %v4252 = vld [vmem:[#allocation5 + $0x1c0] sm:$0xff]
      %v4253 = vld [vmem:[#allocation5 + $0x1d0] sm:$0xff]
      %v4254 = vld [vmem:[#allocation5 + $0x1e0] sm:$0xff]
      %v4255 = vld [vmem:[#allocation5 + $0x1f0] sm:$0xff]
      %v4256 = vld [vmem:[#allocation5 + $0x200] sm:$0xff]
      %v4257 = vld [vmem:[#allocation5 + $0x210] sm:$0xff]
      %v4258 = vld [vmem:[#allocation5 + $0x220] sm:$0xff]
      %v4259 = vld [vmem:[#allocation5 + $0x230] sm:$0xff]
      %v4260 = vld [vmem:[%s49] sm:$0xff]
      %v4261 = vld [vmem:[%s49 + $0x8] sm:$0xff]
      %v4262 = vld [vmem:[%s49 + $0x10] sm:$0xff]
      %v4263 = vld [vmem:[%s49 + $0x18] sm:$0xff]
      %v4264 = vld [vmem:[%s49 + $0x20] sm:$0xff]
      %v4265 = vld [vmem:[%s49 + $0x28] sm:$0xff]
      %v4266 = vld [vmem:[%s49 + $0x30] sm:$0xff]
      %v4267 = vld [vmem:[%s49 + $0x38] sm:$0xff]
      %4269 = vset.pattern.permute.xlu0 0
      %4270 = vperm.xlu0 %4269, %v4260
      %v4271 = vpop.permute.xlu0 %4270
      %4274 = vset.pattern.permute.xlu0 0
      %4275 = vperm.xlu0 %4274, %v4261
      %v4276 = vpop.permute.xlu0 %4275
      %4279 = vset.pattern.permute.xlu0 0
      %4280 = vperm.xlu0 %4279, %v4262
      %v4281 = vpop.permute.xlu0 %4280
      %4284 = vset.pattern.permute.xlu0 0
      %4285 = vperm.xlu0 %4284, %v4263
      %v4286 = vpop.permute.xlu0 %4285
      %4289 = vset.pattern.permute.xlu0 0
      %4290 = vperm.xlu0 %4289, %v4264
      %v4291 = vpop.permute.xlu0 %4290
      %4294 = vset.pattern.permute.xlu0 0
      %4295 = vperm.xlu0 %4294, %v4265
      %v4296 = vpop.permute.xlu0 %4295
      %4299 = vset.pattern.permute.xlu0 0
      %4300 = vperm.xlu0 %4299, %v4266
      %v4301 = vpop.permute.xlu0 %4300
      %4304 = vset.pattern.permute.xlu0 0
      %4305 = vperm.xlu0 %4304, %v4267
      %v4306 = vpop.permute.xlu0 %4305
      %v4332 = vunpack.c.l.b16 %v4200
      %v4333 = vunpack.c.h.b16 %v4200
      %v4334 = vunpack.c.l.b16 %v4201
      %v4335 = vunpack.c.h.b16 %v4201
      %v4336 = vunpack.c.l.b16 %v4202
      %v4337 = vunpack.c.l.b16 %v4203
      %v4338 = vunpack.c.h.b16 %v4203
      %v4339 = vunpack.c.l.b16 %v4204
      %v4340 = vunpack.c.h.b16 %v4204
      %v4341 = vunpack.c.l.b16 %v4205
      %v4342 = vunpack.c.l.b16 %v4206
      %v4343 = vunpack.c.h.b16 %v4206
      %v4344 = vunpack.c.l.b16 %v4207
      %v4345 = vunpack.c.h.b16 %v4207
      %v4346 = vunpack.c.l.b16 %v4208
      %v4347 = vunpack.c.l.b16 %v4209
      %v4348 = vunpack.c.h.b16 %v4209
      %v4349 = vunpack.c.l.b16 %v4210
      %v4350 = vunpack.c.h.b16 %v4210
      %v4351 = vunpack.c.l.b16 %v4211
      %v4352 = vunpack.c.l.b16 %v4212
      %v4353 = vunpack.c.h.b16 %v4212
      %v4354 = vunpack.c.l.b16 %v4213
      %v4355 = vunpack.c.h.b16 %v4213
      %v4356 = vunpack.c.l.b16 %v4214
      %v4357 = vunpack.c.l.b16 %v4215
      %v4358 = vunpack.c.h.b16 %v4215
      %v4359 = vunpack.c.l.b16 %v4216
      %v4360 = vunpack.c.h.b16 %v4216
      %v4361 = vunpack.c.l.b16 %v4217
      %v4362 = vunpack.c.l.b16 %v4218
      %v4363 = vunpack.c.h.b16 %v4218
      %v4364 = vunpack.c.l.b16 %v4219
      %v4365 = vunpack.c.h.b16 %v4219
      %v4366 = vunpack.c.l.b16 %v4220
      %v4367 = vunpack.c.l.b16 %v4221
      %v4368 = vunpack.c.h.b16 %v4221
      %v4369 = vunpack.c.l.b16 %v4222
      %v4370 = vunpack.c.h.b16 %v4222
      %v4371 = vunpack.c.l.b16 %v4223
      %v4372 = vpack.c.b16 %v4337, %v4332
      %v4373 = vpack.c.b16 %v4338, %v4333
      %v4374 = vpack.c.b16 %v4339, %v4334
      %v4375 = vpack.c.b16 %v4340, %v4335
      %v4376 = vpack.c.b16 %v4341, %v4336
      %v4377 = vpack.c.b16 %v4347, %v4342
      %v4378 = vpack.c.b16 %v4348, %v4343
      %v4379 = vpack.c.b16 %v4349, %v4344
      %v4380 = vpack.c.b16 %v4350, %v4345
      %v4381 = vpack.c.b16 %v4351, %v4346
      %v4382 = vpack.c.b16 %v4357, %v4352
      %v4383 = vpack.c.b16 %v4358, %v4353
      %v4384 = vpack.c.b16 %v4359, %v4354
      %v4385 = vpack.c.b16 %v4360, %v4355
      %v4386 = vpack.c.b16 %v4361, %v4356
      %v4387 = vpack.c.b16 %v4367, %v4362
      %v4388 = vpack.c.b16 %v4368, %v4363
      %v4389 = vpack.c.b16 %v4369, %v4364
      %v4390 = vpack.c.b16 %v4370, %v4365
      %v4391 = vpack.c.b16 %v4371, %v4366
      %v4409 = vsel %vm2752, %v4376, 0
      %v4412 = vsel %vm2752, %v4381, 0
      %v4415 = vsel %vm2752, %v4386, 0
      %v4418 = vsel %vm2752, %v4391, 0
      %4420 = vmatprep.subr.bf16.mxu0 0
      %4421 = vmatpush1.bf16.msra.mxu0 %v4224
      %4422 = vmatprep.subr.bf16.mxu0 0
      %4423 = vmatpush1.bf16.msra.mxu0 %v4225
      %4424 = vmatprep.subr.bf16.mxu0 0
      %4425 = vmatpush1.bf16.msra.mxu0 %v4226
      %4426 = vmatprep.subr.bf16.mxu0 0
      %4427 = vmatpush1.bf16.msra.mxu0 %v4227
      %4428 = vmatprep.subr.bf16.mxu0 0
      %4429 = vmatpush1.bf16.msra.mxu0 %v4228
      %4430 = vmatprep.subr.bf16.mxu0 0
      %4431 = vmatpush1.bf16.msra.mxu0 %v4229
      %4432 = vmatprep.subr.bf16.mxu0 0
      %4433 = vmatpush1.bf16.msra.mxu0 %v4230
      %4434 = vmatprep.subr.bf16.mxu0 0
      %4435 = vmatpush1.bf16.msra.mxu0 %v4231
      %4436 = vmatprep.subr.bf16.mxu0 0
      %4437 = vmatpush1.bf16.msra.mxu0 %v4232
      %4438 = vmatprep.subr.bf16.mxu0 0
      %4439 = vmatpush1.bf16.msra.mxu0 %v4233
      %4440 = vmatprep.subr.bf16.mxu0 0
      %4441 = vmatpush1.bf16.msra.mxu0 %v4234
      %4442 = vmatprep.subr.bf16.mxu0 0
      %4443 = vmatpush1.bf16.msra.mxu0 %v4235
      %4444 = vmatprep.subr.bf16.mxu0 0
      %4445 = vmatpush1.bf16.msra.mxu0 %v4236
      %4446 = vmatprep.subr.bf16.mxu0 0
      %4447 = vmatpush1.bf16.msra.mxu0 %v4237
      %4448 = vmatprep.subr.bf16.mxu0 0
      %4449 = vmatpush1.bf16.msra.mxu0 %v4238
      %4450 = vmatprep.subr.bf16.mxu0 0
      %4451 = vmatpush1.bf16.msra.mxu0 %v4239
      %4452 = vmatprep.mubr.bf16.mxu0 %v4373
      %4453 = vmatmul.mubr.bf16.gmra.mrb[0].mxu0 %v4372
      %v4454 = vpop.f32.mrb[0].mxu0
      %v4455 = vadd.f32 %v4271, %v4454
      %v4456 = vpop.f32.mrb[0].mxu0
      %v4457 = vpop.f32.mrb[0].mxu0
      %v4458 = vadd.f32 %v4276, %v4457
      %v4459 = vpop.f32.mrb[0].mxu0
      %4460 = vmatprep.mubr.bf16.mxu0 %v4378
      %4461 = vmatmul.mubr.bf16.gmra.mrb[0].mxu0 %v4377
      %v4462 = vpop.f32.mrb[0].mxu0
      %v4463 = vadd.f32 %v4281, %v4462
      %v4464 = vpop.f32.mrb[0].mxu0
      %v4465 = vpop.f32.mrb[0].mxu0
      %v4466 = vadd.f32 %v4286, %v4465
      %v4467 = vpop.f32.mrb[0].mxu0
      %4468 = vmatprep.mubr.bf16.mxu0 %v4383
      %4469 = vmatmul.mubr.bf16.gmra.mrb[0].mxu0 %v4382
      %v4470 = vpop.f32.mrb[0].mxu0
      %v4471 = vadd.f32 %v4291, %v4470
      %v4472 = vpop.f32.mrb[0].mxu0
      %v4473 = vpop.f32.mrb[0].mxu0
      %v4474 = vadd.f32 %v4296, %v4473
      %v4475 = vpop.f32.mrb[0].mxu0
      %4476 = vmatprep.mubr.bf16.mxu0 %v4388
      %4477 = vmatmul.mubr.bf16.gmra.mrb[0].mxu0 %v4387
      %v4478 = vpop.f32.mrb[0].mxu0
      %v4479 = vadd.f32 %v4301, %v4478
      %v4480 = vpop.f32.mrb[0].mxu0
      %v4481 = vpop.f32.mrb[0].mxu0
      %v4482 = vadd.f32 %v4306, %v4481
      %v4483 = vpop.f32.mrb[0].mxu0
      %4484 = vdwg.mxu0
      %4485 = vmatprep.subr.bf16.mxu0 0
      %4486 = vmatpush1.bf16.msra.mxu0 %v4240
      %4487 = vmatprep.subr.bf16.mxu0 0
      %4488 = vmatpush1.bf16.msra.mxu0 %v4241
      %4489 = vmatprep.subr.bf16.mxu0 0
      %4490 = vmatpush1.bf16.msra.mxu0 %v4242
      %4491 = vmatprep.subr.bf16.mxu0 0
      %4492 = vmatpush1.bf16.msra.mxu0 %v4243
      %4493 = vmatprep.subr.bf16.mxu0 0
      %4494 = vmatpush1.bf16.msra.mxu0 %v4244
      %4495 = vmatprep.subr.bf16.mxu0 0
      %4496 = vmatpush1.bf16.msra.mxu0 %v4245
      %4497 = vmatprep.subr.bf16.mxu0 0
      %4498 = vmatpush1.bf16.msra.mxu0 %v4246
      %4499 = vmatprep.subr.bf16.mxu0 0
      %4500 = vmatpush1.bf16.msra.mxu0 %v4247
      %4501 = vmatprep.subr.bf16.mxu0 0
      %4502 = vmatpush1.bf16.msra.mxu0 %v4248
      %4503 = vmatprep.subr.bf16.mxu0 0
      %4504 = vmatpush1.bf16.msra.mxu0 %v4249
      %4505 = vmatprep.subr.bf16.mxu0 0
      %4506 = vmatpush1.bf16.msra.mxu0 %v4250
      %4507 = vmatprep.subr.bf16.mxu0 0
      %4508 = vmatpush1.bf16.msra.mxu0 %v4251
      %4509 = vmatprep.subr.bf16.mxu0 0
      %4510 = vmatpush1.bf16.msra.mxu0 %v4252
      %4511 = vmatprep.subr.bf16.mxu0 0
      %4512 = vmatpush1.bf16.msra.mxu0 %v4253
      %4513 = vmatprep.subr.bf16.mxu0 0
      %4514 = vmatpush1.bf16.msra.mxu0 %v4254
      %4515 = vmatprep.subr.bf16.mxu0 0
      %4516 = vmatpush1.bf16.msra.mxu0 %v4255
      %4517 = vmatprep.mubr.bf16.mxu0 %v4375
      %4518 = vmatmul.mubr.bf16.gmra.mrb[0].mxu0 %v4374
      %v4519 = vpop.f32.mrb[0].mxu0
      %v4520 = vadd.f32 %v4455, %v4519
      %v4521 = vpop.f32.mrb[0].mxu0
      %v4522 = vpop.f32.mrb[0].mxu0
      %v4523 = vadd.f32 %v4458, %v4522
      %v4524 = vpop.f32.mrb[0].mxu0
      %4525 = vmatprep.mubr.bf16.mxu0 %v4380
      %4526 = vmatmul.mubr.bf16.gmra.mrb[0].mxu0 %v4379
      %v4527 = vpop.f32.mrb[0].mxu0
      %v4528 = vadd.f32 %v4463, %v4527
      %v4529 = vpop.f32.mrb[0].mxu0
      %v4530 = vpop.f32.mrb[0].mxu0
      %v4531 = vadd.f32 %v4466, %v4530
      %v4532 = vpop.f32.mrb[0].mxu0
      %4533 = vmatprep.mubr.bf16.mxu0 %v4385
      %4534 = vmatmul.mubr.bf16.gmra.mrb[0].mxu0 %v4384
      %v4535 = vpop.f32.mrb[0].mxu0
      %v4536 = vadd.f32 %v4471, %v4535
      %v4537 = vpop.f32.mrb[0].mxu0
      %v4538 = vpop.f32.mrb[0].mxu0
      %v4539 = vadd.f32 %v4474, %v4538
      %v4540 = vpop.f32.mrb[0].mxu0
      %4541 = vmatprep.mubr.bf16.mxu0 %v4390
      %4542 = vmatmul.mubr.bf16.gmra.mrb[0].mxu0 %v4389
      %v4543 = vpop.f32.mrb[0].mxu0
      %v4544 = vadd.f32 %v4479, %v4543
      %v4545 = vpop.f32.mrb[0].mxu0
      %v4546 = vpop.f32.mrb[0].mxu0
      %v4547 = vadd.f32 %v4482, %v4546
      %v4548 = vpop.f32.mrb[0].mxu0
      %4549 = vdwg.mxu0
      %4550 = vmatprep.subr.bf16.mxu0 0
      %4551 = vmatpush1.bf16.msra.mxu0 %v4256
      %4552 = vmatprep.subr.bf16.mxu0 0
      %4553 = vmatpush1.bf16.msra.mxu0 %v4257
      %4554 = vmatprep.subr.bf16.mxu0 0
      %4555 = vmatpush1.bf16.msra.mxu0 %v4258
      %4556 = vmatprep.subr.bf16.mxu0 0
      %4557 = vmatpush1.bf16.msra.mxu0 %v4259
      %4558 = vmatprep.subr.bf16.mxu0 0
      %4559 = vmatpush1.bf16.msra.mxu0 0
      %4560 = vmatprep.subr.bf16.mxu0 0
      %4561 = vmatpush1.bf16.msra.mxu0 0
      %4562 = vmatprep.subr.bf16.mxu0 0
      %4563 = vmatpush1.bf16.msra.mxu0 0
      %4564 = vmatprep.subr.bf16.mxu0 0
      %4565 = vmatpush1.bf16.msra.mxu0 0
      %4566 = vmatprep.subr.bf16.mxu0 0
      %4567 = vmatpush1.bf16.msra.mxu0 0
      %4568 = vmatprep.subr.bf16.mxu0 0
      %4569 = vmatpush1.bf16.msra.mxu0 0
      %4570 = vmatprep.subr.bf16.mxu0 0
      %4571 = vmatpush1.bf16.msra.mxu0 0
      %4572 = vmatprep.subr.bf16.mxu0 0
      %4573 = vmatpush1.bf16.msra.mxu0 0
      %4574 = vmatprep.subr.bf16.mxu0 0
      %4575 = vmatpush1.bf16.msra.mxu0 0
      %4576 = vmatprep.subr.bf16.mxu0 0
      %4577 = vmatpush1.bf16.msra.mxu0 0
      %4578 = vmatprep.subr.bf16.mxu0 0
      %4579 = vmatpush1.bf16.msra.mxu0 0
      %4580 = vmatprep.subr.bf16.mxu0 0
      %4581 = vmatpush1.bf16.msra.mxu0 0
      %4582 = vmatprep.mubr.bf16.mxu0 0
      %4583 = vmatmul.mubr.bf16.gmra.mrb[0].mxu0 %v4409
      %v4584 = vpop.f32.mrb[0].mxu0
      %v4585 = vadd.f32 %v4520, %v4584
      %v4586 = vpop.f32.mrb[0].mxu0
      %v4587 = vpop.f32.mrb[0].mxu0
      %v4588 = vadd.f32 %v4523, %v4587
      %v4589 = vpop.f32.mrb[0].mxu0
      %4590 = vmatprep.mubr.bf16.mxu0 0
      %4591 = vmatmul.mubr.bf16.gmra.mrb[0].mxu0 %v4412
      %v4592 = vpop.f32.mrb[0].mxu0
      %v4593 = vadd.f32 %v4528, %v4592
      %v4594 = vpop.f32.mrb[0].mxu0
      %v4595 = vpop.f32.mrb[0].mxu0
      %v4596 = vadd.f32 %v4531, %v4595
      %v4597 = vpop.f32.mrb[0].mxu0
      %4598 = vmatprep.mubr.bf16.mxu0 0
      %4599 = vmatmul.mubr.bf16.gmra.mrb[0].mxu0 %v4415
      %v4600 = vpop.f32.mrb[0].mxu0
      %v4601 = vadd.f32 %v4536, %v4600
      %v4602 = vpop.f32.mrb[0].mxu0
      %v4603 = vpop.f32.mrb[0].mxu0
      %v4604 = vadd.f32 %v4539, %v4603
      %v4605 = vpop.f32.mrb[0].mxu0
      %4606 = vmatprep.mubr.bf16.mxu0 0
      %4607 = vmatmul.mubr.bf16.gmra.mrb[0].mxu0 %v4418
      %v4608 = vpop.f32.mrb[0].mxu0
      %v4609 = vadd.f32 %v4544, %v4608
      %v4610 = vpop.f32.mrb[0].mxu0
      %v4611 = vpop.f32.mrb[0].mxu0
      %v4612 = vadd.f32 %v4547, %v4611
      %v4613 = vpop.f32.mrb[0].mxu0
      %4614 = vdwg.mxu0
      %v4615 = vld [vmem:[%s51] sm:$0xf]
      %v4616 = vld [vmem:[%s51 + $0x4] sm:$0xf]
      %v4617 = vld [vmem:[%s51 + $0x8] sm:$0xf]
      %v4618 = vld [vmem:[%s51 + $0xc] sm:$0xf]
      %v4619 = vld [vmem:[%s51 + $0x10] sm:$0xf]
      %v4620 = vld [vmem:[%s51 + $0x14] sm:$0xf]
      %v4621 = vld [vmem:[%s51 + $0x18] sm:$0xf]
      %v4622 = vld [vmem:[%s51 + $0x1c] sm:$0xf]
      %v4623 = vld [vmem:[%s53] sm:$0xff]
      %v4624 = vld [vmem:[%s53 + $0x8] sm:$0xff]
      %v4625 = vld [vmem:[%s53 + $0x10] sm:$0xff]
      %v4626 = vld [vmem:[%s53 + $0x18] sm:$0xff]
      %v4627 = vld [vmem:[%s53 + $0x20] sm:$0xff]
      %v4628 = vld [vmem:[%s53 + $0x28] sm:$0xff]
      %v4629 = vld [vmem:[%s53 + $0x30] sm:$0xff]
      %v4630 = vld [vmem:[%s53 + $0x38] sm:$0xff]
      %4632 = vset.pattern.permute.xlu0 0
      %4633 = vperm.xlu0 %4632, %v4623
      %v4634 = vpop.permute.xlu0 %4633
      %4637 = vset.pattern.permute.xlu0 0
      %4638 = vperm.xlu0 %4637, %v4624
      %v4639 = vpop.permute.xlu0 %4638
      %4642 = vset.pattern.permute.xlu0 0
      %4643 = vperm.xlu0 %4642, %v4625
      %v4644 = vpop.permute.xlu0 %4643
      %4647 = vset.pattern.permute.xlu0 0
      %4648 = vperm.xlu0 %4647, %v4626
      %v4649 = vpop.permute.xlu0 %4648
      %4652 = vset.pattern.permute.xlu0 0
      %4653 = vperm.xlu0 %4652, %v4627
      %v4654 = vpop.permute.xlu0 %4653
      %4657 = vset.pattern.permute.xlu0 0
      %4658 = vperm.xlu0 %4657, %v4628
      %v4659 = vpop.permute.xlu0 %4658
      %4662 = vset.pattern.permute.xlu0 0
      %4663 = vperm.xlu0 %4662, %v4629
      %v4664 = vpop.permute.xlu0 %4663
      %4667 = vset.pattern.permute.xlu0 0
      %4668 = vperm.xlu0 %4667, %v4630
      %v4669 = vpop.permute.xlu0 %4668
      %v4679 = vunpack.c.l.b16 %v4615
      %v4680 = vunpack.c.l.b16 %v4616
      %v4681 = vunpack.c.l.b16 %v4617
      %v4682 = vunpack.c.l.b16 %v4618
      %v4683 = vunpack.c.l.b16 %v4619
      %v4684 = vunpack.c.l.b16 %v4620
      %v4685 = vunpack.c.l.b16 %v4621
      %v4686 = vunpack.c.l.b16 %v4622
      %v4687 = vpack.c.b16 %v4680, %v4679
      %v4688 = vpack.c.b16 %v4682, %v4681
      %v4689 = vpack.c.b16 %v4684, %v4683
      %v4690 = vpack.c.b16 %v4686, %v4685
      %v4692 = vsel %vm2965, %v4687, 0
      %v4695 = vsel %vm2965, %v4688, 0
      %v4698 = vsel %vm2965, %v4689, 0
      %v4701 = vsel %vm2965, %v4690, 0
      %4703 = vmatprep.subr.bf16.mxu0 0
      %4704 = vmatpush1.bf16.msra.mxu0 %v3356
      %4705 = vmatprep.subr.bf16.mxu0 0
      %4706 = vmatpush1.bf16.msra.mxu0 %v3357
      %4707 = vmatprep.subr.bf16.mxu0 0
      %4708 = vmatpush1.bf16.msra.mxu0 0
      %4709 = vmatprep.subr.bf16.mxu0 0
      %4710 = vmatpush1.bf16.msra.mxu0 0
      %4711 = vmatprep.subr.bf16.mxu0 0
      %4712 = vmatpush1.bf16.msra.mxu0 0
      %4713 = vmatprep.subr.bf16.mxu0 0
      %4714 = vmatpush1.bf16.msra.mxu0 0
      %4715 = vmatprep.subr.bf16.mxu0 0
      %4716 = vmatpush1.bf16.msra.mxu0 0
      %4717 = vmatprep.subr.bf16.mxu0 0
      %4718 = vmatpush1.bf16.msra.mxu0 0
      %4719 = vmatprep.subr.bf16.mxu0 0
      %4720 = vmatpush1.bf16.msra.mxu0 0
      %4721 = vmatprep.subr.bf16.mxu0 0
      %4722 = vmatpush1.bf16.msra.mxu0 0
      %4723 = vmatprep.subr.bf16.mxu0 0
      %4724 = vmatpush1.bf16.msra.mxu0 0
      %4725 = vmatprep.subr.bf16.mxu0 0
      %4726 = vmatpush1.bf16.msra.mxu0 0
      %4727 = vmatprep.subr.bf16.mxu0 0
      %4728 = vmatpush1.bf16.msra.mxu0 0
      %4729 = vmatprep.subr.bf16.mxu0 0
      %4730 = vmatpush1.bf16.msra.mxu0 0
      %4731 = vmatprep.subr.bf16.mxu0 0
      %4732 = vmatpush1.bf16.msra.mxu0 0
      %4733 = vmatprep.subr.bf16.mxu0 0
      %4734 = vmatpush1.bf16.msra.mxu0 0
      %4735 = vmatprep.mubr.bf16.mxu0 0
      %4736 = vmatmul.mubr.bf16.gmra.mrb[0].mxu0 %v4692
      %v4737 = vpop.f32.mrb[0].mxu0
      %v4738 = vadd.f32 %v4634, %v4737
      %v4739 = vpop.f32.mrb[0].mxu0
      %v4740 = vpop.f32.mrb[0].mxu0
      %v4741 = vadd.f32 %v4639, %v4740
      %v4742 = vpop.f32.mrb[0].mxu0
      %4743 = vmatprep.mubr.bf16.mxu0 0
      %4744 = vmatmul.mubr.bf16.gmra.mrb[0].mxu0 %v4695
      %v4745 = vpop.f32.mrb[0].mxu0
      %v4746 = vadd.f32 %v4644, %v4745
      %v4747 = vpop.f32.mrb[0].mxu0
      %v4748 = vpop.f32.mrb[0].mxu0
      %v4749 = vadd.f32 %v4649, %v4748
      %v4750 = vpop.f32.mrb[0].mxu0
      %4751 = vmatprep.mubr.bf16.mxu0 0
      %4752 = vmatmul.mubr.bf16.gmra.mrb[0].mxu0 %v4698
      %v4753 = vpop.f32.mrb[0].mxu0
      %v4754 = vadd.f32 %v4654, %v4753
      %v4755 = vpop.f32.mrb[0].mxu0
      %v4756 = vpop.f32.mrb[0].mxu0
      %v4757 = vadd.f32 %v4659, %v4756
      %v4758 = vpop.f32.mrb[0].mxu0
      %4759 = vmatprep.mubr.bf16.mxu0 0
      %4760 = vmatmul.mubr.bf16.gmra.mrb[0].mxu0 %v4701
      %v4761 = vpop.f32.mrb[0].mxu0
      %v4762 = vadd.f32 %v4664, %v4761
      %v4763 = vpop.f32.mrb[0].mxu0
      %v4764 = vpop.f32.mrb[0].mxu0
      %v4765 = vadd.f32 %v4669, %v4764
      %v4766 = vpop.f32.mrb[0].mxu0
      %4767 = vdwg.mxu0
      %v4768 = vpack.c.bf16 %v4741, %v4738
      %v4769 = vpack.c.bf16 %v4749, %v4746
      %v4770 = vpack.c.bf16 %v4757, %v4754
      %v4771 = vpack.c.bf16 %v4765, %v4762
      %v4772 = vld [vmem:[%s17] sm:$0xf]
      %v4773 = vld [vmem:[%s17 + $0x4] sm:$0xf]
      %v4774 = vld [vmem:[%s17 + $0x8] sm:$0xf]
      %v4775 = vld [vmem:[%s17 + $0xc] sm:$0xf]
      %v4776 = vld [vmem:[%s17 + $0x10] sm:$0xf]
      %v4777 = vld [vmem:[%s17 + $0x14] sm:$0xf]
      %v4778 = vld [vmem:[%s17 + $0x18] sm:$0xf]
      %v4779 = vld [vmem:[%s17 + $0x1c] sm:$0xf]
      %v4788 = vunpack.c.l.b16 %v4772
      %v4789 = vunpack.c.l.b16 %v4773
      %v4790 = vunpack.c.l.b16 %v4774
      %v4791 = vunpack.c.l.b16 %v4775
      %v4792 = vunpack.c.l.b16 %v4776
      %v4793 = vunpack.c.l.b16 %v4777
      %v4794 = vunpack.c.l.b16 %v4778
      %v4795 = vunpack.c.l.b16 %v4779
      %v4796 = vpack.c.b16 %v4789, %v4788
      %v4797 = vpack.c.b16 %v4791, %v4790
      %v4798 = vpack.c.b16 %v4793, %v4792
      %v4799 = vpack.c.b16 %v4795, %v4794
      %v4805 = vsel %vm2752, %v4768, 0
      %v4808 = vsel %vm2752, %v4769, 0
      %v4811 = vsel %vm2752, %v4770, 0
      %v4814 = vsel %vm2752, %v4771, 0
      %4816 = vmatprep.subr.bf16.mxu0 0
      %4817 = vmatpush1.bf16.msra.mxu0 %v4796
      %4818 = vmatprep.subr.bf16.mxu0 0
      %4819 = vmatpush1.bf16.msra.mxu0 %v4797
      %4820 = vmatprep.subr.bf16.mxu0 0
      %4821 = vmatpush1.bf16.msra.mxu0 %v4798
      %4822 = vmatprep.subr.bf16.mxu0 0
      %4823 = vmatpush1.bf16.msra.mxu0 %v4799
      %4824 = vmatprep.subr.bf16.mxu0 0
      %4825 = vmatpush1.bf16.msra.mxu0 0
      %4826 = vmatprep.subr.bf16.mxu0 0
      %4827 = vmatpush1.bf16.msra.mxu0 0
      %4828 = vmatprep.subr.bf16.mxu0 0
      %4829 = vmatpush1.bf16.msra.mxu0 0
      %4830 = vmatprep.subr.bf16.mxu0 0
      %4831 = vmatpush1.bf16.msra.mxu0 0
      %4832 = vmatprep.subr.bf16.mxu0 0
      %4833 = vmatpush1.bf16.msra.mxu0 0
      %4834 = vmatprep.subr.bf16.mxu0 0
      %4835 = vmatpush1.bf16.msra.mxu0 0
      %4836 = vmatprep.subr.bf16.mxu0 0
      %4837 = vmatpush1.bf16.msra.mxu0 0
      %4838 = vmatprep.subr.bf16.mxu0 0
      %4839 = vmatpush1.bf16.msra.mxu0 0
      %4840 = vmatprep.subr.bf16.mxu0 0
      %4841 = vmatpush1.bf16.msra.mxu0 0
      %4842 = vmatprep.subr.bf16.mxu0 0
      %4843 = vmatpush1.bf16.msra.mxu0 0
      %4844 = vmatprep.subr.bf16.mxu0 0
      %4845 = vmatpush1.bf16.msra.mxu0 0
      %4846 = vmatprep.subr.bf16.mxu0 0
      %4847 = vmatpush1.bf16.msra.mxu0 0
      %4848 = vmatprep.mubr.bf16.mxu0 0
      %4849 = vmatmul.mubr.bf16.gmra.mrb[0].mxu0 %v4805
      %v4850 = vpop.f32.mrb[0].mxu0
      %v4851 = vadd.f32 0.0, %v4850
      %v4852 = vpop.f32.mrb[0].mxu0
      %v4853 = vpop.f32.mrb[0].mxu0
      %v4854 = vadd.f32 0.0, %v4853
      %v4855 = vpop.f32.mrb[0].mxu0
      %4856 = vmatprep.mubr.bf16.mxu0 0
      %4857 = vmatmul.mubr.bf16.gmra.mrb[0].mxu0 %v4808
      %v4858 = vpop.f32.mrb[0].mxu0
      %v4859 = vadd.f32 0.0, %v4858
      %v4860 = vpop.f32.mrb[0].mxu0
      %v4861 = vpop.f32.mrb[0].mxu0
      %v4862 = vadd.f32 0.0, %v4861
      %v4863 = vpop.f32.mrb[0].mxu0
      %4864 = vmatprep.mubr.bf16.mxu0 0
      %4865 = vmatmul.mubr.bf16.gmra.mrb[0].mxu0 %v4811
      %v4866 = vpop.f32.mrb[0].mxu0
      %v4867 = vadd.f32 0.0, %v4866
      %v4868 = vpop.f32.mrb[0].mxu0
      %v4869 = vpop.f32.mrb[0].mxu0
      %v4870 = vadd.f32 0.0, %v4869
      %v4871 = vpop.f32.mrb[0].mxu0
      %4872 = vmatprep.mubr.bf16.mxu0 0
      %4873 = vmatmul.mubr.bf16.gmra.mrb[0].mxu0 %v4814
      %v4874 = vpop.f32.mrb[0].mxu0
      %v4875 = vadd.f32 0.0, %v4874
      %v4876 = vpop.f32.mrb[0].mxu0
      %v4877 = vpop.f32.mrb[0].mxu0
      %v4878 = vadd.f32 0.0, %v4877
      %v4879 = vpop.f32.mrb[0].mxu0
      %4880 = vdwg.mxu0
      %v4881 = vadd.f32 %v4585, %v4851
      %v4882 = vadd.f32 %v4588, %v4854
      %v4883 = vadd.f32 %v4593, %v4859
      %v4884 = vadd.f32 %v4596, %v4862
      %v4885 = vadd.f32 %v4601, %v4867
      %v4886 = vadd.f32 %v4604, %v4870
      %v4887 = vadd.f32 %v4609, %v4875
      %v4888 = vadd.f32 %v4612, %v4878
      %v4889 = vmax.f32 %v4881, 0.0
      %v4890 = vmax.f32 %v4882, 0.0
      %v4891 = vmax.f32 %v4883, 0.0
      %v4892 = vmax.f32 %v4884, 0.0
      %v4893 = vmax.f32 %v4885, 0.0
      %v4894 = vmax.f32 %v4886, 0.0
      %v4895 = vmax.f32 %v4887, 0.0
      %v4896 = vmax.f32 %v4888, 0.0
      %v4897 = vld [vmem:[%s55] sm:$0x1]
      %v4898 = vpack.c.bf16 %v4890, %v4889
      %v4899 = vpack.c.bf16 %v4892, %v4891
      %v4900 = vpack.c.bf16 %v4894, %v4893
      %v4901 = vpack.c.bf16 %v4896, %v4895
      %v4903 = vsel %vm2752, %v4897, 0
      %4905 = vmatprep.subr.bf16.mxu0 0
      %4906 = vmatpush1.bf16.msra.mxu0 %v4898
      %4907 = vmatprep.subr.bf16.mxu0 0
      %4908 = vmatpush1.bf16.msra.mxu0 %v4899
      %4909 = vmatprep.subr.bf16.mxu0 0
      %4910 = vmatpush1.bf16.msra.mxu0 %v4900
      %4911 = vmatprep.subr.bf16.mxu0 0
      %4912 = vmatpush1.bf16.msra.mxu0 %v4901
      %4913 = vmatprep.subr.bf16.mxu0 0
      %4914 = vmatpush1.bf16.msra.mxu0 0
      %4915 = vmatprep.subr.bf16.mxu0 0
      %4916 = vmatpush1.bf16.msra.mxu0 0
      %4917 = vmatprep.subr.bf16.mxu0 0
      %4918 = vmatpush1.bf16.msra.mxu0 0
      %4919 = vmatprep.subr.bf16.mxu0 0
      %4920 = vmatpush1.bf16.msra.mxu0 0
      %4921 = vmatprep.subr.bf16.mxu0 0
      %4922 = vmatpush1.bf16.msra.mxu0 0
      %4923 = vmatprep.subr.bf16.mxu0 0
      %4924 = vmatpush1.bf16.msra.mxu0 0
      %4925 = vmatprep.subr.bf16.mxu0 0
      %4926 = vmatpush1.bf16.msra.mxu0 0
      %4927 = vmatprep.subr.bf16.mxu0 0
      %4928 = vmatpush1.bf16.msra.mxu0 0
      %4929 = vmatprep.subr.bf16.mxu0 0
      %4930 = vmatpush1.bf16.msra.mxu0 0
      %4931 = vmatprep.subr.bf16.mxu0 0
      %4932 = vmatpush1.bf16.msra.mxu0 0
      %4933 = vmatprep.subr.bf16.mxu0 0
      %4934 = vmatpush1.bf16.msra.mxu0 0
      %4935 = vmatprep.subr.bf16.mxu0 0
      %4936 = vmatpush1.bf16.msra.mxu0 0
      %4937 = vmatprep.mubr.bf16.mxu0 0
      %4938 = vmatmul.mubr.bf16.gmra.mrb[0].mxu0 %v4903
      %v4939 = vpop.f32.mrb[0].mxu0
      %v4940 = vadd.f32 0.0, %v4939
      %v4941 = vpop.f32.mrb[0].mxu0
      %v4942 = vpop.f32.mrb[0].mxu0
      %v4943 = vpop.f32.mrb[0].mxu0
      %4944 = vdwg.mxu0
      %vm4945 = vcmask 123904
      %v4946 = vsel %vm4945, %v4940, 0.0
      %4947 = vadd.xlane.f32.xlu0 %v4946
      %v4948 = vpop.xlane.xlu0 %4947
      %v4949 = vmul.f32 %v4948, 0.0625
      %v4950 = vld [vmem:[%s57] sm:$0x3]
      %v4951 = vadd.f32 %v4949, %v4950
      %vm4952 = vcmask 1024
      %4953 = vst.msk [vmem:[%s900] sm:$0x3] %vm4952, %v4951
      %p4954 = scmp.lt.s32.totalorder %s70, 1
      %s4955 = scalar_select %p4954, %s70, 1
      %s4956 = smul.addr %s4955, 2
      %s4957 = scalar_lea.vmem %s59, %s4956
      // Predicated region
      $region137: #{router_forward.1} parent=135 // pred_check
        %p4958 = pneg %p702
      $region138: #{router_forward.1} parent=135 // pred_check_branch
        %4960 = sbr.rel (%p4958) target = $region140
      $region139: #{router_forward.1} parent=135 // pred_region
        _
      $region140: #{router_forward.1} parent=135 // pred_fallthru
        _
    $region136: #{router_forward.1} parent=5 // pred_fallthru
      _
    %p4961 = scmp.le.s32.totalorder 2, %s65
    // Predicated region
    $region141: #{router_forward.1} parent=5 // pred_check
      %p4962 = pneg %p4961
    $region142: #{router_forward.1} parent=5 // pred_check_branch
      %4964 = sbr.rel (%p4962) target = $region144
    $region143: #{router_forward.1} parent=5 // pred_region
      %s4965 = ssub.s32 %s65, 2
      // Predicated region
      $region145: #{router_forward.1} parent=143 // pred_check
        %p4966 = pneg %p708
      $region146: #{router_forward.1} parent=143 // pred_check_branch
        %4968 = sbr.rel (%p4966) target = $region148
      $region147: #{router_forward.1} parent=143 // pred_region
        %p4969 = scmp.lt.s32.totalorder %s71, 1
        %s4970 = scalar_select %p4969, %s71, 1
        %s4971 = smul.addr %s4970, 2
        %s4972 = scalar_lea.vmem %s59, %s4971
      $region148: #{router_forward.1} parent=143 // pred_fallthru
        _
    $region144: #{router_forward.1} parent=5 // pred_fallthru
      _
  $region6: #{router_forward.1} parent=0 // loop_footer
    %s69 = sadd.s32 1, %s65
  $region7: #{router_forward.1} parent=0 // loop_footer_branch
    %64 = sbr.rel target = $region3
  $region8: #{router_forward.1} parent=0 // loop_exit
    _

</llo_original>
